<compile_context>
chip_gen: v6e
topology: v6e:2x2x1
jax: 0.10.0
libtpu: 0.0.40
codegen_flags: <defaults>
</compile_context>

<pallas_src>
import functools

import jax
import jax.numpy as jnp
from jax.experimental import pallas as pl
from jax.experimental.pallas import tpu as pltpu

_LANE = 128


# ----------------------------------------------------------------------------
# Kernel
# ----------------------------------------------------------------------------
def _decoder_layer_kernel(
    # activations for this batch group
    tgt_ref, qpos_ref, mem_ref, mpos_ref,
    # packed weights
    wslab_ref, w2_ref, vecs_ref, b1_ref,
    # outputs
    out_ref, attn_ref,
    *, num_heads, head_dim, bp, nt, nm, d, f, nm_pad):
  f32 = jnp.float32
  bf16 = jnp.bfloat16
  H, hd, D = num_heads, head_dim, d
  scale = 1.0 / (float(head_dim) ** 0.5)

  # Column offsets into the packed (D, 8D + F) bf16 weight slab.
  SA_Q, SA_K, SA_V, SA_O = 0 * D, 1 * D, 2 * D, 3 * D
  CA_Q, CA_K, CA_V, CA_O = 4 * D, 5 * D, 6 * D, 7 * D
  W1 = 8 * D

  # Row indices into the packed (16, D) f32 bias / LayerNorm table.
  (SA_BQ, SA_BK, SA_BV, SA_BO, CA_BQ, CA_BK, CA_BV, CA_BO,
   LN1_G, LN1_B, LN2_G, LN2_B, LN3_G, LN3_B, B2) = range(15)

  vecs = vecs_ref[...].astype(f32)              # (16, D), loaded once

  def vrow(i):                                  # (1, D) broadcastable row
    return vecs[i:i + 1, :]

  def wcol(lo, width):                          # bf16 (D, width) weight slice
    return wslab_ref[:, lo:lo + width]

  def layer_norm(x, gi, bi, eps=1e-5):
    mu = jnp.mean(x, axis=-1, keepdims=True)
    xc = x - mu
    var = jnp.mean(xc * xc, axis=-1, keepdims=True)
    return xc * jax.lax.rsqrt(var + eps) * vrow(gi) + vrow(bi)

  def proj(x_f32, col, brow):                   # bf16 MXU pass, f32 accumulate
    y = jnp.dot(x_f32.astype(bf16), wcol(col, D), preferred_element_type=f32)
    return y + vrow(brow)

  def core_attn(q, k, v, *, approx_recip, need_weights):
    # q: (Nq, D) f32; k, v: (Nk, D) f32 -- already projected + biased.
    nq, nk = q.shape[0], k.shape[0]
    qb, kb, vb = q.astype(bf16), k.astype(bf16), v.astype(bf16)
    ctx_heads = []
    attn_sum = jnp.zeros((nq, nk), f32)
    for h in range(H):                          # tiny static loop over heads
      sl = slice(h * hd, (h + 1) * hd)
      s = jnp.einsum("qd,kd->qk", qb[:, sl], kb[:, sl],
                     preferred_element_type=f32) * scale
      m = jnp.max(s, axis=-1, keepdims=True)
      e = jnp.exp(s - m)
      denom = jnp.sum(e, axis=-1, keepdims=True)
      if approx_recip:
        a = e * pl.reciprocal(denom, approx=True)   # EUP slot, off the VALU
      else:
        a = e / denom                               # exact: weights returned
      ctx_heads.append(jnp.dot(a.astype(bf16), vb[:, sl],
                               preferred_element_type=f32))
      if need_weights:
        attn_sum = attn_sum + a
    ctx = jnp.concatenate(ctx_heads, axis=-1)       # (Nq, D) lane concat
    return ctx, attn_sum * (1.0 / H)

  # ---- load activations, fold this batch group into the row dimension ------
  tgt = tgt_ref[...].reshape(bp * nt, D).astype(f32)
  qpos = qpos_ref[...].reshape(bp * nt, D).astype(f32)
  mem = mem_ref[...].reshape(bp * nm, D).astype(f32)
  mpos = mpos_ref[...].reshape(bp * nm, D).astype(f32)

  # ---- self-attention: q = k = tgt + query_pos, v = tgt --------------------
  qk_in = tgt + qpos
  # Fused (D, 2D) Wq|Wk projection (q_in == k_in): one full-width MXU pass.
  qk_proj = jnp.dot(qk_in.astype(bf16), wcol(SA_Q, 2 * D),
                    preferred_element_type=f32)
  q_sa = qk_proj[:, :D] + vrow(SA_BQ)
  k_sa = qk_proj[:, D:] + vrow(SA_BK)
  v_sa = proj(tgt, SA_V, SA_BV)

  ctx_rows = []
  for b in range(bp):
    rt = slice(b * nt, (b + 1) * nt)
    ctx_b, _ = core_attn(q_sa[rt], k_sa[rt], v_sa[rt],
                         approx_recip=True, need_weights=False)
    ctx_rows.append(ctx_b)
  sa_ctx = ctx_rows[0] if bp == 1 else jnp.concatenate(ctx_rows, axis=0)
  sa_out = proj(sa_ctx, SA_O, SA_BO)            # single (., D)@(D, D) out-proj
  tgt = layer_norm(tgt + sa_out, LN1_G, LN1_B)

  # ---- cross-attention: q = tgt + query_pos, k = memory + pos, v = memory --
  q_ca = proj(tgt + qpos, CA_Q, CA_BQ)
  k_ca = proj(mem + mpos, CA_K, CA_BK)
  v_ca = proj(mem, CA_V, CA_BV)

  ctx_rows, attn_rows = [], []
  for b in range(bp):
    rt = slice(b * nt, (b + 1) * nt)
    rm = slice(b * nm, (b + 1) * nm)
    ctx_b, attn_b = core_attn(q_ca[rt], k_ca[rm], v_ca[rm],
                              approx_recip=False, need_weights=True)
    ctx_rows.append(ctx_b)
    attn_rows.append(attn_b)
  ca_ctx = ctx_rows[0] if bp == 1 else jnp.concatenate(ctx_rows, axis=0)
  ca_out = proj(ca_ctx, CA_O, CA_BO)
  tgt = layer_norm(tgt + ca_out, LN2_G, LN2_B)

  # ---- feed-forward (Dropout == identity at inference) ---------------------
  # TODO(synk): training-mode dropout (p=0.1) not implemented.
  h1 = jnp.maximum(
      jnp.dot(tgt.astype(bf16), wcol(W1, f), preferred_element_type=f32)
      + b1_ref[...].astype(f32), 0.0)
  ff = jnp.dot(h1.astype(bf16), w2_ref[...],
               preferred_element_type=f32) + vrow(B2)
  tgt = layer_norm(tgt + ff, LN3_G, LN3_B)

  # ---- stores ----------------------------------------------------------------
  out_ref[...] = tgt.reshape(bp, nt, D).astype(out_ref.dtype)

  if nm_pad != nm:  # pad the lane dim -> unmasked, lane-dense stores
    pad = jnp.zeros((nt, nm_pad - nm), f32)
    attn_rows = [jnp.concatenate([a, pad], axis=-1) for a in attn_rows]
  attn = attn_rows[0][None] if bp == 1 else jnp.stack(attn_rows, axis=0)
  attn_ref[...] = attn.astype(attn_ref.dtype)


# ----------------------------------------------------------------------------
# Wrapper
# ----------------------------------------------------------------------------
def decoder_layer_forward(tgt, memory, pos_enc, query_pos, params, *, num_heads):
  """Full DecoderLayer forward. Returns (tgt_out, cross_attn_weights)."""
  B, Nt, D = tgt.shape
  Bm, Nm, Dm = memory.shape
  assert (B, D) == (Bm, Dm)
  assert pos_enc.shape == memory.shape and query_pos.shape == tgt.shape
  assert D % num_heads == 0
  hd = D // num_heads
  F = params["lin1_w"].shape[0]
  f32, bf16 = jnp.float32, jnp.bfloat16

  # ---- one-time wrapper-side weight packing (lane-dense slabs) --------------
  def split_in_proj(w, b):
    # PyTorch in_proj_weight (3D, D) rows are [Wq; Wk; Wv], each (out, in).
    return ([w[i * D:(i + 1) * D].T for i in range(3)],      # (D_in, D_out)
            [b[i * D:(i + 1) * D] for i in range(3)])

  (sa_wq, sa_wk, sa_wv), (sa_bq, sa_bk, sa_bv) = split_in_proj(
      params["sa_in_w"], params["sa_in_b"])
  (ca_wq, ca_wk, ca_wv), (ca_bq, ca_bk, ca_bv) = split_in_proj(
      params["ca_in_w"], params["ca_in_b"])

  # (D, 8D+F) bf16 slab: [saWq|saWk|saWv|saWo|caWq|caWk|caWv|caWo|W1]
  wslab = jnp.concatenate(
      [sa_wq, sa_wk, sa_wv, params["sa_out_w"].T,
       ca_wq, ca_wk, ca_wv, params["ca_out_w"].T,
       params["lin1_w"].T], axis=1).astype(bf16)
  w2 = params["lin2_w"].T.astype(bf16)                        # (F, D)

  # (16, D) f32 bias / LayerNorm table (row order matches kernel constants).
  vec_rows = [sa_bq, sa_bk, sa_bv, params["sa_out_b"],
              ca_bq, ca_bk, ca_bv, params["ca_out_b"],
              params["ln1_g"], params["ln1_b"],
              params["ln2_g"], params["ln2_b"],
              params["ln3_g"], params["ln3_b"],
              params["lin2_b"], jnp.zeros((D,), f32)]
  vecs = jnp.stack([r.astype(f32) for r in vec_rows], axis=0)  # (16, D)
  b1 = params["lin1_b"].reshape(1, F).astype(f32)

  # ---- grid: split batch across (up to) 2 TensorCores, fold the rest --------
  n_groups = 2 if (B % 2 == 0 and B >= 2) else 1
  BP = B // n_groups
  Nm_pad = max(_LANE, ((Nm + _LANE - 1) // _LANE) * _LANE)

  kernel = functools.partial(
      _decoder_layer_kernel, num_heads=num_heads, head_dim=hd,
      bp=BP, nt=Nt, nm=Nm, d=D, f=F, nm_pad=Nm_pad)

  act_spec_t = pl.BlockSpec((BP, Nt, D), lambda g: (g, 0, 0))
  act_spec_m = pl.BlockSpec((BP, Nm, D), lambda g: (g, 0, 0))

  def const2d(a):  # weight slabs: constant index_map -> VMEM-resident
    return pl.BlockSpec(a.shape, lambda g: (0, 0))

  out_shape = (jax.ShapeDtypeStruct((B, Nt, D), tgt.dtype),
               jax.ShapeDtypeStruct((B, Nt, Nm_pad), jnp.float32))
  out_specs = [pl.BlockSpec((BP, Nt, D), lambda g: (g, 0, 0)),
               pl.BlockSpec((BP, Nt, Nm_pad), lambda g: (g, 0, 0))]

  out, attn_padded = pl.pallas_call(
      kernel,
      out_shape=out_shape,
      grid_spec=pltpu.PrefetchScalarGridSpec(
          num_scalar_prefetch=0,
          grid=(n_groups,),
          in_specs=[act_spec_t, act_spec_t, act_spec_m, act_spec_m,
                    const2d(wslab), const2d(w2), const2d(vecs), const2d(b1)],
          out_specs=out_specs,
      ),
      compiler_params=pltpu.CompilerParams(
          dimension_semantics=("parallel",),
      ),
  )(tgt, query_pos, memory, pos_enc, wslab, w2, vecs, b1)

  return out, attn_padded[:, :, :Nm]


# ----------------------------------------------------------------------------
# Pure-JAX reference (mirrors PyTorch semantics, f32 'highest' precision)
# ----------------------------------------------------------------------------
_HI = jax.lax.Precision.HIGHEST


def _layer_norm_ref(x, g, b, eps=1e-5):
  mu = jnp.mean(x, axis=-1, keepdims=True)
  var = jnp.mean((x - mu) ** 2, axis=-1, keepdims=True)
  return (x - mu) / jnp.sqrt(var + eps) * g + b


def _mha_ref(q, k, v, in_w, in_b, out_w, out_b, num_heads):
  B, Nq, D = q.shape
  Nk = k.shape[1]
  hd = D // num_heads
  wq, wk, wv = in_w[:D], in_w[D:2 * D], in_w[2 * D:]
  bq, bk, bv = in_b[:D], in_b[D:2 * D], in_b[2 * D:]
  qp = (jnp.dot(q, wq.T, precision=_HI) + bq).reshape(
      B, Nq, num_heads, hd).transpose(0, 2, 1, 3)
  kp = (jnp.dot(k, wk.T, precision=_HI) + bk).reshape(
      B, Nk, num_heads, hd).transpose(0, 2, 1, 3)
  vp = (jnp.dot(v, wv.T, precision=_HI) + bv).reshape(
      B, Nk, num_heads, hd).transpose(0, 2, 1, 3)
  s = jnp.einsum("bhqd,bhkd->bhqk", qp, kp, precision=_HI) / (hd ** 0.5)
  a = jax.nn.softmax(s, axis=-1)
  ctx = jnp.einsum("bhqk,bhkd->bhqd", a, vp, precision=_HI)
  ctx = ctx.transpose(0, 2, 1, 3).reshape(B, Nq, D)
  return jnp.dot(ctx, out_w.T, precision=_HI) + out_b, a.mean(axis=1)


def decoder_layer_ref(tgt, memory, pos_enc, query_pos, p, num_heads):
  q = tgt + query_pos
  sa, _ = _mha_ref(q, q, tgt, p["sa_in_w"], p["sa_in_b"],
                   p["sa_out_w"], p["sa_out_b"], num_heads)
  tgt = _layer_norm_ref(tgt + sa, p["ln1_g"], p["ln1_b"])
  ca, attn = _mha_ref(tgt + query_pos, memory + pos_enc, memory,
                      p["ca_in_w"], p["ca_in_b"],
                      p["ca_out_w"], p["ca_out_b"], num_heads)
  tgt = _layer_norm_ref(tgt + ca, p["ln2_g"], p["ln2_b"])
  h = jnp.maximum(jnp.dot(tgt, p["lin1_w"].T, precision=_HI) + p["lin1_b"], 0.0)
  ff = jnp.dot(h, p["lin2_w"].T, precision=_HI) + p["lin2_b"]
  tgt = _layer_norm_ref(tgt + ff, p["ln3_g"], p["ln3_b"])
  return tgt, attn


# ----------------------------------------------------------------------------
# Test
# ----------------------------------------------------------------------------
if __name__ == "__main__":
  # Small but lane-dense shapes: model_dim is a multiple of 128.
  B, Nt, Nm = 2, 8, 16            # batch, target len (queries), memory len
  D, H, F = 128, 4, 256           # model_dim, decoder_heads, mlp_inner_dim

  key = jax.random.PRNGKey(0)
  ks = jax.random.split(key, 22)

  def normal(k, shape, scale=1.0):
    return scale * jax.random.normal(k, shape, dtype=jnp.float32)

  params = {
      "sa_in_w": normal(ks[0], (3 * D, D), 0.05),
      "sa_in_b": normal(ks[1], (3 * D,), 0.05),
      "sa_out_w": normal(ks[2], (D, D), 0.05),
      "sa_out_b": normal(ks[3], (D,), 0.05),
      "ln1_g": 1.0 + normal(ks[4], (D,), 0.05),
      "ln1_b": normal(ks[5], (D,), 0.05),
      "ca_in_w": normal(ks[6], (3 * D, D), 0.05),
      "ca_in_b": normal(ks[7], (3 * D,), 0.05),
      "ca_out_w": normal(ks[8], (D, D), 0.05),
      "ca_out_b": normal(ks[9], (D,), 0.05),
      "ln2_g": 1.0 + normal(ks[10], (D,), 0.05),
      "ln2_b": normal(ks[11], (D,), 0.05),
      "lin1_w": normal(ks[12], (F, D), 0.05),
      "lin1_b": normal(ks[13], (F,), 0.05),
      "lin2_w": normal(ks[14], (D, F), 0.05),
      "lin2_b": normal(ks[15], (D,), 0.05),
      "ln3_g": 1.0 + normal(ks[16], (D,), 0.05),
      "ln3_b": normal(ks[17], (D,), 0.05),
  }

  tgt = normal(ks[18], (B, Nt, D))
  memory = normal(ks[19], (B, Nm, D))
  pos_enc = normal(ks[20], (B, Nm, D), 0.5)
  query_pos = normal(ks[21], (B, Nt, D), 0.5)

  out, attn = decoder_layer_forward(tgt, memory, pos_enc, query_pos,
                                    params, num_heads=H)
  out, attn = jax.block_until_ready((out, attn))

  ref_out, ref_attn = decoder_layer_ref(tgt, memory, pos_enc, query_pos,
                                        params, H)
  ref_out, ref_attn = jax.block_until_ready((ref_out, ref_attn))

  assert out.shape == (B, Nt, D) and attn.shape == (B, Nt, Nm)
  # Kernel uses bf16 MXU operands (single native pass, f32 accumulation);
  # reference is f32 'highest' precision, so allow bf16-level deviation on
  # the unit-scale (LayerNormed) outputs.  Structural bugs produce O(1) error.
  err_o = float(jnp.max(jnp.abs(out - ref_out)))
  err_a = float(jnp.max(jnp.abs(attn - ref_attn)))
  assert jnp.allclose(out, ref_out, atol=3e-2, rtol=3e-2), f"tgt mismatch {err_o}"
  assert jnp.allclose(attn, ref_attn, atol=5e-3, rtol=5e-3), f"attn mismatch {err_a}"

  print("KERNEL_OK")
</pallas_src>

<mosaic_0001>
module attributes {stable_mosaic.version = 11 : i64} {
  func.func @_decoder_layer_kernel(%arg0: i32, %arg1: memref<1x8x128xf32, #tpu.memory_space<vmem>>, %arg2: memref<1x8x128xf32, #tpu.memory_space<vmem>>, %arg3: memref<1x16x128xf32, #tpu.memory_space<vmem>>, %arg4: memref<1x16x128xf32, #tpu.memory_space<vmem>>, %arg5: memref<128x1280xbf16, #tpu.memory_space<vmem>>, %arg6: memref<256x128xbf16, #tpu.memory_space<vmem>>, %arg7: memref<16x128xf32, #tpu.memory_space<vmem>>, %arg8: memref<1x256xf32, #tpu.memory_space<vmem>>, %arg9: memref<1x8x128xf32, #tpu.memory_space<vmem>>, %arg10: memref<1x8x128xf32, #tpu.memory_space<vmem>>) attributes {dimension_semantics = [#tpu.dimension_semantics<parallel>], iteration_bounds = array<i64: 2>, scalar_prefetch = 0 : i64, scratch_operands = 0 : i64, tpu.core_type = #tpu.core_type<tc>, window_params = [{transform_indices = @transform_0, window_bounds = array<i64: 1, 8, 128>}, {transform_indices = @transform_1, window_bounds = array<i64: 1, 8, 128>}, {transform_indices = @transform_2, window_bounds = array<i64: 1, 16, 128>}, {transform_indices = @transform_3, window_bounds = array<i64: 1, 16, 128>}, {pipeline_mode = #tpu.pipeline_mode<synchronous>, transform_indices = @transform_4, window_bounds = array<i64: 128, 1280>}, {pipeline_mode = #tpu.pipeline_mode<synchronous>, transform_indices = @transform_5, window_bounds = array<i64: 256, 128>}, {pipeline_mode = #tpu.pipeline_mode<synchronous>, transform_indices = @transform_6, window_bounds = array<i64: 16, 128>}, {pipeline_mode = #tpu.pipeline_mode<synchronous>, transform_indices = @transform_7, window_bounds = array<i64: 1, 256>}, {transform_indices = @transform_8, window_bounds = array<i64: 1, 8, 128>}, {transform_indices = @transform_9, window_bounds = array<i64: 1, 8, 128>}]} {
    %c0 = arith.constant 0 : index
    %c0_0 = arith.constant 0 : index
    %0 = vector.load %arg7[%c0, %c0_0] : memref<16x128xf32, #tpu.memory_space<vmem>>, vector<16x128xf32>
    %c0_1 = arith.constant 0 : index
    %c0_2 = arith.constant 0 : index
    %c0_3 = arith.constant 0 : index
    %1 = vector.load %arg1[%c0_1, %c0_2, %c0_3] : memref<1x8x128xf32, #tpu.memory_space<vmem>>, vector<1x8x128xf32>
    %2 = vector.shape_cast %1 : vector<1x8x128xf32> to vector<8x128xf32>
    %c0_4 = arith.constant 0 : index
    %c0_5 = arith.constant 0 : index
    %c0_6 = arith.constant 0 : index
    %3 = vector.load %arg2[%c0_4, %c0_5, %c0_6] : memref<1x8x128xf32, #tpu.memory_space<vmem>>, vector<1x8x128xf32>
    %4 = vector.shape_cast %3 : vector<1x8x128xf32> to vector<8x128xf32>
    %c0_7 = arith.constant 0 : index
    %c0_8 = arith.constant 0 : index
    %c0_9 = arith.constant 0 : index
    %5 = vector.load %arg3[%c0_7, %c0_8, %c0_9] : memref<1x16x128xf32, #tpu.memory_space<vmem>>, vector<1x16x128xf32>
    %6 = vector.shape_cast %5 : vector<1x16x128xf32> to vector<16x128xf32>
    %c0_10 = arith.constant 0 : index
    %c0_11 = arith.constant 0 : index
    %c0_12 = arith.constant 0 : index
    %7 = vector.load %arg4[%c0_10, %c0_11, %c0_12] : memref<1x16x128xf32, #tpu.memory_space<vmem>>, vector<1x16x128xf32>
    %8 = vector.shape_cast %7 : vector<1x16x128xf32> to vector<16x128xf32>
    %9 = arith.addf %2, %4 : vector<8x128xf32>
    %10 = arith.truncf %9 : vector<8x128xf32> to vector<8x128xbf16>
    %c0_13 = arith.constant 0 : index
    %c0_14 = arith.constant 0 : index
    %11 = vector.load %arg5[%c0_13, %c0_14] : memref<128x1280xbf16, #tpu.memory_space<vmem>>, vector<128x256xbf16>
    %cst = arith.constant dense<0.000000e+00> : vector<8x256xf32>
    %12 = tpu.matmul %10, %11, %cst {dimension_numbers = #tpu.dot_dimension_numbers<[1], [0], [0], [1], [0, 0, 1, 1], [], []>} : vector<8x128xbf16>, vector<128x256xbf16>, vector<8x256xf32> -> vector<8x256xf32>
    %13 = vector.extract_strided_slice %12 {offsets = [0, 0], sizes = [8, 128], strides = [1, 1]} : vector<8x256xf32> to vector<8x128xf32>
    %14 = vector.extract_strided_slice %0 {offsets = [0, 0], sizes = [1, 128], strides = [1, 1]} : vector<16x128xf32> to vector<1x128xf32>
    %15 = vector.broadcast %14 : vector<1x128xf32> to vector<8x128xf32>
    %16 = arith.addf %13, %15 : vector<8x128xf32>
    %17 = vector.extract_strided_slice %12 {offsets = [0, 128], sizes = [8, 128], strides = [1, 1]} : vector<8x256xf32> to vector<8x128xf32>
    %18 = vector.extract_strided_slice %0 {offsets = [1, 0], sizes = [1, 128], strides = [1, 1]} : vector<16x128xf32> to vector<1x128xf32>
    %19 = vector.broadcast %18 : vector<1x128xf32> to vector<8x128xf32>
    %20 = arith.addf %17, %19 : vector<8x128xf32>
    %21 = arith.truncf %2 : vector<8x128xf32> to vector<8x128xbf16>
    %c0_15 = arith.constant 0 : index
    %c256 = arith.constant 256 : index
    %22 = vector.load %arg5[%c0_15, %c256] : memref<128x1280xbf16, #tpu.memory_space<vmem>>, vector<128x128xbf16>
    %cst_16 = arith.constant dense<0.000000e+00> : vector<8x128xf32>
    %23 = tpu.matmul %21, %22, %cst_16 {dimension_numbers = #tpu.dot_dimension_numbers<[1], [0], [0], [1], [0, 0, 1, 1], [], []>} : vector<8x128xbf16>, vector<128x128xbf16>, vector<8x128xf32> -> vector<8x128xf32>
    %24 = vector.extract_strided_slice %0 {offsets = [2, 0], sizes = [1, 128], strides = [1, 1]} : vector<16x128xf32> to vector<1x128xf32>
    %25 = vector.broadcast %24 : vector<1x128xf32> to vector<8x128xf32>
    %26 = arith.addf %23, %25 : vector<8x128xf32>
    %27 = arith.truncf %16 : vector<8x128xf32> to vector<8x128xbf16>
    %28 = arith.truncf %20 : vector<8x128xf32> to vector<8x128xbf16>
    %29 = arith.truncf %26 : vector<8x128xf32> to vector<8x128xbf16>
    %30 = vector.extract_strided_slice %27 {offsets = [0, 0], sizes = [8, 32], strides = [1, 1]} : vector<8x128xbf16> to vector<8x32xbf16>
    %31 = vector.extract_strided_slice %28 {offsets = [0, 0], sizes = [8, 32], strides = [1, 1]} : vector<8x128xbf16> to vector<8x32xbf16>
    "tpu.trace_start"() <{level = 10 : i32, message = "qd,kd->qk"}> : () -> ()
    %cst_17 = arith.constant dense<0.000000e+00> : vector<8x8xf32>
    %32 = tpu.matmul %30, %31, %cst_17 {dimension_numbers = #tpu.dot_dimension_numbers<[1], [1], [0], [0], [0, 0, 1, 0], [], []>} : vector<8x32xbf16>, vector<8x32xbf16>, vector<8x8xf32> -> vector<8x8xf32>
    "tpu.trace_stop"() : () -> ()
    %cst_18 = arith.constant 0.176776692 : f32
    %33 = vector.broadcast %cst_18 : f32 to vector<8x8xf32>
    %34 = arith.mulf %32, %33 : vector<8x8xf32>
    %cst_19 = arith.constant dense<0xFF800000> : vector<8xf32>
    %35 = vector.multi_reduction <maximumf>, %34, %cst_19 [1] : vector<8x8xf32> to vector<8xf32>
    %36 = vector.shape_cast %35 : vector<8xf32> to vector<8x1xf32>
    %37 = vector.broadcast %36 : vector<8x1xf32> to vector<8x8xf32>
    %38 = arith.subf %34, %37 : vector<8x8xf32>
    %39 = math.exp %38 : vector<8x8xf32>
    %cst_20 = arith.constant dense<0.000000e+00> : vector<8xf32>
    %40 = vector.multi_reduction <add>, %39, %cst_20 [1] : vector<8x8xf32> to vector<8xf32>
    %41 = vector.shape_cast %40 : vector<8xf32> to vector<8x1xf32>
    %42 = tpu.reciprocal %41 {approx = true} : vector<8x1xf32> -> vector<8x1xf32>
    %43 = vector.broadcast %42 : vector<8x1xf32> to vector<8x8xf32>
    %44 = arith.mulf %39, %43 : vector<8x8xf32>
    %45 = arith.truncf %44 : vector<8x8xf32> to vector<8x8xbf16>
    %46 = vector.extract_strided_slice %29 {offsets = [0, 0], sizes = [8, 32], strides = [1, 1]} : vector<8x128xbf16> to vector<8x32xbf16>
    %cst_21 = arith.constant dense<0.000000e+00> : vector<8x32xf32>
    %47 = tpu.matmul %45, %46, %cst_21 {dimension_numbers = #tpu.dot_dimension_numbers<[1], [0], [0], [1], [0, 0, 1, 1], [], []>} : vector<8x8xbf16>, vector<8x32xbf16>, vector<8x32xf32> -> vector<8x32xf32>
    %48 = vector.extract_strided_slice %27 {offsets = [0, 32], sizes = [8, 32], strides = [1, 1]} : vector<8x128xbf16> to vector<8x32xbf16>
    %49 = vector.extract_strided_slice %28 {offsets = [0, 32], sizes = [8, 32], strides = [1, 1]} : vector<8x128xbf16> to vector<8x32xbf16>
    "tpu.trace_start"() <{level = 10 : i32, message = "qd,kd->qk"}> : () -> ()
    %cst_22 = arith.constant dense<0.000000e+00> : vector<8x8xf32>
    %50 = tpu.matmul %48, %49, %cst_22 {dimension_numbers = #tpu.dot_dimension_numbers<[1], [1], [0], [0], [0, 0, 1, 0], [], []>} : vector<8x32xbf16>, vector<8x32xbf16>, vector<8x8xf32> -> vector<8x8xf32>
    "tpu.trace_stop"() : () -> ()
    %cst_23 = arith.constant 0.176776692 : f32
    %51 = vector.broadcast %cst_23 : f32 to vector<8x8xf32>
    %52 = arith.mulf %50, %51 : vector<8x8xf32>
    %cst_24 = arith.constant dense<0xFF800000> : vector<8xf32>
    %53 = vector.multi_reduction <maximumf>, %52, %cst_24 [1] : vector<8x8xf32> to vector<8xf32>
    %54 = vector.shape_cast %53 : vector<8xf32> to vector<8x1xf32>
    %55 = vector.broadcast %54 : vector<8x1xf32> to vector<8x8xf32>
    %56 = arith.subf %52, %55 : vector<8x8xf32>
    %57 = math.exp %56 : vector<8x8xf32>
    %cst_25 = arith.constant dense<0.000000e+00> : vector<8xf32>
    %58 = vector.multi_reduction <add>, %57, %cst_25 [1] : vector<8x8xf32> to vector<8xf32>
    %59 = vector.shape_cast %58 : vector<8xf32> to vector<8x1xf32>
    %60 = tpu.reciprocal %59 {approx = true} : vector<8x1xf32> -> vector<8x1xf32>
    %61 = vector.broadcast %60 : vector<8x1xf32> to vector<8x8xf32>
    %62 = arith.mulf %57, %61 : vector<8x8xf32>
    %63 = arith.truncf %62 : vector<8x8xf32> to vector<8x8xbf16>
    %64 = vector.extract_strided_slice %29 {offsets = [0, 32], sizes = [8, 32], strides = [1, 1]} : vector<8x128xbf16> to vector<8x32xbf16>
    %cst_26 = arith.constant dense<0.000000e+00> : vector<8x32xf32>
    %65 = tpu.matmul %63, %64, %cst_26 {dimension_numbers = #tpu.dot_dimension_numbers<[1], [0], [0], [1], [0, 0, 1, 1], [], []>} : vector<8x8xbf16>, vector<8x32xbf16>, vector<8x32xf32> -> vector<8x32xf32>
    %66 = vector.extract_strided_slice %27 {offsets = [0, 64], sizes = [8, 32], strides = [1, 1]} : vector<8x128xbf16> to vector<8x32xbf16>
    %67 = vector.extract_strided_slice %28 {offsets = [0, 64], sizes = [8, 32], strides = [1, 1]} : vector<8x128xbf16> to vector<8x32xbf16>
    "tpu.trace_start"() <{level = 10 : i32, message = "qd,kd->qk"}> : () -> ()
    %cst_27 = arith.constant dense<0.000000e+00> : vector<8x8xf32>
    %68 = tpu.matmul %66, %67, %cst_27 {dimension_numbers = #tpu.dot_dimension_numbers<[1], [1], [0], [0], [0, 0, 1, 0], [], []>} : vector<8x32xbf16>, vector<8x32xbf16>, vector<8x8xf32> -> vector<8x8xf32>
    "tpu.trace_stop"() : () -> ()
    %cst_28 = arith.constant 0.176776692 : f32
    %69 = vector.broadcast %cst_28 : f32 to vector<8x8xf32>
    %70 = arith.mulf %68, %69 : vector<8x8xf32>
    %cst_29 = arith.constant dense<0xFF800000> : vector<8xf32>
    %71 = vector.multi_reduction <maximumf>, %70, %cst_29 [1] : vector<8x8xf32> to vector<8xf32>
    %72 = vector.shape_cast %71 : vector<8xf32> to vector<8x1xf32>
    %73 = vector.broadcast %72 : vector<8x1xf32> to vector<8x8xf32>
    %74 = arith.subf %70, %73 : vector<8x8xf32>
    %75 = math.exp %74 : vector<8x8xf32>
    %cst_30 = arith.constant dense<0.000000e+00> : vector<8xf32>
    %76 = vector.multi_reduction <add>, %75, %cst_30 [1] : vector<8x8xf32> to vector<8xf32>
    %77 = vector.shape_cast %76 : vector<8xf32> to vector<8x1xf32>
    %78 = tpu.reciprocal %77 {approx = true} : vector<8x1xf32> -> vector<8x1xf32>
    %79 = vector.broadcast %78 : vector<8x1xf32> to vector<8x8xf32>
    %80 = arith.mulf %75, %79 : vector<8x8xf32>
    %81 = arith.truncf %80 : vector<8x8xf32> to vector<8x8xbf16>
    %82 = vector.extract_strided_slice %29 {offsets = [0, 64], sizes = [8, 32], strides = [1, 1]} : vector<8x128xbf16> to vector<8x32xbf16>
    %cst_31 = arith.constant dense<0.000000e+00> : vector<8x32xf32>
    %83 = tpu.matmul %81, %82, %cst_31 {dimension_numbers = #tpu.dot_dimension_numbers<[1], [0], [0], [1], [0, 0, 1, 1], [], []>} : vector<8x8xbf16>, vector<8x32xbf16>, vector<8x32xf32> -> vector<8x32xf32>
    %84 = vector.extract_strided_slice %27 {offsets = [0, 96], sizes = [8, 32], strides = [1, 1]} : vector<8x128xbf16> to vector<8x32xbf16>
    %85 = vector.extract_strided_slice %28 {offsets = [0, 96], sizes = [8, 32], strides = [1, 1]} : vector<8x128xbf16> to vector<8x32xbf16>
    "tpu.trace_start"() <{level = 10 : i32, message = "qd,kd->qk"}> : () -> ()
    %cst_32 = arith.constant dense<0.000000e+00> : vector<8x8xf32>
    %86 = tpu.matmul %84, %85, %cst_32 {dimension_numbers = #tpu.dot_dimension_numbers<[1], [1], [0], [0], [0, 0, 1, 0], [], []>} : vector<8x32xbf16>, vector<8x32xbf16>, vector<8x8xf32> -> vector<8x8xf32>
    "tpu.trace_stop"() : () -> ()
    %cst_33 = arith.constant 0.176776692 : f32
    %87 = vector.broadcast %cst_33 : f32 to vector<8x8xf32>
    %88 = arith.mulf %86, %87 : vector<8x8xf32>
    %cst_34 = arith.constant dense<0xFF800000> : vector<8xf32>
    %89 = vector.multi_reduction <maximumf>, %88, %cst_34 [1] : vector<8x8xf32> to vector<8xf32>
    %90 = vector.shape_cast %89 : vector<8xf32> to vector<8x1xf32>
    %91 = vector.broadcast %90 : vector<8x1xf32> to vector<8x8xf32>
    %92 = arith.subf %88, %91 : vector<8x8xf32>
    %93 = math.exp %92 : vector<8x8xf32>
    %cst_35 = arith.constant dense<0.000000e+00> : vector<8xf32>
    %94 = vector.multi_reduction <add>, %93, %cst_35 [1] : vector<8x8xf32> to vector<8xf32>
    %95 = vector.shape_cast %94 : vector<8xf32> to vector<8x1xf32>
    %96 = tpu.reciprocal %95 {approx = true} : vector<8x1xf32> -> vector<8x1xf32>
    %97 = vector.broadcast %96 : vector<8x1xf32> to vector<8x8xf32>
    %98 = arith.mulf %93, %97 : vector<8x8xf32>
    %99 = arith.truncf %98 : vector<8x8xf32> to vector<8x8xbf16>
    %100 = vector.extract_strided_slice %29 {offsets = [0, 96], sizes = [8, 32], strides = [1, 1]} : vector<8x128xbf16> to vector<8x32xbf16>
    %cst_36 = arith.constant dense<0.000000e+00> : vector<8x32xf32>
    %101 = tpu.matmul %99, %100, %cst_36 {dimension_numbers = #tpu.dot_dimension_numbers<[1], [0], [0], [1], [0, 0, 1, 1], [], []>} : vector<8x8xbf16>, vector<8x32xbf16>, vector<8x32xf32> -> vector<8x32xf32>
    %102 = tpu.concatenate %47, %65, %83, %101 in 1 : vector<8x32xf32>, vector<8x32xf32>, vector<8x32xf32>, vector<8x32xf32> -> vector<8x128xf32>
    %103 = arith.truncf %102 : vector<8x128xf32> to vector<8x128xbf16>
    %c0_37 = arith.constant 0 : index
    %c384 = arith.constant 384 : index
    %104 = vector.load %arg5[%c0_37, %c384] : memref<128x1280xbf16, #tpu.memory_space<vmem>>, vector<128x128xbf16>
    %cst_38 = arith.constant dense<0.000000e+00> : vector<8x128xf32>
    %105 = tpu.matmul %103, %104, %cst_38 {dimension_numbers = #tpu.dot_dimension_numbers<[1], [0], [0], [1], [0, 0, 1, 1], [], []>} : vector<8x128xbf16>, vector<128x128xbf16>, vector<8x128xf32> -> vector<8x128xf32>
    %106 = vector.extract_strided_slice %0 {offsets = [3, 0], sizes = [1, 128], strides = [1, 1]} : vector<16x128xf32> to vector<1x128xf32>
    %107 = vector.broadcast %106 : vector<1x128xf32> to vector<8x128xf32>
    %108 = arith.addf %105, %107 : vector<8x128xf32>
    %109 = arith.addf %2, %108 : vector<8x128xf32>
    %cst_39 = arith.constant dense<0.000000e+00> : vector<8xf32>
    %110 = vector.multi_reduction <add>, %109, %cst_39 [1] : vector<8x128xf32> to vector<8xf32>
    %111 = vector.shape_cast %110 : vector<8xf32> to vector<8x1xf32>
    %cst_40 = arith.constant 1.280000e+02 : f32
    %112 = vector.broadcast %cst_40 : f32 to vector<8x1xf32>
    %113 = arith.divf %111, %112 : vector<8x1xf32>
    %114 = vector.broadcast %113 : vector<8x1xf32> to vector<8x128xf32>
    %115 = arith.subf %109, %114 : vector<8x128xf32>
    %116 = arith.mulf %115, %115 : vector<8x128xf32>
    %cst_41 = arith.constant dense<0.000000e+00> : vector<8xf32>
    %117 = vector.multi_reduction <add>, %116, %cst_41 [1] : vector<8x128xf32> to vector<8xf32>
    %118 = vector.shape_cast %117 : vector<8xf32> to vector<8x1xf32>
    %cst_42 = arith.constant 1.280000e+02 : f32
    %119 = vector.broadcast %cst_42 : f32 to vector<8x1xf32>
    %120 = arith.divf %118, %119 : vector<8x1xf32>
    %cst_43 = arith.constant 9.99999974E-6 : f32
    %121 = vector.broadcast %cst_43 : f32 to vector<8x1xf32>
    %122 = arith.addf %120, %121 : vector<8x1xf32>
    %123 = math.rsqrt %122 : vector<8x1xf32>
    %124 = vector.broadcast %123 : vector<8x1xf32> to vector<8x128xf32>
    %125 = arith.mulf %115, %124 : vector<8x128xf32>
    %126 = vector.extract_strided_slice %0 {offsets = [8, 0], sizes = [1, 128], strides = [1, 1]} : vector<16x128xf32> to vector<1x128xf32>
    %127 = vector.broadcast %126 : vector<1x128xf32> to vector<8x128xf32>
    %128 = arith.mulf %125, %127 : vector<8x128xf32>
    %129 = vector.extract_strided_slice %0 {offsets = [9, 0], sizes = [1, 128], strides = [1, 1]} : vector<16x128xf32> to vector<1x128xf32>
    %130 = vector.broadcast %129 : vector<1x128xf32> to vector<8x128xf32>
    %131 = arith.addf %128, %130 : vector<8x128xf32>
    %132 = arith.addf %131, %4 : vector<8x128xf32>
    %133 = arith.truncf %132 : vector<8x128xf32> to vector<8x128xbf16>
    %c0_44 = arith.constant 0 : index
    %c512 = arith.constant 512 : index
    %134 = vector.load %arg5[%c0_44, %c512] : memref<128x1280xbf16, #tpu.memory_space<vmem>>, vector<128x128xbf16>
    %cst_45 = arith.constant dense<0.000000e+00> : vector<8x128xf32>
    %135 = tpu.matmul %133, %134, %cst_45 {dimension_numbers = #tpu.dot_dimension_numbers<[1], [0], [0], [1], [0, 0, 1, 1], [], []>} : vector<8x128xbf16>, vector<128x128xbf16>, vector<8x128xf32> -> vector<8x128xf32>
    %136 = vector.extract_strided_slice %0 {offsets = [4, 0], sizes = [1, 128], strides = [1, 1]} : vector<16x128xf32> to vector<1x128xf32>
    %137 = vector.broadcast %136 : vector<1x128xf32> to vector<8x128xf32>
    %138 = arith.addf %135, %137 : vector<8x128xf32>
    %139 = arith.addf %6, %8 : vector<16x128xf32>
    %140 = arith.truncf %139 : vector<16x128xf32> to vector<16x128xbf16>
    %c0_46 = arith.constant 0 : index
    %c640 = arith.constant 640 : index
    %141 = vector.load %arg5[%c0_46, %c640] : memref<128x1280xbf16, #tpu.memory_space<vmem>>, vector<128x128xbf16>
    %cst_47 = arith.constant dense<0.000000e+00> : vector<16x128xf32>
    %142 = tpu.matmul %140, %141, %cst_47 {dimension_numbers = #tpu.dot_dimension_numbers<[1], [0], [0], [1], [0, 0, 1, 1], [], []>} : vector<16x128xbf16>, vector<128x128xbf16>, vector<16x128xf32> -> vector<16x128xf32>
    %143 = vector.extract_strided_slice %0 {offsets = [5, 0], sizes = [1, 128], strides = [1, 1]} : vector<16x128xf32> to vector<1x128xf32>
    %144 = vector.broadcast %143 : vector<1x128xf32> to vector<16x128xf32>
    %145 = arith.addf %142, %144 : vector<16x128xf32>
    %146 = arith.truncf %6 : vector<16x128xf32> to vector<16x128xbf16>
    %c0_48 = arith.constant 0 : index
    %c768 = arith.constant 768 : index
    %147 = vector.load %arg5[%c0_48, %c768] : memref<128x1280xbf16, #tpu.memory_space<vmem>>, vector<128x128xbf16>
    %cst_49 = arith.constant dense<0.000000e+00> : vector<16x128xf32>
    %148 = tpu.matmul %146, %147, %cst_49 {dimension_numbers = #tpu.dot_dimension_numbers<[1], [0], [0], [1], [0, 0, 1, 1], [], []>} : vector<16x128xbf16>, vector<128x128xbf16>, vector<16x128xf32> -> vector<16x128xf32>
    %149 = vector.extract_strided_slice %0 {offsets = [6, 0], sizes = [1, 128], strides = [1, 1]} : vector<16x128xf32> to vector<1x128xf32>
    %150 = vector.broadcast %149 : vector<1x128xf32> to vector<16x128xf32>
    %151 = arith.addf %148, %150 : vector<16x128xf32>
    %152 = arith.truncf %138 : vector<8x128xf32> to vector<8x128xbf16>
    %153 = arith.truncf %145 : vector<16x128xf32> to vector<16x128xbf16>
    %154 = arith.truncf %151 : vector<16x128xf32> to vector<16x128xbf16>
    %cst_50 = arith.constant 0.000000e+00 : f32
    %155 = vector.broadcast %cst_50 : f32 to vector<8x16xf32>
    %156 = vector.extract_strided_slice %152 {offsets = [0, 0], sizes = [8, 32], strides = [1, 1]} : vector<8x128xbf16> to vector<8x32xbf16>
    %157 = vector.extract_strided_slice %153 {offsets = [0, 0], sizes = [16, 32], strides = [1, 1]} : vector<16x128xbf16> to vector<16x32xbf16>
    "tpu.trace_start"() <{level = 10 : i32, message = "qd,kd->qk"}> : () -> ()
    %cst_51 = arith.constant dense<0.000000e+00> : vector<8x16xf32>
    %158 = tpu.matmul %156, %157, %cst_51 {dimension_numbers = #tpu.dot_dimension_numbers<[1], [1], [0], [0], [0, 0, 1, 0], [], []>} : vector<8x32xbf16>, vector<16x32xbf16>, vector<8x16xf32> -> vector<8x16xf32>
    "tpu.trace_stop"() : () -> ()
    %cst_52 = arith.constant 0.176776692 : f32
    %159 = vector.broadcast %cst_52 : f32 to vector<8x16xf32>
    %160 = arith.mulf %158, %159 : vector<8x16xf32>
    %cst_53 = arith.constant dense<0xFF800000> : vector<8xf32>
    %161 = vector.multi_reduction <maximumf>, %160, %cst_53 [1] : vector<8x16xf32> to vector<8xf32>
    %162 = vector.shape_cast %161 : vector<8xf32> to vector<8x1xf32>
    %163 = vector.broadcast %162 : vector<8x1xf32> to vector<8x16xf32>
    %164 = arith.subf %160, %163 : vector<8x16xf32>
    %165 = math.exp %164 : vector<8x16xf32>
    %cst_54 = arith.constant dense<0.000000e+00> : vector<8xf32>
    %166 = vector.multi_reduction <add>, %165, %cst_54 [1] : vector<8x16xf32> to vector<8xf32>
    %167 = vector.shape_cast %166 : vector<8xf32> to vector<8x1xf32>
    %168 = vector.broadcast %167 : vector<8x1xf32> to vector<8x16xf32>
    %169 = arith.divf %165, %168 : vector<8x16xf32>
    %170 = arith.truncf %169 : vector<8x16xf32> to vector<8x16xbf16>
    %171 = vector.extract_strided_slice %154 {offsets = [0, 0], sizes = [16, 32], strides = [1, 1]} : vector<16x128xbf16> to vector<16x32xbf16>
    %cst_55 = arith.constant dense<0.000000e+00> : vector<8x32xf32>
    %172 = tpu.matmul %170, %171, %cst_55 {dimension_numbers = #tpu.dot_dimension_numbers<[1], [0], [0], [1], [0, 0, 1, 1], [], []>} : vector<8x16xbf16>, vector<16x32xbf16>, vector<8x32xf32> -> vector<8x32xf32>
    %173 = arith.addf %155, %169 : vector<8x16xf32>
    %174 = vector.extract_strided_slice %152 {offsets = [0, 32], sizes = [8, 32], strides = [1, 1]} : vector<8x128xbf16> to vector<8x32xbf16>
    %175 = vector.extract_strided_slice %153 {offsets = [0, 32], sizes = [16, 32], strides = [1, 1]} : vector<16x128xbf16> to vector<16x32xbf16>
    "tpu.trace_start"() <{level = 10 : i32, message = "qd,kd->qk"}> : () -> ()
    %cst_56 = arith.constant dense<0.000000e+00> : vector<8x16xf32>
    %176 = tpu.matmul %174, %175, %cst_56 {dimension_numbers = #tpu.dot_dimension_numbers<[1], [1], [0], [0], [0, 0, 1, 0], [], []>} : vector<8x32xbf16>, vector<16x32xbf16>, vector<8x16xf32> -> vector<8x16xf32>
    "tpu.trace_stop"() : () -> ()
    %cst_57 = arith.constant 0.176776692 : f32
    %177 = vector.broadcast %cst_57 : f32 to vector<8x16xf32>
    %178 = arith.mulf %176, %177 : vector<8x16xf32>
    %cst_58 = arith.constant dense<0xFF800000> : vector<8xf32>
    %179 = vector.multi_reduction <maximumf>, %178, %cst_58 [1] : vector<8x16xf32> to vector<8xf32>
    %180 = vector.shape_cast %179 : vector<8xf32> to vector<8x1xf32>
    %181 = vector.broadcast %180 : vector<8x1xf32> to vector<8x16xf32>
    %182 = arith.subf %178, %181 : vector<8x16xf32>
    %183 = math.exp %182 : vector<8x16xf32>
    %cst_59 = arith.constant dense<0.000000e+00> : vector<8xf32>
    %184 = vector.multi_reduction <add>, %183, %cst_59 [1] : vector<8x16xf32> to vector<8xf32>
    %185 = vector.shape_cast %184 : vector<8xf32> to vector<8x1xf32>
    %186 = vector.broadcast %185 : vector<8x1xf32> to vector<8x16xf32>
    %187 = arith.divf %183, %186 : vector<8x16xf32>
    %188 = arith.truncf %187 : vector<8x16xf32> to vector<8x16xbf16>
    %189 = vector.extract_strided_slice %154 {offsets = [0, 32], sizes = [16, 32], strides = [1, 1]} : vector<16x128xbf16> to vector<16x32xbf16>
    %cst_60 = arith.constant dense<0.000000e+00> : vector<8x32xf32>
    %190 = tpu.matmul %188, %189, %cst_60 {dimension_numbers = #tpu.dot_dimension_numbers<[1], [0], [0], [1], [0, 0, 1, 1], [], []>} : vector<8x16xbf16>, vector<16x32xbf16>, vector<8x32xf32> -> vector<8x32xf32>
    %191 = arith.addf %173, %187 : vector<8x16xf32>
    %192 = vector.extract_strided_slice %152 {offsets = [0, 64], sizes = [8, 32], strides = [1, 1]} : vector<8x128xbf16> to vector<8x32xbf16>
    %193 = vector.extract_strided_slice %153 {offsets = [0, 64], sizes = [16, 32], strides = [1, 1]} : vector<16x128xbf16> to vector<16x32xbf16>
    "tpu.trace_start"() <{level = 10 : i32, message = "qd,kd->qk"}> : () -> ()
    %cst_61 = arith.constant dense<0.000000e+00> : vector<8x16xf32>
    %194 = tpu.matmul %192, %193, %cst_61 {dimension_numbers = #tpu.dot_dimension_numbers<[1], [1], [0], [0], [0, 0, 1, 0], [], []>} : vector<8x32xbf16>, vector<16x32xbf16>, vector<8x16xf32> -> vector<8x16xf32>
    "tpu.trace_stop"() : () -> ()
    %cst_62 = arith.constant 0.176776692 : f32
    %195 = vector.broadcast %cst_62 : f32 to vector<8x16xf32>
    %196 = arith.mulf %194, %195 : vector<8x16xf32>
    %cst_63 = arith.constant dense<0xFF800000> : vector<8xf32>
    %197 = vector.multi_reduction <maximumf>, %196, %cst_63 [1] : vector<8x16xf32> to vector<8xf32>
    %198 = vector.shape_cast %197 : vector<8xf32> to vector<8x1xf32>
    %199 = vector.broadcast %198 : vector<8x1xf32> to vector<8x16xf32>
    %200 = arith.subf %196, %199 : vector<8x16xf32>
    %201 = math.exp %200 : vector<8x16xf32>
    %cst_64 = arith.constant dense<0.000000e+00> : vector<8xf32>
    %202 = vector.multi_reduction <add>, %201, %cst_64 [1] : vector<8x16xf32> to vector<8xf32>
    %203 = vector.shape_cast %202 : vector<8xf32> to vector<8x1xf32>
    %204 = vector.broadcast %203 : vector<8x1xf32> to vector<8x16xf32>
    %205 = arith.divf %201, %204 : vector<8x16xf32>
    %206 = arith.truncf %205 : vector<8x16xf32> to vector<8x16xbf16>
    %207 = vector.extract_strided_slice %154 {offsets = [0, 64], sizes = [16, 32], strides = [1, 1]} : vector<16x128xbf16> to vector<16x32xbf16>
    %cst_65 = arith.constant dense<0.000000e+00> : vector<8x32xf32>
    %208 = tpu.matmul %206, %207, %cst_65 {dimension_numbers = #tpu.dot_dimension_numbers<[1], [0], [0], [1], [0, 0, 1, 1], [], []>} : vector<8x16xbf16>, vector<16x32xbf16>, vector<8x32xf32> -> vector<8x32xf32>
    %209 = arith.addf %191, %205 : vector<8x16xf32>
    %210 = vector.extract_strided_slice %152 {offsets = [0, 96], sizes = [8, 32], strides = [1, 1]} : vector<8x128xbf16> to vector<8x32xbf16>
    %211 = vector.extract_strided_slice %153 {offsets = [0, 96], sizes = [16, 32], strides = [1, 1]} : vector<16x128xbf16> to vector<16x32xbf16>
    "tpu.trace_start"() <{level = 10 : i32, message = "qd,kd->qk"}> : () -> ()
    %cst_66 = arith.constant dense<0.000000e+00> : vector<8x16xf32>
    %212 = tpu.matmul %210, %211, %cst_66 {dimension_numbers = #tpu.dot_dimension_numbers<[1], [1], [0], [0], [0, 0, 1, 0], [], []>} : vector<8x32xbf16>, vector<16x32xbf16>, vector<8x16xf32> -> vector<8x16xf32>
    "tpu.trace_stop"() : () -> ()
    %cst_67 = arith.constant 0.176776692 : f32
    %213 = vector.broadcast %cst_67 : f32 to vector<8x16xf32>
    %214 = arith.mulf %212, %213 : vector<8x16xf32>
    %cst_68 = arith.constant dense<0xFF800000> : vector<8xf32>
    %215 = vector.multi_reduction <maximumf>, %214, %cst_68 [1] : vector<8x16xf32> to vector<8xf32>
    %216 = vector.shape_cast %215 : vector<8xf32> to vector<8x1xf32>
    %217 = vector.broadcast %216 : vector<8x1xf32> to vector<8x16xf32>
    %218 = arith.subf %214, %217 : vector<8x16xf32>
    %219 = math.exp %218 : vector<8x16xf32>
    %cst_69 = arith.constant dense<0.000000e+00> : vector<8xf32>
    %220 = vector.multi_reduction <add>, %219, %cst_69 [1] : vector<8x16xf32> to vector<8xf32>
    %221 = vector.shape_cast %220 : vector<8xf32> to vector<8x1xf32>
    %222 = vector.broadcast %221 : vector<8x1xf32> to vector<8x16xf32>
    %223 = arith.divf %219, %222 : vector<8x16xf32>
    %224 = arith.truncf %223 : vector<8x16xf32> to vector<8x16xbf16>
    %225 = vector.extract_strided_slice %154 {offsets = [0, 96], sizes = [16, 32], strides = [1, 1]} : vector<16x128xbf16> to vector<16x32xbf16>
    %cst_70 = arith.constant dense<0.000000e+00> : vector<8x32xf32>
    %226 = tpu.matmul %224, %225, %cst_70 {dimension_numbers = #tpu.dot_dimension_numbers<[1], [0], [0], [1], [0, 0, 1, 1], [], []>} : vector<8x16xbf16>, vector<16x32xbf16>, vector<8x32xf32> -> vector<8x32xf32>
    %227 = arith.addf %209, %223 : vector<8x16xf32>
    %228 = tpu.concatenate %172, %190, %208, %226 in 1 : vector<8x32xf32>, vector<8x32xf32>, vector<8x32xf32>, vector<8x32xf32> -> vector<8x128xf32>
    %cst_71 = arith.constant 2.500000e-01 : f32
    %229 = vector.broadcast %cst_71 : f32 to vector<8x16xf32>
    %230 = arith.mulf %227, %229 : vector<8x16xf32>
    %231 = arith.truncf %228 : vector<8x128xf32> to vector<8x128xbf16>
    %c0_72 = arith.constant 0 : index
    %c896 = arith.constant 896 : index
    %232 = vector.load %arg5[%c0_72, %c896] : memref<128x1280xbf16, #tpu.memory_space<vmem>>, vector<128x128xbf16>
    %cst_73 = arith.constant dense<0.000000e+00> : vector<8x128xf32>
    %233 = tpu.matmul %231, %232, %cst_73 {dimension_numbers = #tpu.dot_dimension_numbers<[1], [0], [0], [1], [0, 0, 1, 1], [], []>} : vector<8x128xbf16>, vector<128x128xbf16>, vector<8x128xf32> -> vector<8x128xf32>
    %234 = vector.extract_strided_slice %0 {offsets = [7, 0], sizes = [1, 128], strides = [1, 1]} : vector<16x128xf32> to vector<1x128xf32>
    %235 = vector.broadcast %234 : vector<1x128xf32> to vector<8x128xf32>
    %236 = arith.addf %233, %235 : vector<8x128xf32>
    %237 = arith.addf %131, %236 : vector<8x128xf32>
    %cst_74 = arith.constant dense<0.000000e+00> : vector<8xf32>
    %238 = vector.multi_reduction <add>, %237, %cst_74 [1] : vector<8x128xf32> to vector<8xf32>
    %239 = vector.shape_cast %238 : vector<8xf32> to vector<8x1xf32>
    %cst_75 = arith.constant 1.280000e+02 : f32
    %240 = vector.broadcast %cst_75 : f32 to vector<8x1xf32>
    %241 = arith.divf %239, %240 : vector<8x1xf32>
    %242 = vector.broadcast %241 : vector<8x1xf32> to vector<8x128xf32>
    %243 = arith.subf %237, %242 : vector<8x128xf32>
    %244 = arith.mulf %243, %243 : vector<8x128xf32>
    %cst_76 = arith.constant dense<0.000000e+00> : vector<8xf32>
    %245 = vector.multi_reduction <add>, %244, %cst_76 [1] : vector<8x128xf32> to vector<8xf32>
    %246 = vector.shape_cast %245 : vector<8xf32> to vector<8x1xf32>
    %cst_77 = arith.constant 1.280000e+02 : f32
    %247 = vector.broadcast %cst_77 : f32 to vector<8x1xf32>
    %248 = arith.divf %246, %247 : vector<8x1xf32>
    %cst_78 = arith.constant 9.99999974E-6 : f32
    %249 = vector.broadcast %cst_78 : f32 to vector<8x1xf32>
    %250 = arith.addf %248, %249 : vector<8x1xf32>
    %251 = math.rsqrt %250 : vector<8x1xf32>
    %252 = vector.broadcast %251 : vector<8x1xf32> to vector<8x128xf32>
    %253 = arith.mulf %243, %252 : vector<8x128xf32>
    %254 = vector.extract_strided_slice %0 {offsets = [10, 0], sizes = [1, 128], strides = [1, 1]} : vector<16x128xf32> to vector<1x128xf32>
    %255 = vector.broadcast %254 : vector<1x128xf32> to vector<8x128xf32>
    %256 = arith.mulf %253, %255 : vector<8x128xf32>
    %257 = vector.extract_strided_slice %0 {offsets = [11, 0], sizes = [1, 128], strides = [1, 1]} : vector<16x128xf32> to vector<1x128xf32>
    %258 = vector.broadcast %257 : vector<1x128xf32> to vector<8x128xf32>
    %259 = arith.addf %256, %258 : vector<8x128xf32>
    %260 = arith.truncf %259 : vector<8x128xf32> to vector<8x128xbf16>
    %c0_79 = arith.constant 0 : index
    %c1024 = arith.constant 1024 : index
    %261 = vector.load %arg5[%c0_79, %c1024] : memref<128x1280xbf16, #tpu.memory_space<vmem>>, vector<128x256xbf16>
    %cst_80 = arith.constant dense<0.000000e+00> : vector<8x256xf32>
    %262 = tpu.matmul %260, %261, %cst_80 {dimension_numbers = #tpu.dot_dimension_numbers<[1], [0], [0], [1], [0, 0, 1, 1], [], []>} : vector<8x128xbf16>, vector<128x256xbf16>, vector<8x256xf32> -> vector<8x256xf32>
    %c0_81 = arith.constant 0 : index
    %c0_82 = arith.constant 0 : index
    %263 = vector.load %arg8[%c0_81, %c0_82] : memref<1x256xf32, #tpu.memory_space<vmem>>, vector<1x256xf32>
    %264 = vector.broadcast %263 : vector<1x256xf32> to vector<8x256xf32>
    %265 = arith.addf %262, %264 : vector<8x256xf32>
    %cst_83 = arith.constant 0.000000e+00 : f32
    %266 = vector.broadcast %cst_83 : f32 to vector<8x256xf32>
    %267 = arith.maximumf %265, %266 : vector<8x256xf32>
    %268 = arith.truncf %267 : vector<8x256xf32> to vector<8x256xbf16>
    %c0_84 = arith.constant 0 : index
    %c0_85 = arith.constant 0 : index
    %269 = vector.load %arg6[%c0_84, %c0_85] : memref<256x128xbf16, #tpu.memory_space<vmem>>, vector<256x128xbf16>
    %cst_86 = arith.constant dense<0.000000e+00> : vector<8x128xf32>
    %270 = tpu.matmul %268, %269, %cst_86 {dimension_numbers = #tpu.dot_dimension_numbers<[1], [0], [0], [1], [0, 0, 1, 1], [], []>} : vector<8x256xbf16>, vector<256x128xbf16>, vector<8x128xf32> -> vector<8x128xf32>
    %271 = vector.extract_strided_slice %0 {offsets = [14, 0], sizes = [1, 128], strides = [1, 1]} : vector<16x128xf32> to vector<1x128xf32>
    %272 = vector.broadcast %271 : vector<1x128xf32> to vector<8x128xf32>
    %273 = arith.addf %270, %272 : vector<8x128xf32>
    %274 = arith.addf %259, %273 : vector<8x128xf32>
    %cst_87 = arith.constant dense<0.000000e+00> : vector<8xf32>
    %275 = vector.multi_reduction <add>, %274, %cst_87 [1] : vector<8x128xf32> to vector<8xf32>
    %276 = vector.shape_cast %275 : vector<8xf32> to vector<8x1xf32>
    %cst_88 = arith.constant 1.280000e+02 : f32
    %277 = vector.broadcast %cst_88 : f32 to vector<8x1xf32>
    %278 = arith.divf %276, %277 : vector<8x1xf32>
    %279 = vector.broadcast %278 : vector<8x1xf32> to vector<8x128xf32>
    %280 = arith.subf %274, %279 : vector<8x128xf32>
    %281 = arith.mulf %280, %280 : vector<8x128xf32>
    %cst_89 = arith.constant dense<0.000000e+00> : vector<8xf32>
    %282 = vector.multi_reduction <add>, %281, %cst_89 [1] : vector<8x128xf32> to vector<8xf32>
    %283 = vector.shape_cast %282 : vector<8xf32> to vector<8x1xf32>
    %cst_90 = arith.constant 1.280000e+02 : f32
    %284 = vector.broadcast %cst_90 : f32 to vector<8x1xf32>
    %285 = arith.divf %283, %284 : vector<8x1xf32>
    %cst_91 = arith.constant 9.99999974E-6 : f32
    %286 = vector.broadcast %cst_91 : f32 to vector<8x1xf32>
    %287 = arith.addf %285, %286 : vector<8x1xf32>
    %288 = math.rsqrt %287 : vector<8x1xf32>
    %289 = vector.broadcast %288 : vector<8x1xf32> to vector<8x128xf32>
    %290 = arith.mulf %280, %289 : vector<8x128xf32>
    %291 = vector.extract_strided_slice %0 {offsets = [12, 0], sizes = [1, 128], strides = [1, 1]} : vector<16x128xf32> to vector<1x128xf32>
    %292 = vector.broadcast %291 : vector<1x128xf32> to vector<8x128xf32>
    %293 = arith.mulf %290, %292 : vector<8x128xf32>
    %294 = vector.extract_strided_slice %0 {offsets = [13, 0], sizes = [1, 128], strides = [1, 1]} : vector<16x128xf32> to vector<1x128xf32>
    %295 = vector.broadcast %294 : vector<1x128xf32> to vector<8x128xf32>
    %296 = arith.addf %293, %295 : vector<8x128xf32>
    %297 = vector.shape_cast %296 : vector<8x128xf32> to vector<1x8x128xf32>
    %c0_92 = arith.constant 0 : index
    %c0_93 = arith.constant 0 : index
    %c0_94 = arith.constant 0 : index
    %298 = vector.load %arg9[%c0_92, %c0_93, %c0_94] : memref<1x8x128xf32, #tpu.memory_space<vmem>>, vector<1x8x128xf32>
    tpu.vector_store %arg9[%c0_92, %c0_93, %c0_94], %297 {strides = array<i32>} : memref<1x8x128xf32, #tpu.memory_space<vmem>>, vector<1x8x128xf32>,
    %cst_95 = arith.constant 0.000000e+00 : f32
    %299 = vector.broadcast %cst_95 : f32 to vector<8x112xf32>
    %300 = tpu.concatenate %230, %299 in 1 : vector<8x16xf32>, vector<8x112xf32> -> vector<8x128xf32>
    %301 = vector.shape_cast %300 : vector<8x128xf32> to vector<1x8x128xf32>
    %c0_96 = arith.constant 0 : index
    %c0_97 = arith.constant 0 : index
    %c0_98 = arith.constant 0 : index
    %302 = vector.load %arg10[%c0_96, %c0_97, %c0_98] : memref<1x8x128xf32, #tpu.memory_space<vmem>>, vector<1x8x128xf32>
    tpu.vector_store %arg10[%c0_96, %c0_97, %c0_98], %301 {strides = array<i32>} : memref<1x8x128xf32, #tpu.memory_space<vmem>>, vector<1x8x128xf32>,
    return
  }
  func.func @transform_0(%arg0: i32) -> (i32, i32, i32) {
    %c0_i32 = arith.constant 0 : i32
    %c0_i32_0 = arith.constant 0 : i32
    %c0_i32_1 = arith.constant 0 : i32
    return %arg0, %c0_i32, %c0_i32_0 : i32, i32, i32
  }
  func.func @transform_1(%arg0: i32) -> (i32, i32, i32) {
    %c0_i32 = arith.constant 0 : i32
    %c0_i32_0 = arith.constant 0 : i32
    %c0_i32_1 = arith.constant 0 : i32
    return %arg0, %c0_i32, %c0_i32_0 : i32, i32, i32
  }
  func.func @transform_2(%arg0: i32) -> (i32, i32, i32) {
    %c0_i32 = arith.constant 0 : i32
    %c0_i32_0 = arith.constant 0 : i32
    %c0_i32_1 = arith.constant 0 : i32
    return %arg0, %c0_i32, %c0_i32_0 : i32, i32, i32
  }
  func.func @transform_3(%arg0: i32) -> (i32, i32, i32) {
    %c0_i32 = arith.constant 0 : i32
    %c0_i32_0 = arith.constant 0 : i32
    %c0_i32_1 = arith.constant 0 : i32
    return %arg0, %c0_i32, %c0_i32_0 : i32, i32, i32
  }
  func.func @transform_4(%arg0: i32) -> (i32, i32) {
    %c0_i32 = arith.constant 0 : i32
    %c0_i32_0 = arith.constant 0 : i32
    %c0_i32_1 = arith.constant 0 : i32
    return %c0_i32, %c0_i32_0 : i32, i32
  }
  func.func @transform_5(%arg0: i32) -> (i32, i32) {
    %c0_i32 = arith.constant 0 : i32
    %c0_i32_0 = arith.constant 0 : i32
    %c0_i32_1 = arith.constant 0 : i32
    return %c0_i32, %c0_i32_0 : i32, i32
  }
  func.func @transform_6(%arg0: i32) -> (i32, i32) {
    %c0_i32 = arith.constant 0 : i32
    %c0_i32_0 = arith.constant 0 : i32
    %c0_i32_1 = arith.constant 0 : i32
    return %c0_i32, %c0_i32_0 : i32, i32
  }
  func.func @transform_7(%arg0: i32) -> (i32, i32) {
    %c0_i32 = arith.constant 0 : i32
    %c0_i32_0 = arith.constant 0 : i32
    %c0_i32_1 = arith.constant 0 : i32
    return %c0_i32, %c0_i32_0 : i32, i32
  }
  func.func @transform_8(%arg0: i32) -> (i32, i32, i32) {
    %c0_i32 = arith.constant 0 : i32
    %c0_i32_0 = arith.constant 0 : i32
    %c0_i32_1 = arith.constant 0 : i32
    return %arg0, %c0_i32, %c0_i32_0 : i32, i32, i32
  }
  func.func @transform_9(%arg0: i32) -> (i32, i32, i32) {
    %c0_i32 = arith.constant 0 : i32
    %c0_i32_0 = arith.constant 0 : i32
    %c0_i32_1 = arith.constant 0 : i32
    return %arg0, %c0_i32, %c0_i32_0 : i32, i32, i32
  }
}

</mosaic_0001>

<llo_original>
// kernel: tpu_custom_call.1
$region0: #{tpu_custom_call.1}
  #allocation0 [shape = 'u32[]', space=smem, size = 0x4, offset = 0x4, fixed_abs, tag = 'smem constant byte address 0x4 - core index']
  #allocation1 [shape = 'u32[144,128]{1,0:T(1,128)}', space=vmem, size = 0x12000, scoped, tag = 'internal scratch']
  %s0 = inlined_call_operand.hbm [shape: f32[2,8,128], index: 0, kind: input, shape index: {}]
  %s1 = inlined_call_operand.hbm [shape: f32[2,8,128], index: 1, kind: input, shape index: {}]
  %s2 = inlined_call_operand.hbm [shape: f32[2,16,128], index: 2, kind: input, shape index: {}]
  %s3 = inlined_call_operand.hbm [shape: f32[2,16,128], index: 3, kind: input, shape index: {}]
  %s4 = inlined_call_operand.hbm [shape: bf16[128,1280], index: 4, kind: input, shape index: {}]
  %s5 = inlined_call_operand.hbm [shape: bf16[256,128], index: 5, kind: input, shape index: {}]
  %s6 = inlined_call_operand.hbm [shape: f32[16,128], index: 6, kind: input, shape index: {}]
  %s7 = inlined_call_operand.vmem [shape: f32[1,256], index: 7, kind: input, shape index: {}]
  %s8 = inlined_call_operand.hbm [shape: f32[2,8,128], index: 8, kind: output, shape index: {0}]
  %s9 = inlined_call_operand.hbm [shape: f32[2,8,128], index: 9, kind: output, shape index: {1}]
  %10 = xla_tuple %s8, %s9
  %s11 = sld [smem:[#allocation0]]
  $region101: #{tpu_custom_call.1} parent=0
    _
  %s13 = ssub.s32 1, %s11
  %s14 = scalar_select 0, %s13, %s11
  $region1: #{tpu_custom_call.1} parent=0
    #allocation2 [shape = 'u8[8192]{0}', space=vmem, size = 0x2000, scoped, tag = 'input window, operand 0']
    #allocation3 [shape = 's32[2]{0}', space=sflag, size = 0x8, scoped, tag = 'scoped memory for tpu_custom_call.1']
    #allocation4 [shape = 's32[2]{0}', space=sflag, size = 0x8, scoped, tag = 'scoped memory for tpu_custom_call.1']
    #allocation5 [shape = 'u8[8192]{0}', space=vmem, size = 0x2000, scoped, tag = 'input window, operand 1']
    #allocation6 [shape = 's32[2]{0}', space=sflag, size = 0x8, scoped, tag = 'scoped memory for tpu_custom_call.1']
    #allocation7 [shape = 'u8[16384]{0}', space=vmem, size = 0x4000, scoped, tag = 'input window, operand 2']
    #allocation8 [shape = 'u8[16384]{0}', space=vmem, size = 0x4000, scoped, tag = 'input window, operand 3']
    #allocation9 [shape = 's32[2]{0}', space=sflag, size = 0x8, scoped, tag = 'scoped memory for tpu_custom_call.1']
    #allocation10 [shape = 'u8[327680]{0}', space=vmem, size = 0x50000, scoped, tag = 'input window, operand 4, single buffered']
    #allocation11 [shape = 'u8[65536]{0}', space=vmem, size = 0x10000, scoped, tag = 'input window, operand 5, single buffered']
    #allocation12 [shape = 's32[1]{0}', space=sflag, size = 0x4, scoped, tag = 'scoped memory for tpu_custom_call.1']
    #allocation13 [shape = 'u8[8192]{0}', space=vmem, size = 0x2000, scoped, tag = 'input window, operand 6, single buffered']
    #allocation14 [shape = 'u8[8192]{0}', space=vmem, size = 0x2000, scoped, tag = 'output window, operand 0']
    #allocation15 [shape = 'u8[8192]{0}', space=vmem, size = 0x2000, scoped, tag = 'output window, operand 1']
    #allocation16 [shape = 's32[2]{0}', space=sflag, size = 0x8, scoped, tag = 'scoped memory for tpu_custom_call.1']
    %15 = vsyncpa [#allocation3], 0
    %s16 = scalar_lea.sflag [#allocation3], 1
    %17 = vsyncpa %s16, 0
    %18 = vsyncpa [#allocation6], 0
    %s19 = scalar_lea.sflag [#allocation6], 1
    %20 = vsyncpa %s19, 0
    %21 = vsyncpa [#allocation9], 0
    %s22 = scalar_lea.sflag [#allocation9], 1
    %23 = vsyncpa %s22, 0
    %24 = vsyncpa [#allocation12], 0
    %25 = vsyncpa [#allocation4], 0
    %s26 = scalar_lea.sflag [#allocation4], 1
    %27 = vsyncpa %s26, 0
    %28 = vsyncpa [#allocation16], 0
    %s29 = scalar_lea.sflag [#allocation16], 1
    %30 = vsyncpa %s29, 0
    loop: start=0, step=1, limit=4
    $region2: #{tpu_custom_call.1} parent=1 // loop_pre_header
      _
    $region3: #{tpu_custom_call.1} parent=1 // loop_header
      %s32 = sphi 0, %s36
      %p33 = scmp.ge.s32.totalorder %s32, 4
      %s42 = sphi 0, %s44
      %s45 = sphi 0, %s42
      %s46 = sphi 0, %s45
      %s62 = sphi 0, %s46
      %s68 = sphi 0, %s70
      %s71 = sphi 0, %s68
      %s72 = sphi 0, %s71
      %s88 = sphi 0, %s72
      %s94 = sphi 0, %s96
      %s97 = sphi 0, %s94
      %s98 = sphi 0, %s97
      %s114 = sphi 0, %s98
      %s120 = sphi 0, %s122
      %s123 = sphi 0, %s120
      %s124 = sphi 0, %s123
      %s140 = sphi 0, %s124
      %s144 = sphi 0, %s144
      %s146 = sphi 0, %s144
      %s147 = sphi 0, %s146
      %s161 = sphi 0, %s147
      %s165 = sphi 0, %s165
      %s167 = sphi 0, %s165
      %s168 = sphi 0, %s167
      %s182 = sphi 0, %s168
      %s186 = sphi 0, %s186
      %s188 = sphi 0, %s186
      %s189 = sphi 0, %s188
      %s203 = sphi 0, %s189
      %s207 = sphi 0, %s207
      %s209 = sphi 0, %s207
      %s210 = sphi 0, %s209
      %s224 = sphi 0, %s210
      %s230 = sphi 0, %s232
      %s233 = sphi 0, %s230
      %s234 = sphi 0, %s233
      %s250 = sphi 0, %s234
      %s256 = sphi 0, %s258
      %s259 = sphi 0, %s256
      %s260 = sphi 0, %s259
      %s276 = sphi 0, %s260
    $region4: #{tpu_custom_call.1} parent=1 // loop_header_branch
      %35 = sbr.rel (%p33) target = $region8
    $region5: #{tpu_custom_call.1} parent=1 // loop_body
      %s37 = ssub.s32 %s32, 1
      %s38 = ssub.s32 %s32, 2
      %s39 = sadd.s32 %s32, 1
      %s40 = ssub.s32 %s32, %s39
      %p41 = scmp.eq.s32.totalorder %s40, 0
      %s43 = sadd.s32 %s42, 1
      %s44 = scalar_select %p41, %s42, %s43
      %p47 = pneg %p41
      %p48 = scmp.eq.s32.totalorder %s32, 1
      %p49 = por %p47, %p48
      %p50 = scmp.ne.s32.totalorder %s42, %s45
      %p51 = scmp.eq.s32.totalorder %s32, 0
      %p52 = por %p50, %p51
      %p53 = scmp.ne.s32.totalorder %s42, %s45
      %p54 = scmp.eq.s32.totalorder %s37, 1
      %p55 = por %p53, %p54
      %p56 = scmp.ne.s32.totalorder %s45, %s46
      %p57 = scmp.eq.s32.totalorder %s37, 0
      %p58 = por %p56, %p57
      %p59 = scmp.ne.s32.totalorder %s45, %s46
      %p60 = scmp.eq.s32.totalorder %s38, 1
      %p61 = por %p59, %p60
      %p63 = scmp.ne.s32.totalorder %s46, %s62
      %p64 = scmp.eq.s32.totalorder %s38, 0
      %p65 = por %p63, %p64
      %s66 = ssub.s32 %s32, %s39
      %p67 = scmp.eq.s32.totalorder %s66, 0
      %s69 = sadd.s32 %s68, 1
      %s70 = scalar_select %p67, %s68, %s69
      %p73 = pneg %p67
      %p74 = scmp.eq.s32.totalorder %s32, 1
      %p75 = por %p73, %p74
      %p76 = scmp.ne.s32.totalorder %s68, %s71
      %p77 = scmp.eq.s32.totalorder %s32, 0
      %p78 = por %p76, %p77
      %p79 = scmp.ne.s32.totalorder %s68, %s71
      %p80 = scmp.eq.s32.totalorder %s37, 1
      %p81 = por %p79, %p80
      %p82 = scmp.ne.s32.totalorder %s71, %s72
      %p83 = scmp.eq.s32.totalorder %s37, 0
      %p84 = por %p82, %p83
      %p85 = scmp.ne.s32.totalorder %s71, %s72
      %p86 = scmp.eq.s32.totalorder %s38, 1
      %p87 = por %p85, %p86
      %p89 = scmp.ne.s32.totalorder %s72, %s88
      %p90 = scmp.eq.s32.totalorder %s38, 0
      %p91 = por %p89, %p90
      %s92 = ssub.s32 %s32, %s39
      %p93 = scmp.eq.s32.totalorder %s92, 0
      %s95 = sadd.s32 %s94, 1
      %s96 = scalar_select %p93, %s94, %s95
      %p99 = pneg %p93
      %p100 = scmp.eq.s32.totalorder %s32, 1
      %p101 = por %p99, %p100
      %p102 = scmp.ne.s32.totalorder %s94, %s97
      %p103 = scmp.eq.s32.totalorder %s32, 0
      %p104 = por %p102, %p103
      %p105 = scmp.ne.s32.totalorder %s94, %s97
      %p106 = scmp.eq.s32.totalorder %s37, 1
      %p107 = por %p105, %p106
      %p108 = scmp.ne.s32.totalorder %s97, %s98
      %p109 = scmp.eq.s32.totalorder %s37, 0
      %p110 = por %p108, %p109
      %p111 = scmp.ne.s32.totalorder %s97, %s98
      %p112 = scmp.eq.s32.totalorder %s38, 1
      %p113 = por %p111, %p112
      %p115 = scmp.ne.s32.totalorder %s98, %s114
      %p116 = scmp.eq.s32.totalorder %s38, 0
      %p117 = por %p115, %p116
      %s118 = ssub.s32 %s32, %s39
      %p119 = scmp.eq.s32.totalorder %s118, 0
      %s121 = sadd.s32 %s120, 1
      %s122 = scalar_select %p119, %s120, %s121
      %p125 = pneg %p119
      %p126 = scmp.eq.s32.totalorder %s32, 1
      %p127 = por %p125, %p126
      %p128 = scmp.ne.s32.totalorder %s120, %s123
      %p129 = scmp.eq.s32.totalorder %s32, 0
      %p130 = por %p128, %p129
      %p131 = scmp.ne.s32.totalorder %s120, %s123
      %p132 = scmp.eq.s32.totalorder %s37, 1
      %p133 = por %p131, %p132
      %p134 = scmp.ne.s32.totalorder %s123, %s124
      %p135 = scmp.eq.s32.totalorder %s37, 0
      %p136 = por %p134, %p135
      %p137 = scmp.ne.s32.totalorder %s123, %s124
      %p138 = scmp.eq.s32.totalorder %s38, 1
      %p139 = por %p137, %p138
      %p141 = scmp.ne.s32.totalorder %s124, %s140
      %p142 = scmp.eq.s32.totalorder %s38, 0
      %p143 = por %p141, %p142
      %s145 = sadd.s32 %s144, 1
      %p148 = scmp.eq.s32.totalorder %s32, 1
      %p149 = scmp.ne.s32.totalorder %s144, %s146
      %p150 = scmp.eq.s32.totalorder %s32, 0
      %p151 = por %p149, %p150
      %p152 = scmp.ne.s32.totalorder %s144, %s146
      %p153 = scmp.eq.s32.totalorder %s37, 1
      %p154 = por %p152, %p153
      %p155 = scmp.ne.s32.totalorder %s146, %s147
      %p156 = scmp.eq.s32.totalorder %s37, 0
      %p157 = por %p155, %p156
      %p158 = scmp.ne.s32.totalorder %s146, %s147
      %p159 = scmp.eq.s32.totalorder %s38, 1
      %p160 = por %p158, %p159
      %p162 = scmp.ne.s32.totalorder %s147, %s161
      %p163 = scmp.eq.s32.totalorder %s38, 0
      %p164 = por %p162, %p163
      %s166 = sadd.s32 %s165, 1
      %p169 = scmp.eq.s32.totalorder %s32, 1
      %p170 = scmp.ne.s32.totalorder %s165, %s167
      %p171 = scmp.eq.s32.totalorder %s32, 0
      %p172 = por %p170, %p171
      %p173 = scmp.ne.s32.totalorder %s165, %s167
      %p174 = scmp.eq.s32.totalorder %s37, 1
      %p175 = por %p173, %p174
      %p176 = scmp.ne.s32.totalorder %s167, %s168
      %p177 = scmp.eq.s32.totalorder %s37, 0
      %p178 = por %p176, %p177
      %p179 = scmp.ne.s32.totalorder %s167, %s168
      %p180 = scmp.eq.s32.totalorder %s38, 1
      %p181 = por %p179, %p180
      %p183 = scmp.ne.s32.totalorder %s168, %s182
      %p184 = scmp.eq.s32.totalorder %s38, 0
      %p185 = por %p183, %p184
      %s187 = sadd.s32 %s186, 1
      %p190 = scmp.eq.s32.totalorder %s32, 1
      %p191 = scmp.ne.s32.totalorder %s186, %s188
      %p192 = scmp.eq.s32.totalorder %s32, 0
      %p193 = por %p191, %p192
      %p194 = scmp.ne.s32.totalorder %s186, %s188
      %p195 = scmp.eq.s32.totalorder %s37, 1
      %p196 = por %p194, %p195
      %p197 = scmp.ne.s32.totalorder %s188, %s189
      %p198 = scmp.eq.s32.totalorder %s37, 0
      %p199 = por %p197, %p198
      %p200 = scmp.ne.s32.totalorder %s188, %s189
      %p201 = scmp.eq.s32.totalorder %s38, 1
      %p202 = por %p200, %p201
      %p204 = scmp.ne.s32.totalorder %s189, %s203
      %p205 = scmp.eq.s32.totalorder %s38, 0
      %p206 = por %p204, %p205
      %s208 = sadd.s32 %s207, 1
      %p211 = scmp.eq.s32.totalorder %s32, 1
      %p212 = scmp.ne.s32.totalorder %s207, %s209
      %p213 = scmp.eq.s32.totalorder %s32, 0
      %p214 = por %p212, %p213
      %p215 = scmp.ne.s32.totalorder %s207, %s209
      %p216 = scmp.eq.s32.totalorder %s37, 1
      %p217 = por %p215, %p216
      %p218 = scmp.ne.s32.totalorder %s209, %s210
      %p219 = scmp.eq.s32.totalorder %s37, 0
      %p220 = por %p218, %p219
      %p221 = scmp.ne.s32.totalorder %s209, %s210
      %p222 = scmp.eq.s32.totalorder %s38, 1
      %p223 = por %p221, %p222
      %p225 = scmp.ne.s32.totalorder %s210, %s224
      %p226 = scmp.eq.s32.totalorder %s38, 0
      %p227 = por %p225, %p226
      %s228 = ssub.s32 %s32, %s39
      %p229 = scmp.eq.s32.totalorder %s228, 0
      %s231 = sadd.s32 %s230, 1
      %s232 = scalar_select %p229, %s230, %s231
      %p235 = pneg %p229
      %p236 = scmp.eq.s32.totalorder %s32, 1
      %p237 = por %p235, %p236
      %p238 = scmp.ne.s32.totalorder %s230, %s233
      %p239 = scmp.eq.s32.totalorder %s32, 0
      %p240 = por %p238, %p239
      %p241 = scmp.ne.s32.totalorder %s230, %s233
      %p242 = scmp.eq.s32.totalorder %s37, 1
      %p243 = por %p241, %p242
      %p244 = scmp.ne.s32.totalorder %s233, %s234
      %p245 = scmp.eq.s32.totalorder %s37, 0
      %p246 = por %p244, %p245
      %p247 = scmp.ne.s32.totalorder %s233, %s234
      %p248 = scmp.eq.s32.totalorder %s38, 1
      %p249 = por %p247, %p248
      %p251 = scmp.ne.s32.totalorder %s234, %s250
      %p252 = scmp.eq.s32.totalorder %s38, 0
      %p253 = por %p251, %p252
      %s254 = ssub.s32 %s32, %s39
      %p255 = scmp.eq.s32.totalorder %s254, 0
      %s257 = sadd.s32 %s256, 1
      %s258 = scalar_select %p255, %s256, %s257
      %p261 = pneg %p255
      %p262 = scmp.eq.s32.totalorder %s32, 1
      %p263 = por %p261, %p262
      %p264 = scmp.ne.s32.totalorder %s256, %s259
      %p265 = scmp.eq.s32.totalorder %s32, 0
      %p266 = por %p264, %p265
      %p267 = scmp.ne.s32.totalorder %s256, %s259
      %p268 = scmp.eq.s32.totalorder %s37, 1
      %p269 = por %p267, %p268
      %p270 = scmp.ne.s32.totalorder %s259, %s260
      %p271 = scmp.eq.s32.totalorder %s37, 0
      %p272 = por %p270, %p271
      %p273 = scmp.ne.s32.totalorder %s259, %s260
      %p274 = scmp.eq.s32.totalorder %s38, 1
      %p275 = por %p273, %p274
      %p277 = scmp.ne.s32.totalorder %s260, %s276
      %p278 = scmp.eq.s32.totalorder %s38, 0
      %p279 = por %p277, %p278
      %p280 = scmp.le.s32.totalorder 1, %s32
      %p281 = scmp.lt.s32.totalorder %s32, 3
      %p282 = pnand %p280, %p281
      %p283 = pneg %p282
      // Predicated region
      $region9: #{tpu_custom_call.1} parent=5 // pred_check
        _
      $region10: #{tpu_custom_call.1} parent=5 // pred_check_branch
        %285 = sbr.rel (%p282) target = $region12
      $region11: #{tpu_custom_call.1} parent=5 // pred_region
        %s286 = ssub.s32 %s32, 1
        // Predicated region
        $region13: #{tpu_custom_call.1} parent=11 // pred_check
          %p287 = pneg %p157
        $region14: #{tpu_custom_call.1} parent=11 // pred_check_branch
          %289 = sbr.rel (%p287) target = $region16
        $region15: #{tpu_custom_call.1} parent=11 // pred_region
          %s291 = ssub.s32 10240, 10240
          %292 = vsyncadd [#allocation9], %s291
          %s293 = sshll.u32 [#allocation10], 4
          %s294 = int_to_ptr.vmem [resolvable:$true] %s293
          %299 = dma.hbm_to_vmem [thread:$0]  %s4, 10240, %s294, [#allocation9], 640, 640, 40
        $region16: #{tpu_custom_call.1} parent=11 // pred_fallthru
          _
        // Predicated region
        $region17: #{tpu_custom_call.1} parent=11 // pred_check
          %p300 = pneg %p178
        $region18: #{tpu_custom_call.1} parent=11 // pred_check_branch
          %302 = sbr.rel (%p300) target = $region20
        $region19: #{tpu_custom_call.1} parent=11 // pred_region
          %s304 = ssub.s32 2048, 2048
          %305 = vsyncadd [#allocation12], %s304
          %s306 = sshll.u32 [#allocation11], 4
          %s307 = int_to_ptr.vmem [resolvable:$true] %s306
          %312 = dma.hbm_to_vmem [thread:$0]  %s5, 2048, %s307, [#allocation12], 64, 64, 4
        $region20: #{tpu_custom_call.1} parent=11 // pred_fallthru
          _
        // Predicated region
        $region21: #{tpu_custom_call.1} parent=11 // pred_check
          %p313 = pneg %p199
        $region22: #{tpu_custom_call.1} parent=11 // pred_check_branch
          %315 = sbr.rel (%p313) target = $region24
        $region23: #{tpu_custom_call.1} parent=11 // pred_region
          %s317 = ssub.s32 256, 256
          %318 = vsyncadd [#allocation12], %s317
          %s319 = sshll.u32 [#allocation13], 4
          %s320 = int_to_ptr.vmem [resolvable:$true] %s319
          %325 = dma.hbm_to_vmem [thread:$0]  %s6, 256, %s320, [#allocation12], 128, 128, 8
        $region24: #{tpu_custom_call.1} parent=11 // pred_fallthru
          _
        // Predicated region
        $region25: #{tpu_custom_call.1} parent=11 // pred_check
          %p326 = pneg %p220
        $region26: #{tpu_custom_call.1} parent=11 // pred_check_branch
          %328 = sbr.rel (%p326) target = $region28
        $region27: #{tpu_custom_call.1} parent=11 // pred_region
          _
        $region28: #{tpu_custom_call.1} parent=11 // pred_fallthru
          _
      $region12: #{tpu_custom_call.1} parent=5 // pred_fallthru
        _
      %p329 = scmp.lt.s32.totalorder %s32, 2
      // Predicated region
      $region29: #{tpu_custom_call.1} parent=5 // pred_check
        %p330 = pneg %p329
      $region30: #{tpu_custom_call.1} parent=5 // pred_check_branch
        %332 = sbr.rel (%p330) target = $region32
      $region31: #{tpu_custom_call.1} parent=5 // pred_region
        // Predicated region
        $region33: #{tpu_custom_call.1} parent=31 // pred_check
          %p333 = pneg %p52
        $region34: #{tpu_custom_call.1} parent=31 // pred_check_branch
          %335 = sbr.rel (%p333) target = $region36
        $region35: #{tpu_custom_call.1} parent=31 // pred_region
          %s336 = sand.u32 %s42, 1
          %s337 = scalar_lea.sflag [#allocation3], %s336
          %s338 = sand.u32 %s42, 1
          %s339 = smul.addr %s338, 8
          %s340 = scalar_lea.vmem [#allocation2], %s339
          %s342 = ssub.s32 128, 128
          %343 = vsyncadd %s337, %s342
          %s344 = smul.addr %s32, 128
          %s345 = scalar_lea.hbm %s0, %s344
          %s347 = sshll.u32 %s340, 4
          %s348 = int_to_ptr.vmem [resolvable:$true] %s347
          %350 = dma.hbm_to_vmem [thread:$0]  %s345, 128, %s348, %s337
        $region36: #{tpu_custom_call.1} parent=31 // pred_fallthru
          _
        // Predicated region
        $region37: #{tpu_custom_call.1} parent=31 // pred_check
          %p351 = pneg %p78
        $region38: #{tpu_custom_call.1} parent=31 // pred_check_branch
          %353 = sbr.rel (%p351) target = $region40
        $region39: #{tpu_custom_call.1} parent=31 // pred_region
          %s354 = sand.u32 %s32, 1
          %s355 = scalar_lea.sflag [#allocation6], %s354
          %s356 = sand.u32 %s68, 1
          %s357 = smul.addr %s356, 8
          %s358 = scalar_lea.vmem [#allocation5], %s357
          %s360 = ssub.s32 128, 128
          %361 = vsyncadd %s355, %s360
          %s362 = smul.addr %s32, 128
          %s363 = scalar_lea.hbm %s1, %s362
          %s365 = sshll.u32 %s358, 4
          %s366 = int_to_ptr.vmem [resolvable:$true] %s365
          %368 = dma.hbm_to_vmem [thread:$0]  %s363, 128, %s366, %s355
        $region40: #{tpu_custom_call.1} parent=31 // pred_fallthru
          _
        // Predicated region
        $region41: #{tpu_custom_call.1} parent=31 // pred_check
          %p369 = pneg %p104
        $region42: #{tpu_custom_call.1} parent=31 // pred_check_branch
          %371 = sbr.rel (%p369) target = $region44
        $region43: #{tpu_custom_call.1} parent=31 // pred_region
          %s372 = sand.u32 %s32, 1
          %s373 = scalar_lea.sflag [#allocation6], %s372
          %s374 = sand.u32 %s94, 1
          %s375 = smul.addr %s374, 16
          %s376 = scalar_lea.vmem [#allocation7], %s375
          %s378 = ssub.s32 256, 256
          %379 = vsyncadd %s373, %s378
          %s380 = smul.addr %s32, 2
          %s381 = smul.addr %s380, 128
          %s382 = scalar_lea.hbm %s2, %s381
          %s383 = sshll.u32 %s376, 4
          %s384 = int_to_ptr.vmem [resolvable:$true] %s383
          %389 = dma.hbm_to_vmem [thread:$0]  %s382, 256, %s384, %s373, 128, 128, 8
        $region44: #{tpu_custom_call.1} parent=31 // pred_fallthru
          _
        // Predicated region
        $region45: #{tpu_custom_call.1} parent=31 // pred_check
          %p390 = pneg %p130
        $region46: #{tpu_custom_call.1} parent=31 // pred_check_branch
          %392 = sbr.rel (%p390) target = $region48
        $region47: #{tpu_custom_call.1} parent=31 // pred_region
          %s393 = sand.u32 %s32, 1
          %s394 = scalar_lea.sflag [#allocation9], %s393
          %s395 = sand.u32 %s120, 1
          %s396 = smul.addr %s395, 16
          %s397 = scalar_lea.vmem [#allocation8], %s396
          %s399 = ssub.s32 256, 256
          %400 = vsyncadd %s394, %s399
          %s401 = smul.addr %s32, 2
          %s402 = smul.addr %s401, 128
          %s403 = scalar_lea.hbm %s3, %s402
          %s404 = sshll.u32 %s397, 4
          %s405 = int_to_ptr.vmem [resolvable:$true] %s404
          %410 = dma.hbm_to_vmem [thread:$0]  %s403, 256, %s405, %s394, 128, 128, 8
        $region48: #{tpu_custom_call.1} parent=31 // pred_fallthru
          _
      $region32: #{tpu_custom_call.1} parent=5 // pred_fallthru
        _
      %p411 = scmp.le.s32.totalorder 1, %s32
      %p412 = scmp.lt.s32.totalorder %s32, 3
      %p413 = pnand %p411, %p412
      %p414 = pneg %p413
      // Predicated region
      $region49: #{tpu_custom_call.1} parent=5 // pred_check
        _
      $region50: #{tpu_custom_call.1} parent=5 // pred_check_branch
        %416 = sbr.rel (%p413) target = $region52
      $region51: #{tpu_custom_call.1} parent=5 // pred_region
        %s417 = ssub.s32 %s32, 1
        %s418 = sand.u32 %s45, 1
        %s419 = scalar_lea.sflag [#allocation3], %s418
        %s420 = sand.u32 %s45, 1
        %s421 = smul.addr %s420, 8
        %s422 = scalar_lea.vmem [#allocation2], %s421
        // Predicated region
        $region53: #{tpu_custom_call.1} parent=51 // pred_check
          %p423 = pneg %p58
        $region54: #{tpu_custom_call.1} parent=51 // pred_check_branch
          %425 = sbr.rel (%p423) target = $region56
        $region55: #{tpu_custom_call.1} parent=51 // pred_region
          %426 = dma.done %s419, 128
        $region56: #{tpu_custom_call.1} parent=51 // pred_fallthru
          _
        %s427 = sand.u32 %s37, 1
        %s428 = scalar_lea.sflag [#allocation6], %s427
        %s429 = sand.u32 %s71, 1
        %s430 = smul.addr %s429, 8
        %s431 = scalar_lea.vmem [#allocation5], %s430
        // Predicated region
        $region57: #{tpu_custom_call.1} parent=51 // pred_check
          %p432 = pneg %p84
        $region58: #{tpu_custom_call.1} parent=51 // pred_check_branch
          %434 = sbr.rel (%p432) target = $region60
        $region59: #{tpu_custom_call.1} parent=51 // pred_region
          %435 = dma.done %s428, 128
        $region60: #{tpu_custom_call.1} parent=51 // pred_fallthru
          _
        %s436 = sand.u32 %s37, 1
        %s437 = scalar_lea.sflag [#allocation6], %s436
        %s438 = sand.u32 %s97, 1
        %s439 = smul.addr %s438, 16
        %s440 = scalar_lea.vmem [#allocation7], %s439
        // Predicated region
        $region61: #{tpu_custom_call.1} parent=51 // pred_check
          %p441 = pneg %p110
        $region62: #{tpu_custom_call.1} parent=51 // pred_check_branch
          %443 = sbr.rel (%p441) target = $region64
        $region63: #{tpu_custom_call.1} parent=51 // pred_region
          %444 = dma.done %s437, 256
        $region64: #{tpu_custom_call.1} parent=51 // pred_fallthru
          _
        %s445 = sand.u32 %s37, 1
        %s446 = scalar_lea.sflag [#allocation9], %s445
        %s447 = sand.u32 %s123, 1
        %s448 = smul.addr %s447, 16
        %s449 = scalar_lea.vmem [#allocation8], %s448
        // Predicated region
        $region65: #{tpu_custom_call.1} parent=51 // pred_check
          %p450 = pneg %p136
        $region66: #{tpu_custom_call.1} parent=51 // pred_check_branch
          %452 = sbr.rel (%p450) target = $region68
        $region67: #{tpu_custom_call.1} parent=51 // pred_region
          %453 = dma.done %s446, 256
        $region68: #{tpu_custom_call.1} parent=51 // pred_fallthru
          _
        // Predicated region
        $region69: #{tpu_custom_call.1} parent=51 // pred_check
          %p454 = pneg %p157
        $region70: #{tpu_custom_call.1} parent=51 // pred_check_branch
          %456 = sbr.rel (%p454) target = $region72
        $region71: #{tpu_custom_call.1} parent=51 // pred_region
          %457 = dma.done [#allocation9], 10240
        $region72: #{tpu_custom_call.1} parent=51 // pred_fallthru
          _
        // Predicated region
        $region73: #{tpu_custom_call.1} parent=51 // pred_check
          %p458 = pneg %p178
        $region74: #{tpu_custom_call.1} parent=51 // pred_check_branch
          %460 = sbr.rel (%p458) target = $region76
        $region75: #{tpu_custom_call.1} parent=51 // pred_region
          %461 = dma.done [#allocation12], 2048
        $region76: #{tpu_custom_call.1} parent=51 // pred_fallthru
          _
        // Predicated region
        $region77: #{tpu_custom_call.1} parent=51 // pred_check
          %p462 = pneg %p199
        $region78: #{tpu_custom_call.1} parent=51 // pred_check_branch
          %464 = sbr.rel (%p462) target = $region80
        $region79: #{tpu_custom_call.1} parent=51 // pred_region
          %465 = dma.done [#allocation12], 256
        $region80: #{tpu_custom_call.1} parent=51 // pred_fallthru
          _
        %s466 = sand.u32 %s45, 1
        %s467 = scalar_lea.sflag [#allocation3], %s466
        %s468 = sand.u32 %s45, 1
        %s469 = smul.addr %s468, 8
        %s470 = scalar_lea.vmem [#allocation2], %s469
        %p471 = pneg %p58
        %p472 = pneg %p55
        %s473 = sand.u32 %s37, 1
        %s474 = scalar_lea.sflag [#allocation6], %s473
        %s475 = sand.u32 %s71, 1
        %s476 = smul.addr %s475, 8
        %s477 = scalar_lea.vmem [#allocation5], %s476
        %p478 = pneg %p84
        %p479 = pneg %p81
        %s480 = sand.u32 %s37, 1
        %s481 = scalar_lea.sflag [#allocation6], %s480
        %s482 = sand.u32 %s97, 1
        %s483 = smul.addr %s482, 16
        %s484 = scalar_lea.vmem [#allocation7], %s483
        %p485 = pneg %p110
        %p486 = pneg %p107
        %s487 = sand.u32 %s37, 1
        %s488 = scalar_lea.sflag [#allocation9], %s487
        %s489 = sand.u32 %s123, 1
        %s490 = smul.addr %s489, 16
        %s491 = scalar_lea.vmem [#allocation8], %s490
        %p492 = pneg %p136
        %p493 = pneg %p133
        %p494 = pneg %p157
        %p495 = pneg %p154
        %p496 = pneg %p178
        %p497 = pneg %p175
        %p498 = pneg %p199
        %p499 = pneg %p196
        %p500 = pneg %p220
        %p501 = pneg %p217
        %p502 = pneg %p246
        %p503 = pneg %p243
        %s504 = sand.u32 %s233, 1
        %s505 = scalar_lea.sflag [#allocation4], %s504
        %s506 = sand.u32 %s233, 1
        %s507 = smul.addr %s506, 8
        %s508 = scalar_lea.vmem [#allocation14], %s507
        %p509 = pneg %p272
        %p510 = pneg %p269
        %s511 = sand.u32 %s259, 1
        %s512 = scalar_lea.sflag [#allocation16], %s511
        %s513 = sand.u32 %s259, 1
        %s514 = smul.addr %s513, 8
        %s515 = scalar_lea.vmem [#allocation15], %s514
        %v517 = vld [vmem:[#allocation13] sm:$0xff]
        %v518 = vld [vmem:[#allocation13 + $0x8] sm:$0xff]
        %v519 = vld [vmem:[%s422] sm:$0xff]
        %v520 = vld [vmem:[%s431] sm:$0xff]
        %v521 = vld [vmem:[%s440] sm:$0xff]
        %v522 = vld [vmem:[%s440 + $0x8] sm:$0xff]
        %v523 = vld [vmem:[%s449] sm:$0xff]
        %v524 = vld [vmem:[%s449 + $0x8] sm:$0xff]
        %v525 = vadd.f32 %v519, %v520
        %v526 = vpack.c.bf16 %v525, %v525
        %v527 = vld [vmem:[#allocation10] sm:$0xff]
        %v528 = vld [vmem:[#allocation10 + $0x28] sm:$0xff]
        %v529 = vld [vmem:[#allocation10 + $0x50] sm:$0xff]
        %v530 = vld [vmem:[#allocation10 + $0x78] sm:$0xff]
        %v531 = vld [vmem:[#allocation10 + $0xa0] sm:$0xff]
        %v532 = vld [vmem:[#allocation10 + $0xc8] sm:$0xff]
        %v533 = vld [vmem:[#allocation10 + $0xf0] sm:$0xff]
        %v534 = vld [vmem:[#allocation10 + $0x118] sm:$0xff]
        %v535 = vld [vmem:[#allocation10 + $0x140] sm:$0xff]
        %v536 = vld [vmem:[#allocation10 + $0x168] sm:$0xff]
        %v537 = vld [vmem:[#allocation10 + $0x190] sm:$0xff]
        %v538 = vld [vmem:[#allocation10 + $0x1b8] sm:$0xff]
        %v539 = vld [vmem:[#allocation10 + $0x1e0] sm:$0xff]
        %v540 = vld [vmem:[#allocation10 + $0x208] sm:$0xff]
        %v541 = vld [vmem:[#allocation10 + $0x230] sm:$0xff]
        %v542 = vld [vmem:[#allocation10 + $0x258] sm:$0xff]
        %v559 = vunpack.c.l.b16 %v527
        %v560 = vunpack.c.h.b16 %v527
        %v561 = vunpack.c.l.b16 %v528
        %v562 = vunpack.c.h.b16 %v528
        %v563 = vunpack.c.l.b16 %v529
        %v564 = vunpack.c.h.b16 %v529
        %v565 = vunpack.c.l.b16 %v530
        %v566 = vunpack.c.h.b16 %v530
        %v567 = vunpack.c.l.b16 %v531
        %v568 = vunpack.c.h.b16 %v531
        %v569 = vunpack.c.l.b16 %v532
        %v570 = vunpack.c.h.b16 %v532
        %v571 = vunpack.c.l.b16 %v533
        %v572 = vunpack.c.h.b16 %v533
        %v573 = vunpack.c.l.b16 %v534
        %v574 = vunpack.c.h.b16 %v534
        %v575 = vunpack.c.l.b16 %v535
        %v576 = vunpack.c.h.b16 %v535
        %v577 = vunpack.c.l.b16 %v536
        %v578 = vunpack.c.h.b16 %v536
        %v579 = vunpack.c.l.b16 %v537
        %v580 = vunpack.c.h.b16 %v537
        %v581 = vunpack.c.l.b16 %v538
        %v582 = vunpack.c.h.b16 %v538
        %v583 = vunpack.c.l.b16 %v539
        %v584 = vunpack.c.h.b16 %v539
        %v585 = vunpack.c.l.b16 %v540
        %v586 = vunpack.c.h.b16 %v540
        %v587 = vunpack.c.l.b16 %v541
        %v588 = vunpack.c.h.b16 %v541
        %v589 = vunpack.c.l.b16 %v542
        %v590 = vunpack.c.h.b16 %v542
        %v591 = vpack.c.b16 %v561, %v559
        %v592 = vpack.c.b16 %v562, %v560
        %v593 = vpack.c.b16 %v565, %v563
        %v594 = vpack.c.b16 %v566, %v564
        %v595 = vpack.c.b16 %v569, %v567
        %v596 = vpack.c.b16 %v570, %v568
        %v597 = vpack.c.b16 %v573, %v571
        %v598 = vpack.c.b16 %v574, %v572
        %v599 = vpack.c.b16 %v577, %v575
        %v600 = vpack.c.b16 %v578, %v576
        %v601 = vpack.c.b16 %v581, %v579
        %v602 = vpack.c.b16 %v582, %v580
        %v603 = vpack.c.b16 %v585, %v583
        %v604 = vpack.c.b16 %v586, %v584
        %v605 = vpack.c.b16 %v589, %v587
        %v606 = vpack.c.b16 %v590, %v588
        %623 = vmatprep.subr.bf16.mxu0 %v606
        %624 = vmatpush1.bf16.msra.mxu0 %v605
        %625 = vmatprep.subr.bf16.mxu0 %v604
        %626 = vmatpush1.bf16.msra.mxu0 %v603
        %627 = vmatprep.subr.bf16.mxu0 %v602
        %628 = vmatpush1.bf16.msra.mxu0 %v601
        %629 = vmatprep.subr.bf16.mxu0 %v600
        %630 = vmatpush1.bf16.msra.mxu0 %v599
        %631 = vmatprep.subr.bf16.mxu0 %v598
        %632 = vmatpush1.bf16.msra.mxu0 %v597
        %633 = vmatprep.subr.bf16.mxu0 %v596
        %634 = vmatpush1.bf16.msra.mxu0 %v595
        %635 = vmatprep.subr.bf16.mxu0 %v594
        %636 = vmatpush1.bf16.msra.mxu0 %v593
        %637 = vmatprep.subr.bf16.mxu0 %v592
        %638 = vmatpush1.bf16.msra.mxu0 %v591
        %639 = vmatprep.subr.bf16.mxu0 0
        %640 = vmatpush2.bf16.msra.mxu0 0
        %641 = vmatprep.subr.bf16.mxu0 0
        %642 = vmatpush2.bf16.msra.mxu0 0
        %643 = vmatprep.subr.bf16.mxu0 0
        %644 = vmatpush2.bf16.msra.mxu0 0
        %645 = vmatprep.subr.bf16.mxu0 0
        %646 = vmatpush2.bf16.msra.mxu0 0
        %647 = vmatprep.subr.bf16.mxu0 0
        %648 = vmatpush2.bf16.msra.mxu0 0
        %649 = vmatprep.subr.bf16.mxu0 0
        %650 = vmatpush2.bf16.msra.mxu0 0
        %651 = vmatprep.subr.bf16.mxu0 0
        %652 = vmatpush2.bf16.msra.mxu0 0
        %653 = vmatprep.subr.bf16.mxu0 0
        %654 = vmatpush2.bf16.msra.mxu0 0
        %655 = vmatprep.mubr.bf16.mxu0 0
        %656 = vmatmul.mubr.bf16.gmra.mxu0 %v526
        %v657 = vpop.f32.mrf.mxu0
        %v658 = vadd.f32 0.0, %v657
        %v659 = vpop.f32.mrf.mxu0
        %v660 = vadd.f32 0.0, %v659
        %v661 = vpop.f32.mrf.mxu0
        %v662 = vpop.f32.mrf.mxu0
        %663 = vdwg.mxu0
        %v664 = vlaneseq
        %v665 = vshrl.u32 %v664, 7
        %v666 = vsub.s32 0, %v665
        %v667 = vrot.slane %v517, %v666
        %v668 = vadd.f32 %v658, %v667
        %v669 = vlaneseq
        %v670 = vshrl.u32 %v669, 7
        %v671 = vsub.s32 1, %v670
        %v672 = vrot.slane %v517, %v671
        %v673 = vadd.f32 %v660, %v672
        %v674 = vpack.c.bf16 %v519, %v519
        %v675 = vld [vmem:[#allocation10 + $0x8] sm:$0xf]
        %v676 = vld [vmem:[#allocation10 + $0x30] sm:$0xf]
        %v677 = vld [vmem:[#allocation10 + $0x58] sm:$0xf]
        %v678 = vld [vmem:[#allocation10 + $0x80] sm:$0xf]
        %v679 = vld [vmem:[#allocation10 + $0xa8] sm:$0xf]
        %v680 = vld [vmem:[#allocation10 + $0xd0] sm:$0xf]
        %v681 = vld [vmem:[#allocation10 + $0xf8] sm:$0xf]
        %v682 = vld [vmem:[#allocation10 + $0x120] sm:$0xf]
        %v683 = vld [vmem:[#allocation10 + $0x148] sm:$0xf]
        %v684 = vld [vmem:[#allocation10 + $0x170] sm:$0xf]
        %v685 = vld [vmem:[#allocation10 + $0x198] sm:$0xf]
        %v686 = vld [vmem:[#allocation10 + $0x1c0] sm:$0xf]
        %v687 = vld [vmem:[#allocation10 + $0x1e8] sm:$0xf]
        %v688 = vld [vmem:[#allocation10 + $0x210] sm:$0xf]
        %v689 = vld [vmem:[#allocation10 + $0x238] sm:$0xf]
        %v690 = vld [vmem:[#allocation10 + $0x260] sm:$0xf]
        %v691 = vlaneseq
        %v692 = vshrl.u32 %v691, 7
        %v693 = vsub.s32 2, %v692
        %v694 = vrot.slane %v517, %v693
        %v711 = vunpack.c.l.b16 %v675
        %v712 = vunpack.c.l.b16 %v676
        %v713 = vunpack.c.l.b16 %v677
        %v714 = vunpack.c.l.b16 %v678
        %v715 = vunpack.c.l.b16 %v679
        %v716 = vunpack.c.l.b16 %v680
        %v717 = vunpack.c.l.b16 %v681
        %v718 = vunpack.c.l.b16 %v682
        %v719 = vunpack.c.l.b16 %v683
        %v720 = vunpack.c.l.b16 %v684
        %v721 = vunpack.c.l.b16 %v685
        %v722 = vunpack.c.l.b16 %v686
        %v723 = vunpack.c.l.b16 %v687
        %v724 = vunpack.c.l.b16 %v688
        %v725 = vunpack.c.l.b16 %v689
        %v726 = vunpack.c.l.b16 %v690
        %v727 = vpack.c.b16 %v712, %v711
        %v728 = vpack.c.b16 %v714, %v713
        %v729 = vpack.c.b16 %v716, %v715
        %v730 = vpack.c.b16 %v718, %v717
        %v731 = vpack.c.b16 %v720, %v719
        %v732 = vpack.c.b16 %v722, %v721
        %v733 = vpack.c.b16 %v724, %v723
        %v734 = vpack.c.b16 %v726, %v725
        %743 = vmatprep.subr.bf16.mxu0 0
        %744 = vmatpush1.bf16.msra.mxu0 %v734
        %745 = vmatprep.subr.bf16.mxu0 0
        %746 = vmatpush1.bf16.msra.mxu0 %v733
        %747 = vmatprep.subr.bf16.mxu0 0
        %748 = vmatpush1.bf16.msra.mxu0 %v732
        %749 = vmatprep.subr.bf16.mxu0 0
        %750 = vmatpush1.bf16.msra.mxu0 %v731
        %751 = vmatprep.subr.bf16.mxu0 0
        %752 = vmatpush1.bf16.msra.mxu0 %v730
        %753 = vmatprep.subr.bf16.mxu0 0
        %754 = vmatpush1.bf16.msra.mxu0 %v729
        %755 = vmatprep.subr.bf16.mxu0 0
        %756 = vmatpush1.bf16.msra.mxu0 %v728
        %757 = vmatprep.subr.bf16.mxu0 0
        %758 = vmatpush1.bf16.msra.mxu0 %v727
        %759 = vmatprep.subr.bf16.mxu0 0
        %760 = vmatpush2.bf16.msra.mxu0 0
        %761 = vmatprep.subr.bf16.mxu0 0
        %762 = vmatpush2.bf16.msra.mxu0 0
        %763 = vmatprep.subr.bf16.mxu0 0
        %764 = vmatpush2.bf16.msra.mxu0 0
        %765 = vmatprep.subr.bf16.mxu0 0
        %766 = vmatpush2.bf16.msra.mxu0 0
        %767 = vmatprep.subr.bf16.mxu0 0
        %768 = vmatpush2.bf16.msra.mxu0 0
        %769 = vmatprep.subr.bf16.mxu0 0
        %770 = vmatpush2.bf16.msra.mxu0 0
        %771 = vmatprep.subr.bf16.mxu0 0
        %772 = vmatpush2.bf16.msra.mxu0 0
        %773 = vmatprep.subr.bf16.mxu0 0
        %774 = vmatpush2.bf16.msra.mxu0 0
        %775 = vmatprep.mubr.bf16.mxu0 0
        %776 = vmatmul.mubr.bf16.gmra.mxu0 %v674
        %v777 = vpop.f32.mrf.mxu0
        %v778 = vadd.f32 %v694, %v777
        %v779 = vpop.f32.mrf.mxu0
        %v780 = vpop.f32.mrf.mxu0
        %v781 = vpop.f32.mrf.mxu0
        %782 = vdwg.mxu0
        %v783 = vpack.c.bf16 %v668, %v668
        %v784 = vpack.c.bf16 %v673, %v673
        %v785 = vpack.c.bf16 %v778, %v778
        %vm786 = vcmask 261120
        %v788 = vsel %vm786, %v783, 0
        %v791 = vsel %vm786, %v784, 0
        %793 = vmatprep.subr.bf16.mxu0 0
        %794 = vmatpush1.bf16.xpose.msra.mxu0 0
        %795 = vmatprep.subr.bf16.mxu0 0
        %796 = vmatpush1.bf16.xpose.msra.mxu0 0
        %797 = vmatprep.subr.bf16.mxu0 0
        %798 = vmatpush1.bf16.xpose.msra.mxu0 0
        %799 = vmatprep.subr.bf16.mxu0 0
        %800 = vmatpush1.bf16.xpose.msra.mxu0 0
        %801 = vmatprep.subr.bf16.mxu0 0
        %802 = vmatpush1.bf16.xpose.msra.mxu0 0
        %803 = vmatprep.subr.bf16.mxu0 0
        %804 = vmatpush1.bf16.xpose.msra.mxu0 0
        %805 = vmatprep.subr.bf16.mxu0 0
        %806 = vmatpush1.bf16.xpose.msra.mxu0 0
        %807 = vmatprep.subr.bf16.mxu0 0
        %808 = vmatpush1.bf16.xpose.msra.mxu0 %v791
        %809 = vmatprep.subr.bf16.mxu0 0
        %810 = vmatpush2.bf16.xpose.msra.mxu0 0
        %811 = vmatprep.subr.bf16.mxu0 0
        %812 = vmatpush2.bf16.xpose.msra.mxu0 0
        %813 = vmatprep.subr.bf16.mxu0 0
        %814 = vmatpush2.bf16.xpose.msra.mxu0 0
        %815 = vmatprep.subr.bf16.mxu0 0
        %816 = vmatpush2.bf16.xpose.msra.mxu0 0
        %817 = vmatprep.subr.bf16.mxu0 0
        %818 = vmatpush2.bf16.xpose.msra.mxu0 0
        %819 = vmatprep.subr.bf16.mxu0 0
        %820 = vmatpush2.bf16.xpose.msra.mxu0 0
        %821 = vmatprep.subr.bf16.mxu0 0
        %822 = vmatpush2.bf16.xpose.msra.mxu0 0
        %823 = vmatprep.subr.bf16.mxu0 0
        %824 = vmatpush2.bf16.xpose.msra.mxu0 0
        %825 = vmatprep.mubr.bf16.mxu0 0
        %826 = vmatmul.mubr.bf16.gmra.mxu0 %v788
        %v827 = vpop.f32.mrf.mxu0
        %v828 = vadd.f32 0.0, %v827
        %v829 = vpop.f32.mrf.mxu0
        %v830 = vpop.f32.mrf.mxu0
        %v831 = vpop.f32.mrf.mxu0
        %832 = vdwg.mxu0
        %v833 = vmul.f32 %v828, 0.17677669
        %vm834 = vcmask 64512
        %v835 = vsel %vm834, %v833, -inf
        %836 = vmax.xlane.f32.xlu0 %v835
        %v837 = vpop.xlane.xlu0 %836
        %v838 = vsub.f32 %v833, %v837
        %v839 = vmul.f32 %v838, 1.442695
        %v840 = vpow.pop %v839
        %v841 = vsel %vm834, %v840, 0.0
        %842 = vadd.xlane.f32.xlu0 %v841
        %v843 = vpop.xlane.xlu0 %842
        %v844 = vrcp.pop %v843
        %v845 = vmul.f32 %v840, %v844
        %v846 = vpack.c.bf16 %v845, %v845
        %v848 = vsel %vm834, %v846, 0
        %vm850 = vcmask 1043456
        %v852 = vsel %vm850, %v785, 0
        %854 = vmatprep.subr.bf16.mxu0 0
        %855 = vmatpush1.bf16.msra.mxu0 0
        %856 = vmatprep.subr.bf16.mxu0 0
        %857 = vmatpush1.bf16.msra.mxu0 0
        %858 = vmatprep.subr.bf16.mxu0 0
        %859 = vmatpush1.bf16.msra.mxu0 0
        %860 = vmatprep.subr.bf16.mxu0 0
        %861 = vmatpush1.bf16.msra.mxu0 0
        %862 = vmatprep.subr.bf16.mxu0 0
        %863 = vmatpush1.bf16.msra.mxu0 0
        %864 = vmatprep.subr.bf16.mxu0 0
        %865 = vmatpush1.bf16.msra.mxu0 0
        %866 = vmatprep.subr.bf16.mxu0 0
        %867 = vmatpush1.bf16.msra.mxu0 0
        %868 = vmatprep.subr.bf16.mxu0 0
        %869 = vmatpush1.bf16.msra.mxu0 %v852
        %870 = vmatprep.subr.bf16.mxu0 0
        %871 = vmatpush2.bf16.msra.mxu0 0
        %872 = vmatprep.subr.bf16.mxu0 0
        %873 = vmatpush2.bf16.msra.mxu0 0
        %874 = vmatprep.subr.bf16.mxu0 0
        %875 = vmatpush2.bf16.msra.mxu0 0
        %876 = vmatprep.subr.bf16.mxu0 0
        %877 = vmatpush2.bf16.msra.mxu0 0
        %878 = vmatprep.subr.bf16.mxu0 0
        %879 = vmatpush2.bf16.msra.mxu0 0
        %880 = vmatprep.subr.bf16.mxu0 0
        %881 = vmatpush2.bf16.msra.mxu0 0
        %882 = vmatprep.subr.bf16.mxu0 0
        %883 = vmatpush2.bf16.msra.mxu0 0
        %884 = vmatprep.subr.bf16.mxu0 0
        %885 = vmatpush2.bf16.msra.mxu0 0
        %886 = vmatprep.mubr.bf16.mxu0 0
        %887 = vmatmul.mubr.bf16.gmra.mxu0 %v848
        %v888 = vpop.f32.mrf.mxu0
        %v889 = vadd.f32 0.0, %v888
        %v890 = vpop.f32.mrf.mxu0
        %v891 = vpop.f32.mrf.mxu0
        %v892 = vpop.f32.mrf.mxu0
        %893 = vdwg.mxu0
        %895 = vrot.lane.b32.xlu0 %v783, 96
        %v896 = vpop.permute.xlu0 %895
        %898 = vrot.lane.b32.xlu0 %v784, 96
        %v899 = vpop.permute.xlu0 %898
        %v901 = vsel %vm786, %v896, 0
        %v904 = vsel %vm786, %v899, 0
        %906 = vmatprep.subr.bf16.mxu0 0
        %907 = vmatpush1.bf16.xpose.msra.mxu0 0
        %908 = vmatprep.subr.bf16.mxu0 0
        %909 = vmatpush1.bf16.xpose.msra.mxu0 0
        %910 = vmatprep.subr.bf16.mxu0 0
        %911 = vmatpush1.bf16.xpose.msra.mxu0 0
        %912 = vmatprep.subr.bf16.mxu0 0
        %913 = vmatpush1.bf16.xpose.msra.mxu0 0
        %914 = vmatprep.subr.bf16.mxu0 0
        %915 = vmatpush1.bf16.xpose.msra.mxu0 0
        %916 = vmatprep.subr.bf16.mxu0 0
        %917 = vmatpush1.bf16.xpose.msra.mxu0 0
        %918 = vmatprep.subr.bf16.mxu0 0
        %919 = vmatpush1.bf16.xpose.msra.mxu0 0
        %920 = vmatprep.subr.bf16.mxu0 0
        %921 = vmatpush1.bf16.xpose.msra.mxu0 %v904
        %922 = vmatprep.subr.bf16.mxu0 0
        %923 = vmatpush2.bf16.xpose.msra.mxu0 0
        %924 = vmatprep.subr.bf16.mxu0 0
        %925 = vmatpush2.bf16.xpose.msra.mxu0 0
        %926 = vmatprep.subr.bf16.mxu0 0
        %927 = vmatpush2.bf16.xpose.msra.mxu0 0
        %928 = vmatprep.subr.bf16.mxu0 0
        %929 = vmatpush2.bf16.xpose.msra.mxu0 0
        %930 = vmatprep.subr.bf16.mxu0 0
        %931 = vmatpush2.bf16.xpose.msra.mxu0 0
        %932 = vmatprep.subr.bf16.mxu0 0
        %933 = vmatpush2.bf16.xpose.msra.mxu0 0
        %934 = vmatprep.subr.bf16.mxu0 0
        %935 = vmatpush2.bf16.xpose.msra.mxu0 0
        %936 = vmatprep.subr.bf16.mxu0 0
        %937 = vmatpush2.bf16.xpose.msra.mxu0 0
        %938 = vmatprep.mubr.bf16.mxu0 0
        %939 = vmatmul.mubr.bf16.gmra.mxu0 %v901
        %v940 = vpop.f32.mrf.mxu0
        %v941 = vadd.f32 0.0, %v940
        %v942 = vpop.f32.mrf.mxu0
        %v943 = vpop.f32.mrf.mxu0
        %v944 = vpop.f32.mrf.mxu0
        %945 = vdwg.mxu0
        %v946 = vmul.f32 %v941, 0.17677669
        %v947 = vsel %vm834, %v946, -inf
        %948 = vmax.xlane.f32.xlu0 %v947
        %v949 = vpop.xlane.xlu0 %948
        %v950 = vsub.f32 %v946, %v949
        %v951 = vmul.f32 %v950, 1.442695
        %v952 = vpow.pop %v951
        %v953 = vsel %vm834, %v952, 0.0
        %954 = vadd.xlane.f32.xlu0 %v953
        %v955 = vpop.xlane.xlu0 %954
        %v956 = vrcp.pop %v955
        %v957 = vmul.f32 %v952, %v956
        %v958 = vpack.c.bf16 %v957, %v957
        %960 = vrot.lane.b32.xlu0 %v785, 96
        %v961 = vpop.permute.xlu0 %960
        %v963 = vsel %vm834, %v958, 0
        %v966 = vsel %vm850, %v961, 0
        %968 = vmatprep.subr.bf16.mxu0 0
        %969 = vmatpush1.bf16.msra.mxu0 0
        %970 = vmatprep.subr.bf16.mxu0 0
        %971 = vmatpush1.bf16.msra.mxu0 0
        %972 = vmatprep.subr.bf16.mxu0 0
        %973 = vmatpush1.bf16.msra.mxu0 0
        %974 = vmatprep.subr.bf16.mxu0 0
        %975 = vmatpush1.bf16.msra.mxu0 0
        %976 = vmatprep.subr.bf16.mxu0 0
        %977 = vmatpush1.bf16.msra.mxu0 0
        %978 = vmatprep.subr.bf16.mxu0 0
        %979 = vmatpush1.bf16.msra.mxu0 0
        %980 = vmatprep.subr.bf16.mxu0 0
        %981 = vmatpush1.bf16.msra.mxu0 0
        %982 = vmatprep.subr.bf16.mxu0 0
        %983 = vmatpush1.bf16.msra.mxu0 %v966
        %984 = vmatprep.subr.bf16.mxu0 0
        %985 = vmatpush2.bf16.msra.mxu0 0
        %986 = vmatprep.subr.bf16.mxu0 0
        %987 = vmatpush2.bf16.msra.mxu0 0
        %988 = vmatprep.subr.bf16.mxu0 0
        %989 = vmatpush2.bf16.msra.mxu0 0
        %990 = vmatprep.subr.bf16.mxu0 0
        %991 = vmatpush2.bf16.msra.mxu0 0
        %992 = vmatprep.subr.bf16.mxu0 0
        %993 = vmatpush2.bf16.msra.mxu0 0
        %994 = vmatprep.subr.bf16.mxu0 0
        %995 = vmatpush2.bf16.msra.mxu0 0
        %996 = vmatprep.subr.bf16.mxu0 0
        %997 = vmatpush2.bf16.msra.mxu0 0
        %998 = vmatprep.subr.bf16.mxu0 0
        %999 = vmatpush2.bf16.msra.mxu0 0
        %1000 = vmatprep.mubr.bf16.mxu0 0
        %1001 = vmatmul.mubr.bf16.gmra.mxu0 %v963
        %v1002 = vpop.f32.mrf.mxu0
        %v1003 = vadd.f32 0.0, %v1002
        %v1004 = vpop.f32.mrf.mxu0
        %v1005 = vpop.f32.mrf.mxu0
        %v1006 = vpop.f32.mrf.mxu0
        %1007 = vdwg.mxu0
        %1008 = vrot.lane.b32.xlu0 %v783, 64
        %v1009 = vpop.permute.xlu0 %1008
        %1010 = vrot.lane.b32.xlu0 %v784, 64
        %v1011 = vpop.permute.xlu0 %1010
        %v1013 = vsel %vm786, %v1009, 0
        %v1016 = vsel %vm786, %v1011, 0
        %1018 = vmatprep.subr.bf16.mxu0 0
        %1019 = vmatpush1.bf16.xpose.msra.mxu0 0
        %1020 = vmatprep.subr.bf16.mxu0 0
        %1021 = vmatpush1.bf16.xpose.msra.mxu0 0
        %1022 = vmatprep.subr.bf16.mxu0 0
        %1023 = vmatpush1.bf16.xpose.msra.mxu0 0
        %1024 = vmatprep.subr.bf16.mxu0 0
        %1025 = vmatpush1.bf16.xpose.msra.mxu0 0
        %1026 = vmatprep.subr.bf16.mxu0 0
        %1027 = vmatpush1.bf16.xpose.msra.mxu0 0
        %1028 = vmatprep.subr.bf16.mxu0 0
        %1029 = vmatpush1.bf16.xpose.msra.mxu0 0
        %1030 = vmatprep.subr.bf16.mxu0 0
        %1031 = vmatpush1.bf16.xpose.msra.mxu0 0
        %1032 = vmatprep.subr.bf16.mxu0 0
        %1033 = vmatpush1.bf16.xpose.msra.mxu0 %v1016
        %1034 = vmatprep.subr.bf16.mxu0 0
        %1035 = vmatpush2.bf16.xpose.msra.mxu0 0
        %1036 = vmatprep.subr.bf16.mxu0 0
        %1037 = vmatpush2.bf16.xpose.msra.mxu0 0
        %1038 = vmatprep.subr.bf16.mxu0 0
        %1039 = vmatpush2.bf16.xpose.msra.mxu0 0
        %1040 = vmatprep.subr.bf16.mxu0 0
        %1041 = vmatpush2.bf16.xpose.msra.mxu0 0
        %1042 = vmatprep.subr.bf16.mxu0 0
        %1043 = vmatpush2.bf16.xpose.msra.mxu0 0
        %1044 = vmatprep.subr.bf16.mxu0 0
        %1045 = vmatpush2.bf16.xpose.msra.mxu0 0
        %1046 = vmatprep.subr.bf16.mxu0 0
        %1047 = vmatpush2.bf16.xpose.msra.mxu0 0
        %1048 = vmatprep.subr.bf16.mxu0 0
        %1049 = vmatpush2.bf16.xpose.msra.mxu0 0
        %1050 = vmatprep.mubr.bf16.mxu0 0
        %1051 = vmatmul.mubr.bf16.gmra.mxu0 %v1013
        %v1052 = vpop.f32.mrf.mxu0
        %v1053 = vadd.f32 0.0, %v1052
        %v1054 = vpop.f32.mrf.mxu0
        %v1055 = vpop.f32.mrf.mxu0
        %v1056 = vpop.f32.mrf.mxu0
        %1057 = vdwg.mxu0
        %v1058 = vmul.f32 %v1053, 0.17677669
        %v1059 = vsel %vm834, %v1058, -inf
        %1060 = vmax.xlane.f32.xlu0 %v1059
        %v1061 = vpop.xlane.xlu0 %1060
        %v1062 = vsub.f32 %v1058, %v1061
        %v1063 = vmul.f32 %v1062, 1.442695
        %v1064 = vpow.pop %v1063
        %v1065 = vsel %vm834, %v1064, 0.0
        %1066 = vadd.xlane.f32.xlu0 %v1065
        %v1067 = vpop.xlane.xlu0 %1066
        %v1068 = vrcp.pop %v1067
        %v1069 = vmul.f32 %v1064, %v1068
        %v1070 = vpack.c.bf16 %v1069, %v1069
        %1071 = vrot.lane.b32.xlu0 %v785, 64
        %v1072 = vpop.permute.xlu0 %1071
        %v1074 = vsel %vm834, %v1070, 0
        %v1077 = vsel %vm850, %v1072, 0
        %1079 = vmatprep.subr.bf16.mxu0 0
        %1080 = vmatpush1.bf16.msra.mxu0 0
        %1081 = vmatprep.subr.bf16.mxu0 0
        %1082 = vmatpush1.bf16.msra.mxu0 0
        %1083 = vmatprep.subr.bf16.mxu0 0
        %1084 = vmatpush1.bf16.msra.mxu0 0
        %1085 = vmatprep.subr.bf16.mxu0 0
        %1086 = vmatpush1.bf16.msra.mxu0 0
        %1087 = vmatprep.subr.bf16.mxu0 0
        %1088 = vmatpush1.bf16.msra.mxu0 0
        %1089 = vmatprep.subr.bf16.mxu0 0
        %1090 = vmatpush1.bf16.msra.mxu0 0
        %1091 = vmatprep.subr.bf16.mxu0 0
        %1092 = vmatpush1.bf16.msra.mxu0 0
        %1093 = vmatprep.subr.bf16.mxu0 0
        %1094 = vmatpush1.bf16.msra.mxu0 %v1077
        %1095 = vmatprep.subr.bf16.mxu0 0
        %1096 = vmatpush2.bf16.msra.mxu0 0
        %1097 = vmatprep.subr.bf16.mxu0 0
        %1098 = vmatpush2.bf16.msra.mxu0 0
        %1099 = vmatprep.subr.bf16.mxu0 0
        %1100 = vmatpush2.bf16.msra.mxu0 0
        %1101 = vmatprep.subr.bf16.mxu0 0
        %1102 = vmatpush2.bf16.msra.mxu0 0
        %1103 = vmatprep.subr.bf16.mxu0 0
        %1104 = vmatpush2.bf16.msra.mxu0 0
        %1105 = vmatprep.subr.bf16.mxu0 0
        %1106 = vmatpush2.bf16.msra.mxu0 0
        %1107 = vmatprep.subr.bf16.mxu0 0
        %1108 = vmatpush2.bf16.msra.mxu0 0
        %1109 = vmatprep.subr.bf16.mxu0 0
        %1110 = vmatpush2.bf16.msra.mxu0 0
        %1111 = vmatprep.mubr.bf16.mxu0 0
        %1112 = vmatmul.mubr.bf16.gmra.mxu0 %v1074
        %v1113 = vpop.f32.mrf.mxu0
        %v1114 = vadd.f32 0.0, %v1113
        %v1115 = vpop.f32.mrf.mxu0
        %v1116 = vpop.f32.mrf.mxu0
        %v1117 = vpop.f32.mrf.mxu0
        %1118 = vdwg.mxu0
        %1119 = vrot.lane.b32.xlu0 %v783, 32
        %v1120 = vpop.permute.xlu0 %1119
        %1121 = vrot.lane.b32.xlu0 %v784, 32
        %v1122 = vpop.permute.xlu0 %1121
        %v1124 = vsel %vm786, %v1120, 0
        %v1127 = vsel %vm786, %v1122, 0
        %1129 = vmatprep.subr.bf16.mxu0 0
        %1130 = vmatpush1.bf16.xpose.msra.mxu0 0
        %1131 = vmatprep.subr.bf16.mxu0 0
        %1132 = vmatpush1.bf16.xpose.msra.mxu0 0
        %1133 = vmatprep.subr.bf16.mxu0 0
        %1134 = vmatpush1.bf16.xpose.msra.mxu0 0
        %1135 = vmatprep.subr.bf16.mxu0 0
        %1136 = vmatpush1.bf16.xpose.msra.mxu0 0
        %1137 = vmatprep.subr.bf16.mxu0 0
        %1138 = vmatpush1.bf16.xpose.msra.mxu0 0
        %1139 = vmatprep.subr.bf16.mxu0 0
        %1140 = vmatpush1.bf16.xpose.msra.mxu0 0
        %1141 = vmatprep.subr.bf16.mxu0 0
        %1142 = vmatpush1.bf16.xpose.msra.mxu0 0
        %1143 = vmatprep.subr.bf16.mxu0 0
        %1144 = vmatpush1.bf16.xpose.msra.mxu0 %v1127
        %1145 = vmatprep.subr.bf16.mxu0 0
        %1146 = vmatpush2.bf16.xpose.msra.mxu0 0
        %1147 = vmatprep.subr.bf16.mxu0 0
        %1148 = vmatpush2.bf16.xpose.msra.mxu0 0
        %1149 = vmatprep.subr.bf16.mxu0 0
        %1150 = vmatpush2.bf16.xpose.msra.mxu0 0
        %1151 = vmatprep.subr.bf16.mxu0 0
        %1152 = vmatpush2.bf16.xpose.msra.mxu0 0
        %1153 = vmatprep.subr.bf16.mxu0 0
        %1154 = vmatpush2.bf16.xpose.msra.mxu0 0
        %1155 = vmatprep.subr.bf16.mxu0 0
        %1156 = vmatpush2.bf16.xpose.msra.mxu0 0
        %1157 = vmatprep.subr.bf16.mxu0 0
        %1158 = vmatpush2.bf16.xpose.msra.mxu0 0
        %1159 = vmatprep.subr.bf16.mxu0 0
        %1160 = vmatpush2.bf16.xpose.msra.mxu0 0
        %1161 = vmatprep.mubr.bf16.mxu0 0
        %1162 = vmatmul.mubr.bf16.gmra.mxu0 %v1124
        %v1163 = vpop.f32.mrf.mxu0
        %v1164 = vadd.f32 0.0, %v1163
        %v1165 = vpop.f32.mrf.mxu0
        %v1166 = vpop.f32.mrf.mxu0
        %v1167 = vpop.f32.mrf.mxu0
        %1168 = vdwg.mxu0
        %v1169 = vmul.f32 %v1164, 0.17677669
        %v1170 = vsel %vm834, %v1169, -inf
        %1171 = vmax.xlane.f32.xlu0 %v1170
        %v1172 = vpop.xlane.xlu0 %1171
        %v1173 = vsub.f32 %v1169, %v1172
        %v1174 = vmul.f32 %v1173, 1.442695
        %v1175 = vpow.pop %v1174
        %v1176 = vsel %vm834, %v1175, 0.0
        %1177 = vadd.xlane.f32.xlu0 %v1176
        %v1178 = vpop.xlane.xlu0 %1177
        %v1179 = vrcp.pop %v1178
        %v1180 = vmul.f32 %v1175, %v1179
        %v1181 = vpack.c.bf16 %v1180, %v1180
        %1182 = vrot.lane.b32.xlu0 %v785, 32
        %v1183 = vpop.permute.xlu0 %1182
        %v1185 = vsel %vm834, %v1181, 0
        %v1188 = vsel %vm850, %v1183, 0
        %1190 = vmatprep.subr.bf16.mxu0 0
        %1191 = vmatpush1.bf16.msra.mxu0 0
        %1192 = vmatprep.subr.bf16.mxu0 0
        %1193 = vmatpush1.bf16.msra.mxu0 0
        %1194 = vmatprep.subr.bf16.mxu0 0
        %1195 = vmatpush1.bf16.msra.mxu0 0
        %1196 = vmatprep.subr.bf16.mxu0 0
        %1197 = vmatpush1.bf16.msra.mxu0 0
        %1198 = vmatprep.subr.bf16.mxu0 0
        %1199 = vmatpush1.bf16.msra.mxu0 0
        %1200 = vmatprep.subr.bf16.mxu0 0
        %1201 = vmatpush1.bf16.msra.mxu0 0
        %1202 = vmatprep.subr.bf16.mxu0 0
        %1203 = vmatpush1.bf16.msra.mxu0 0
        %1204 = vmatprep.subr.bf16.mxu0 0
        %1205 = vmatpush1.bf16.msra.mxu0 %v1188
        %1206 = vmatprep.subr.bf16.mxu0 0
        %1207 = vmatpush2.bf16.msra.mxu0 0
        %1208 = vmatprep.subr.bf16.mxu0 0
        %1209 = vmatpush2.bf16.msra.mxu0 0
        %1210 = vmatprep.subr.bf16.mxu0 0
        %1211 = vmatpush2.bf16.msra.mxu0 0
        %1212 = vmatprep.subr.bf16.mxu0 0
        %1213 = vmatpush2.bf16.msra.mxu0 0
        %1214 = vmatprep.subr.bf16.mxu0 0
        %1215 = vmatpush2.bf16.msra.mxu0 0
        %1216 = vmatprep.subr.bf16.mxu0 0
        %1217 = vmatpush2.bf16.msra.mxu0 0
        %1218 = vmatprep.subr.bf16.mxu0 0
        %1219 = vmatpush2.bf16.msra.mxu0 0
        %1220 = vmatprep.subr.bf16.mxu0 0
        %1221 = vmatpush2.bf16.msra.mxu0 0
        %1222 = vmatprep.mubr.bf16.mxu0 0
        %1223 = vmatmul.mubr.bf16.gmra.mxu0 %v1185
        %v1224 = vpop.f32.mrf.mxu0
        %v1225 = vadd.f32 0.0, %v1224
        %v1226 = vpop.f32.mrf.mxu0
        %v1227 = vpop.f32.mrf.mxu0
        %v1228 = vpop.f32.mrf.mxu0
        %1229 = vdwg.mxu0
        %1231 = vrot.lane.b32.xlu0 %v1003, 32
        %v1232 = vpop.permute.xlu0 %1231
        %1235 = vrot.lane.b32.xlu0 %v1114, 64
        %v1236 = vpop.permute.xlu0 %1235
        %1239 = vrot.lane.b32.xlu0 %v1225, 96
        %v1240 = vpop.permute.xlu0 %1239
        %v1242 = vsel %vm786, %v889, %v1232
        %vm1243 = vcmask 523264
        %v1244 = vsel %vm1243, %v1242, %v1236
        %vm1245 = vcmask 785408
        %v1246 = vsel %vm1245, %v1244, %v1240
        %v1247 = vpack.c.bf16 %v1246, %v1246
        %v1248 = vld [vmem:[#allocation10 + $0xc] sm:$0xf]
        %v1249 = vld [vmem:[#allocation10 + $0x34] sm:$0xf]
        %v1250 = vld [vmem:[#allocation10 + $0x5c] sm:$0xf]
        %v1251 = vld [vmem:[#allocation10 + $0x84] sm:$0xf]
        %v1252 = vld [vmem:[#allocation10 + $0xac] sm:$0xf]
        %v1253 = vld [vmem:[#allocation10 + $0xd4] sm:$0xf]
        %v1254 = vld [vmem:[#allocation10 + $0xfc] sm:$0xf]
        %v1255 = vld [vmem:[#allocation10 + $0x124] sm:$0xf]
        %v1256 = vld [vmem:[#allocation10 + $0x14c] sm:$0xf]
        %v1257 = vld [vmem:[#allocation10 + $0x174] sm:$0xf]
        %v1258 = vld [vmem:[#allocation10 + $0x19c] sm:$0xf]
        %v1259 = vld [vmem:[#allocation10 + $0x1c4] sm:$0xf]
        %v1260 = vld [vmem:[#allocation10 + $0x1ec] sm:$0xf]
        %v1261 = vld [vmem:[#allocation10 + $0x214] sm:$0xf]
        %v1262 = vld [vmem:[#allocation10 + $0x23c] sm:$0xf]
        %v1263 = vld [vmem:[#allocation10 + $0x264] sm:$0xf]
        %v1264 = vlaneseq
        %v1265 = vshrl.u32 %v1264, 7
        %v1266 = vsub.s32 3, %v1265
        %v1267 = vrot.slane %v517, %v1266
        %v1284 = vunpack.c.l.b16 %v1248
        %v1285 = vunpack.c.l.b16 %v1249
        %v1286 = vunpack.c.l.b16 %v1250
        %v1287 = vunpack.c.l.b16 %v1251
        %v1288 = vunpack.c.l.b16 %v1252
        %v1289 = vunpack.c.l.b16 %v1253
        %v1290 = vunpack.c.l.b16 %v1254
        %v1291 = vunpack.c.l.b16 %v1255
        %v1292 = vunpack.c.l.b16 %v1256
        %v1293 = vunpack.c.l.b16 %v1257
        %v1294 = vunpack.c.l.b16 %v1258
        %v1295 = vunpack.c.l.b16 %v1259
        %v1296 = vunpack.c.l.b16 %v1260
        %v1297 = vunpack.c.l.b16 %v1261
        %v1298 = vunpack.c.l.b16 %v1262
        %v1299 = vunpack.c.l.b16 %v1263
        %v1300 = vpack.c.b16 %v1285, %v1284
        %v1301 = vpack.c.b16 %v1287, %v1286
        %v1302 = vpack.c.b16 %v1289, %v1288
        %v1303 = vpack.c.b16 %v1291, %v1290
        %v1304 = vpack.c.b16 %v1293, %v1292
        %v1305 = vpack.c.b16 %v1295, %v1294
        %v1306 = vpack.c.b16 %v1297, %v1296
        %v1307 = vpack.c.b16 %v1299, %v1298
        %1316 = vmatprep.subr.bf16.mxu0 0
        %1317 = vmatpush1.bf16.msra.mxu0 %v1307
        %1318 = vmatprep.subr.bf16.mxu0 0
        %1319 = vmatpush1.bf16.msra.mxu0 %v1306
        %1320 = vmatprep.subr.bf16.mxu0 0
        %1321 = vmatpush1.bf16.msra.mxu0 %v1305
        %1322 = vmatprep.subr.bf16.mxu0 0
        %1323 = vmatpush1.bf16.msra.mxu0 %v1304
        %1324 = vmatprep.subr.bf16.mxu0 0
        %1325 = vmatpush1.bf16.msra.mxu0 %v1303
        %1326 = vmatprep.subr.bf16.mxu0 0
        %1327 = vmatpush1.bf16.msra.mxu0 %v1302
        %1328 = vmatprep.subr.bf16.mxu0 0
        %1329 = vmatpush1.bf16.msra.mxu0 %v1301
        %1330 = vmatprep.subr.bf16.mxu0 0
        %1331 = vmatpush1.bf16.msra.mxu0 %v1300
        %1332 = vmatprep.subr.bf16.mxu0 0
        %1333 = vmatpush2.bf16.msra.mxu0 0
        %1334 = vmatprep.subr.bf16.mxu0 0
        %1335 = vmatpush2.bf16.msra.mxu0 0
        %1336 = vmatprep.subr.bf16.mxu0 0
        %1337 = vmatpush2.bf16.msra.mxu0 0
        %1338 = vmatprep.subr.bf16.mxu0 0
        %1339 = vmatpush2.bf16.msra.mxu0 0
        %1340 = vmatprep.subr.bf16.mxu0 0
        %1341 = vmatpush2.bf16.msra.mxu0 0
        %1342 = vmatprep.subr.bf16.mxu0 0
        %1343 = vmatpush2.bf16.msra.mxu0 0
        %1344 = vmatprep.subr.bf16.mxu0 0
        %1345 = vmatpush2.bf16.msra.mxu0 0
        %1346 = vmatprep.subr.bf16.mxu0 0
        %1347 = vmatpush2.bf16.msra.mxu0 0
        %1348 = vmatprep.mubr.bf16.mxu0 0
        %1349 = vmatmul.mubr.bf16.gmra.mxu0 %v1247
        %v1350 = vpop.f32.mrf.mxu0
        %v1351 = vadd.f32 %v1267, %v1350
        %v1352 = vpop.f32.mrf.mxu0
        %v1353 = vpop.f32.mrf.mxu0
        %v1354 = vpop.f32.mrf.mxu0
        %1355 = vdwg.mxu0
        %v1356 = vadd.f32 %v519, %v1351
        %1357 = vadd.xlane.f32.xlu0 %v1356
        %v1358 = vpop.xlane.xlu0 %1357
        %v1359 = vrcp.pop 128.0
        %v1360 = vmul.f32 %v1358, %v1359
        %v1361 = vsub.f32 %v1356, %v1360
        %v1362 = vmul.f32 %v1361, %v1361
        %1363 = vadd.xlane.f32.xlu0 %v1362
        %v1364 = vpop.xlane.xlu0 %1363
        %v1365 = vmul.f32 %v1364, %v1359
        %v1366 = vadd.f32 %v1365, 1e-05
        %v1367 = vrsqrt.pop %v1366
        %v1368 = vmul.f32 %v1361, %v1367
        %v1369 = vlaneseq
        %v1370 = vshrl.u32 %v1369, 7
        %v1371 = vsub.s32 0, %v1370
        %v1372 = vrot.slane %v518, %v1371
        %v1373 = vmul.f32 %v1368, %v1372
        %v1374 = vlaneseq
        %v1375 = vshrl.u32 %v1374, 7
        %v1376 = vsub.s32 1, %v1375
        %v1377 = vrot.slane %v518, %v1376
        %v1378 = vadd.f32 %v1373, %v1377
        %v1379 = vadd.f32 %v1378, %v520
        %v1380 = vpack.c.bf16 %v1379, %v1379
        %v1381 = vld [vmem:[#allocation10 + $0x10] sm:$0xf]
        %v1382 = vld [vmem:[#allocation10 + $0x38] sm:$0xf]
        %v1383 = vld [vmem:[#allocation10 + $0x60] sm:$0xf]
        %v1384 = vld [vmem:[#allocation10 + $0x88] sm:$0xf]
        %v1385 = vld [vmem:[#allocation10 + $0xb0] sm:$0xf]
        %v1386 = vld [vmem:[#allocation10 + $0xd8] sm:$0xf]
        %v1387 = vld [vmem:[#allocation10 + $0x100] sm:$0xf]
        %v1388 = vld [vmem:[#allocation10 + $0x128] sm:$0xf]
        %v1389 = vld [vmem:[#allocation10 + $0x150] sm:$0xf]
        %v1390 = vld [vmem:[#allocation10 + $0x178] sm:$0xf]
        %v1391 = vld [vmem:[#allocation10 + $0x1a0] sm:$0xf]
        %v1392 = vld [vmem:[#allocation10 + $0x1c8] sm:$0xf]
        %v1393 = vld [vmem:[#allocation10 + $0x1f0] sm:$0xf]
        %v1394 = vld [vmem:[#allocation10 + $0x218] sm:$0xf]
        %v1395 = vld [vmem:[#allocation10 + $0x240] sm:$0xf]
        %v1396 = vld [vmem:[#allocation10 + $0x268] sm:$0xf]
        %v1397 = vlaneseq
        %v1398 = vshrl.u32 %v1397, 7
        %v1399 = vsub.s32 4, %v1398
        %v1400 = vrot.slane %v517, %v1399
        %v1417 = vunpack.c.l.b16 %v1381
        %v1418 = vunpack.c.l.b16 %v1382
        %v1419 = vunpack.c.l.b16 %v1383
        %v1420 = vunpack.c.l.b16 %v1384
        %v1421 = vunpack.c.l.b16 %v1385
        %v1422 = vunpack.c.l.b16 %v1386
        %v1423 = vunpack.c.l.b16 %v1387
        %v1424 = vunpack.c.l.b16 %v1388
        %v1425 = vunpack.c.l.b16 %v1389
        %v1426 = vunpack.c.l.b16 %v1390
        %v1427 = vunpack.c.l.b16 %v1391
        %v1428 = vunpack.c.l.b16 %v1392
        %v1429 = vunpack.c.l.b16 %v1393
        %v1430 = vunpack.c.l.b16 %v1394
        %v1431 = vunpack.c.l.b16 %v1395
        %v1432 = vunpack.c.l.b16 %v1396
        %v1433 = vpack.c.b16 %v1418, %v1417
        %v1434 = vpack.c.b16 %v1420, %v1419
        %v1435 = vpack.c.b16 %v1422, %v1421
        %v1436 = vpack.c.b16 %v1424, %v1423
        %v1437 = vpack.c.b16 %v1426, %v1425
        %v1438 = vpack.c.b16 %v1428, %v1427
        %v1439 = vpack.c.b16 %v1430, %v1429
        %v1440 = vpack.c.b16 %v1432, %v1431
        %1449 = vmatprep.subr.bf16.mxu0 0
        %1450 = vmatpush1.bf16.msra.mxu0 %v1440
        %1451 = vmatprep.subr.bf16.mxu0 0
        %1452 = vmatpush1.bf16.msra.mxu0 %v1439
        %1453 = vmatprep.subr.bf16.mxu0 0
        %1454 = vmatpush1.bf16.msra.mxu0 %v1438
        %1455 = vmatprep.subr.bf16.mxu0 0
        %1456 = vmatpush1.bf16.msra.mxu0 %v1437
        %1457 = vmatprep.subr.bf16.mxu0 0
        %1458 = vmatpush1.bf16.msra.mxu0 %v1436
        %1459 = vmatprep.subr.bf16.mxu0 0
        %1460 = vmatpush1.bf16.msra.mxu0 %v1435
        %1461 = vmatprep.subr.bf16.mxu0 0
        %1462 = vmatpush1.bf16.msra.mxu0 %v1434
        %1463 = vmatprep.subr.bf16.mxu0 0
        %1464 = vmatpush1.bf16.msra.mxu0 %v1433
        %1465 = vmatprep.subr.bf16.mxu0 0
        %1466 = vmatpush2.bf16.msra.mxu0 0
        %1467 = vmatprep.subr.bf16.mxu0 0
        %1468 = vmatpush2.bf16.msra.mxu0 0
        %1469 = vmatprep.subr.bf16.mxu0 0
        %1470 = vmatpush2.bf16.msra.mxu0 0
        %1471 = vmatprep.subr.bf16.mxu0 0
        %1472 = vmatpush2.bf16.msra.mxu0 0
        %1473 = vmatprep.subr.bf16.mxu0 0
        %1474 = vmatpush2.bf16.msra.mxu0 0
        %1475 = vmatprep.subr.bf16.mxu0 0
        %1476 = vmatpush2.bf16.msra.mxu0 0
        %1477 = vmatprep.subr.bf16.mxu0 0
        %1478 = vmatpush2.bf16.msra.mxu0 0
        %1479 = vmatprep.subr.bf16.mxu0 0
        %1480 = vmatpush2.bf16.msra.mxu0 0
        %1481 = vmatprep.mubr.bf16.mxu0 0
        %1482 = vmatmul.mubr.bf16.gmra.mxu0 %v1380
        %v1483 = vpop.f32.mrf.mxu0
        %v1484 = vadd.f32 %v1400, %v1483
        %v1485 = vpop.f32.mrf.mxu0
        %v1486 = vpop.f32.mrf.mxu0
        %v1487 = vpop.f32.mrf.mxu0
        %1488 = vdwg.mxu0
        %v1489 = vadd.f32 %v521, %v523
        %v1490 = vadd.f32 %v522, %v524
        %v1491 = vpack.c.bf16 %v1490, %v1489
        %v1492 = vld [vmem:[#allocation10 + $0x14] sm:$0xf]
        %v1493 = vld [vmem:[#allocation10 + $0x3c] sm:$0xf]
        %v1494 = vld [vmem:[#allocation10 + $0x64] sm:$0xf]
        %v1495 = vld [vmem:[#allocation10 + $0x8c] sm:$0xf]
        %v1496 = vld [vmem:[#allocation10 + $0xb4] sm:$0xf]
        %v1497 = vld [vmem:[#allocation10 + $0xdc] sm:$0xf]
        %v1498 = vld [vmem:[#allocation10 + $0x104] sm:$0xf]
        %v1499 = vld [vmem:[#allocation10 + $0x12c] sm:$0xf]
        %v1500 = vld [vmem:[#allocation10 + $0x154] sm:$0xf]
        %v1501 = vld [vmem:[#allocation10 + $0x17c] sm:$0xf]
        %v1502 = vld [vmem:[#allocation10 + $0x1a4] sm:$0xf]
        %v1503 = vld [vmem:[#allocation10 + $0x1cc] sm:$0xf]
        %v1504 = vld [vmem:[#allocation10 + $0x1f4] sm:$0xf]
        %v1505 = vld [vmem:[#allocation10 + $0x21c] sm:$0xf]
        %v1506 = vld [vmem:[#allocation10 + $0x244] sm:$0xf]
        %v1507 = vld [vmem:[#allocation10 + $0x26c] sm:$0xf]
        %v1508 = vlaneseq
        %v1509 = vshrl.u32 %v1508, 7
        %v1510 = vsub.s32 5, %v1509
        %v1511 = vrot.slane %v517, %v1510
        %v1528 = vunpack.c.l.b16 %v1492
        %v1529 = vunpack.c.l.b16 %v1493
        %v1530 = vunpack.c.l.b16 %v1494
        %v1531 = vunpack.c.l.b16 %v1495
        %v1532 = vunpack.c.l.b16 %v1496
        %v1533 = vunpack.c.l.b16 %v1497
        %v1534 = vunpack.c.l.b16 %v1498
        %v1535 = vunpack.c.l.b16 %v1499
        %v1536 = vunpack.c.l.b16 %v1500
        %v1537 = vunpack.c.l.b16 %v1501
        %v1538 = vunpack.c.l.b16 %v1502
        %v1539 = vunpack.c.l.b16 %v1503
        %v1540 = vunpack.c.l.b16 %v1504
        %v1541 = vunpack.c.l.b16 %v1505
        %v1542 = vunpack.c.l.b16 %v1506
        %v1543 = vunpack.c.l.b16 %v1507
        %v1544 = vpack.c.b16 %v1529, %v1528
        %v1545 = vpack.c.b16 %v1531, %v1530
        %v1546 = vpack.c.b16 %v1533, %v1532
        %v1547 = vpack.c.b16 %v1535, %v1534
        %v1548 = vpack.c.b16 %v1537, %v1536
        %v1549 = vpack.c.b16 %v1539, %v1538
        %v1550 = vpack.c.b16 %v1541, %v1540
        %v1551 = vpack.c.b16 %v1543, %v1542
        %1560 = vmatprep.subr.bf16.mxu0 0
        %1561 = vmatpush1.bf16.msra.mxu0 %v1551
        %1562 = vmatprep.subr.bf16.mxu0 0
        %1563 = vmatpush1.bf16.msra.mxu0 %v1550
        %1564 = vmatprep.subr.bf16.mxu0 0
        %1565 = vmatpush1.bf16.msra.mxu0 %v1549
        %1566 = vmatprep.subr.bf16.mxu0 0
        %1567 = vmatpush1.bf16.msra.mxu0 %v1548
        %1568 = vmatprep.subr.bf16.mxu0 0
        %1569 = vmatpush1.bf16.msra.mxu0 %v1547
        %1570 = vmatprep.subr.bf16.mxu0 0
        %1571 = vmatpush1.bf16.msra.mxu0 %v1546
        %1572 = vmatprep.subr.bf16.mxu0 0
        %1573 = vmatpush1.bf16.msra.mxu0 %v1545
        %1574 = vmatprep.subr.bf16.mxu0 0
        %1575 = vmatpush1.bf16.msra.mxu0 %v1544
        %1576 = vmatprep.subr.bf16.mxu0 0
        %1577 = vmatpush2.bf16.msra.mxu0 0
        %1578 = vmatprep.subr.bf16.mxu0 0
        %1579 = vmatpush2.bf16.msra.mxu0 0
        %1580 = vmatprep.subr.bf16.mxu0 0
        %1581 = vmatpush2.bf16.msra.mxu0 0
        %1582 = vmatprep.subr.bf16.mxu0 0
        %1583 = vmatpush2.bf16.msra.mxu0 0
        %1584 = vmatprep.subr.bf16.mxu0 0
        %1585 = vmatpush2.bf16.msra.mxu0 0
        %1586 = vmatprep.subr.bf16.mxu0 0
        %1587 = vmatpush2.bf16.msra.mxu0 0
        %1588 = vmatprep.subr.bf16.mxu0 0
        %1589 = vmatpush2.bf16.msra.mxu0 0
        %1590 = vmatprep.subr.bf16.mxu0 0
        %1591 = vmatpush2.bf16.msra.mxu0 0
        %1592 = vmatprep.mubr.bf16.mxu0 0
        %1593 = vmatmul.mubr.bf16.gmra.mxu0 %v1491
        %v1594 = vpop.f32.mrf.mxu0
        %v1595 = vadd.f32 %v1511, %v1594
        %v1596 = vpop.f32.mrf.mxu0
        %v1597 = vpop.f32.mrf.mxu0
        %v1598 = vadd.f32 %v1511, %v1597
        %v1599 = vpop.f32.mrf.mxu0
        %1600 = vdwg.mxu0
        %v1601 = vpack.c.bf16 %v522, %v521
        %v1602 = vld [vmem:[#allocation10 + $0x18] sm:$0xf]
        %v1603 = vld [vmem:[#allocation10 + $0x40] sm:$0xf]
        %v1604 = vld [vmem:[#allocation10 + $0x68] sm:$0xf]
        %v1605 = vld [vmem:[#allocation10 + $0x90] sm:$0xf]
        %v1606 = vld [vmem:[#allocation10 + $0xb8] sm:$0xf]
        %v1607 = vld [vmem:[#allocation10 + $0xe0] sm:$0xf]
        %v1608 = vld [vmem:[#allocation10 + $0x108] sm:$0xf]
        %v1609 = vld [vmem:[#allocation10 + $0x130] sm:$0xf]
        %v1610 = vld [vmem:[#allocation10 + $0x158] sm:$0xf]
        %v1611 = vld [vmem:[#allocation10 + $0x180] sm:$0xf]
        %v1612 = vld [vmem:[#allocation10 + $0x1a8] sm:$0xf]
        %v1613 = vld [vmem:[#allocation10 + $0x1d0] sm:$0xf]
        %v1614 = vld [vmem:[#allocation10 + $0x1f8] sm:$0xf]
        %v1615 = vld [vmem:[#allocation10 + $0x220] sm:$0xf]
        %v1616 = vld [vmem:[#allocation10 + $0x248] sm:$0xf]
        %v1617 = vld [vmem:[#allocation10 + $0x270] sm:$0xf]
        %v1618 = vlaneseq
        %v1619 = vshrl.u32 %v1618, 7
        %v1620 = vsub.s32 6, %v1619
        %v1621 = vrot.slane %v517, %v1620
        %v1638 = vunpack.c.l.b16 %v1602
        %v1639 = vunpack.c.l.b16 %v1603
        %v1640 = vunpack.c.l.b16 %v1604
        %v1641 = vunpack.c.l.b16 %v1605
        %v1642 = vunpack.c.l.b16 %v1606
        %v1643 = vunpack.c.l.b16 %v1607
        %v1644 = vunpack.c.l.b16 %v1608
        %v1645 = vunpack.c.l.b16 %v1609
        %v1646 = vunpack.c.l.b16 %v1610
        %v1647 = vunpack.c.l.b16 %v1611
        %v1648 = vunpack.c.l.b16 %v1612
        %v1649 = vunpack.c.l.b16 %v1613
        %v1650 = vunpack.c.l.b16 %v1614
        %v1651 = vunpack.c.l.b16 %v1615
        %v1652 = vunpack.c.l.b16 %v1616
        %v1653 = vunpack.c.l.b16 %v1617
        %v1654 = vpack.c.b16 %v1639, %v1638
        %v1655 = vpack.c.b16 %v1641, %v1640
        %v1656 = vpack.c.b16 %v1643, %v1642
        %v1657 = vpack.c.b16 %v1645, %v1644
        %v1658 = vpack.c.b16 %v1647, %v1646
        %v1659 = vpack.c.b16 %v1649, %v1648
        %v1660 = vpack.c.b16 %v1651, %v1650
        %v1661 = vpack.c.b16 %v1653, %v1652
        %1670 = vmatprep.subr.bf16.mxu0 0
        %1671 = vmatpush1.bf16.msra.mxu0 %v1661
        %1672 = vmatprep.subr.bf16.mxu0 0
        %1673 = vmatpush1.bf16.msra.mxu0 %v1660
        %1674 = vmatprep.subr.bf16.mxu0 0
        %1675 = vmatpush1.bf16.msra.mxu0 %v1659
        %1676 = vmatprep.subr.bf16.mxu0 0
        %1677 = vmatpush1.bf16.msra.mxu0 %v1658
        %1678 = vmatprep.subr.bf16.mxu0 0
        %1679 = vmatpush1.bf16.msra.mxu0 %v1657
        %1680 = vmatprep.subr.bf16.mxu0 0
        %1681 = vmatpush1.bf16.msra.mxu0 %v1656
        %1682 = vmatprep.subr.bf16.mxu0 0
        %1683 = vmatpush1.bf16.msra.mxu0 %v1655
        %1684 = vmatprep.subr.bf16.mxu0 0
        %1685 = vmatpush1.bf16.msra.mxu0 %v1654
        %1686 = vmatprep.subr.bf16.mxu0 0
        %1687 = vmatpush2.bf16.msra.mxu0 0
        %1688 = vmatprep.subr.bf16.mxu0 0
        %1689 = vmatpush2.bf16.msra.mxu0 0
        %1690 = vmatprep.subr.bf16.mxu0 0
        %1691 = vmatpush2.bf16.msra.mxu0 0
        %1692 = vmatprep.subr.bf16.mxu0 0
        %1693 = vmatpush2.bf16.msra.mxu0 0
        %1694 = vmatprep.subr.bf16.mxu0 0
        %1695 = vmatpush2.bf16.msra.mxu0 0
        %1696 = vmatprep.subr.bf16.mxu0 0
        %1697 = vmatpush2.bf16.msra.mxu0 0
        %1698 = vmatprep.subr.bf16.mxu0 0
        %1699 = vmatpush2.bf16.msra.mxu0 0
        %1700 = vmatprep.subr.bf16.mxu0 0
        %1701 = vmatpush2.bf16.msra.mxu0 0
        %1702 = vmatprep.mubr.bf16.mxu0 0
        %1703 = vmatmul.mubr.bf16.gmra.mxu0 %v1601
        %v1704 = vpop.f32.mrf.mxu0
        %v1705 = vadd.f32 %v1621, %v1704
        %v1706 = vpop.f32.mrf.mxu0
        %v1707 = vpop.f32.mrf.mxu0
        %v1708 = vadd.f32 %v1621, %v1707
        %v1709 = vpop.f32.mrf.mxu0
        %1710 = vdwg.mxu0
        %v1711 = vpack.c.bf16 %v1484, %v1484
        %v1712 = vpack.c.bf16 %v1598, %v1595
        %v1713 = vpack.c.bf16 %v1708, %v1705
        %v1715 = vsel %vm786, %v1711, 0
        %v1718 = vsel %vm786, %v1712, 0
        %1720 = vmatprep.subr.bf16.mxu0 0
        %1721 = vmatpush1.bf16.xpose.msra.mxu0 0
        %1722 = vmatprep.subr.bf16.mxu0 0
        %1723 = vmatpush1.bf16.xpose.msra.mxu0 0
        %1724 = vmatprep.subr.bf16.mxu0 0
        %1725 = vmatpush1.bf16.xpose.msra.mxu0 0
        %1726 = vmatprep.subr.bf16.mxu0 0
        %1727 = vmatpush1.bf16.xpose.msra.mxu0 0
        %1728 = vmatprep.subr.bf16.mxu0 0
        %1729 = vmatpush1.bf16.xpose.msra.mxu0 0
        %1730 = vmatprep.subr.bf16.mxu0 0
        %1731 = vmatpush1.bf16.xpose.msra.mxu0 0
        %1732 = vmatprep.subr.bf16.mxu0 0
        %1733 = vmatpush1.bf16.xpose.msra.mxu0 0
        %1734 = vmatprep.subr.bf16.mxu0 0
        %1735 = vmatpush1.bf16.xpose.msra.mxu0 %v1718
        %1736 = vmatprep.subr.bf16.mxu0 0
        %1737 = vmatpush2.bf16.xpose.msra.mxu0 0
        %1738 = vmatprep.subr.bf16.mxu0 0
        %1739 = vmatpush2.bf16.xpose.msra.mxu0 0
        %1740 = vmatprep.subr.bf16.mxu0 0
        %1741 = vmatpush2.bf16.xpose.msra.mxu0 0
        %1742 = vmatprep.subr.bf16.mxu0 0
        %1743 = vmatpush2.bf16.xpose.msra.mxu0 0
        %1744 = vmatprep.subr.bf16.mxu0 0
        %1745 = vmatpush2.bf16.xpose.msra.mxu0 0
        %1746 = vmatprep.subr.bf16.mxu0 0
        %1747 = vmatpush2.bf16.xpose.msra.mxu0 0
        %1748 = vmatprep.subr.bf16.mxu0 0
        %1749 = vmatpush2.bf16.xpose.msra.mxu0 0
        %1750 = vmatprep.subr.bf16.mxu0 0
        %1751 = vmatpush2.bf16.xpose.msra.mxu0 0
        %1752 = vmatprep.mubr.bf16.mxu0 0
        %1753 = vmatmul.mubr.bf16.gmra.mxu0 %v1715
        %v1754 = vpop.f32.mrf.mxu0
        %v1755 = vadd.f32 0.0, %v1754
        %v1756 = vpop.f32.mrf.mxu0
        %v1757 = vpop.f32.mrf.mxu0
        %v1758 = vpop.f32.mrf.mxu0
        %1759 = vdwg.mxu0
        %v1760 = vmul.f32 %v1755, 0.17677669
        %vm1761 = vcmask 130048
        %v1762 = vsel %vm1761, %v1760, -inf
        %1763 = vmax.xlane.f32.xlu0 %v1762
        %v1764 = vpop.xlane.xlu0 %1763
        %v1765 = vsub.f32 %v1760, %v1764
        %v1766 = vmul.f32 %v1765, 1.442695
        %v1767 = vpow.pop %v1766
        %v1768 = vsel %vm1761, %v1767, 0.0
        %1769 = vadd.xlane.f32.xlu0 %v1768
        %v1770 = vpop.xlane.xlu0 %1769
        %v1771 = vrcp.pop %v1770
        %v1772 = vmul.f32 %v1767, %v1771
        %v1773 = vpack.c.bf16 %v1772, %v1772
        %v1775 = vsel %vm1761, %v1773, 0
        %1777 = vmatprep.subr.bf16.mxu0 0
        %1778 = vmatpush1.bf16.msra.mxu0 0
        %1779 = vmatprep.subr.bf16.mxu0 0
        %1780 = vmatpush1.bf16.msra.mxu0 0
        %1781 = vmatprep.subr.bf16.mxu0 0
        %1782 = vmatpush1.bf16.msra.mxu0 0
        %1783 = vmatprep.subr.bf16.mxu0 0
        %1784 = vmatpush1.bf16.msra.mxu0 0
        %1785 = vmatprep.subr.bf16.mxu0 0
        %1786 = vmatpush1.bf16.msra.mxu0 0
        %1787 = vmatprep.subr.bf16.mxu0 0
        %1788 = vmatpush1.bf16.msra.mxu0 0
        %1789 = vmatprep.subr.bf16.mxu0 0
        %1790 = vmatpush1.bf16.msra.mxu0 0
        %1791 = vmatprep.subr.bf16.mxu0 0
        %1792 = vmatpush1.bf16.msra.mxu0 %v1713
        %1793 = vmatprep.subr.bf16.mxu0 0
        %1794 = vmatpush2.bf16.msra.mxu0 0
        %1795 = vmatprep.subr.bf16.mxu0 0
        %1796 = vmatpush2.bf16.msra.mxu0 0
        %1797 = vmatprep.subr.bf16.mxu0 0
        %1798 = vmatpush2.bf16.msra.mxu0 0
        %1799 = vmatprep.subr.bf16.mxu0 0
        %1800 = vmatpush2.bf16.msra.mxu0 0
        %1801 = vmatprep.subr.bf16.mxu0 0
        %1802 = vmatpush2.bf16.msra.mxu0 0
        %1803 = vmatprep.subr.bf16.mxu0 0
        %1804 = vmatpush2.bf16.msra.mxu0 0
        %1805 = vmatprep.subr.bf16.mxu0 0
        %1806 = vmatpush2.bf16.msra.mxu0 0
        %1807 = vmatprep.subr.bf16.mxu0 0
        %1808 = vmatpush2.bf16.msra.mxu0 0
        %1809 = vmatprep.mubr.bf16.mxu0 0
        %1810 = vmatmul.mubr.bf16.gmra.mxu0 %v1775
        %v1811 = vpop.f32.mrf.mxu0
        %v1812 = vadd.f32 0.0, %v1811
        %v1813 = vpop.f32.mrf.mxu0
        %v1814 = vpop.f32.mrf.mxu0
        %v1815 = vpop.f32.mrf.mxu0
        %1816 = vdwg.mxu0
        %v1817 = vadd.f32 %v1772, 0.0
        %1819 = vrot.lane.b32.xlu0 %v1711, 96
        %v1820 = vpop.permute.xlu0 %1819
        %1822 = vrot.lane.b32.xlu0 %v1712, 96
        %v1823 = vpop.permute.xlu0 %1822
        %v1825 = vsel %vm786, %v1820, 0
        %v1828 = vsel %vm786, %v1823, 0
        %1830 = vmatprep.subr.bf16.mxu0 0
        %1831 = vmatpush1.bf16.xpose.msra.mxu0 0
        %1832 = vmatprep.subr.bf16.mxu0 0
        %1833 = vmatpush1.bf16.xpose.msra.mxu0 0
        %1834 = vmatprep.subr.bf16.mxu0 0
        %1835 = vmatpush1.bf16.xpose.msra.mxu0 0
        %1836 = vmatprep.subr.bf16.mxu0 0
        %1837 = vmatpush1.bf16.xpose.msra.mxu0 0
        %1838 = vmatprep.subr.bf16.mxu0 0
        %1839 = vmatpush1.bf16.xpose.msra.mxu0 0
        %1840 = vmatprep.subr.bf16.mxu0 0
        %1841 = vmatpush1.bf16.xpose.msra.mxu0 0
        %1842 = vmatprep.subr.bf16.mxu0 0
        %1843 = vmatpush1.bf16.xpose.msra.mxu0 0
        %1844 = vmatprep.subr.bf16.mxu0 0
        %1845 = vmatpush1.bf16.xpose.msra.mxu0 %v1828
        %1846 = vmatprep.subr.bf16.mxu0 0
        %1847 = vmatpush2.bf16.xpose.msra.mxu0 0
        %1848 = vmatprep.subr.bf16.mxu0 0
        %1849 = vmatpush2.bf16.xpose.msra.mxu0 0
        %1850 = vmatprep.subr.bf16.mxu0 0
        %1851 = vmatpush2.bf16.xpose.msra.mxu0 0
        %1852 = vmatprep.subr.bf16.mxu0 0
        %1853 = vmatpush2.bf16.xpose.msra.mxu0 0
        %1854 = vmatprep.subr.bf16.mxu0 0
        %1855 = vmatpush2.bf16.xpose.msra.mxu0 0
        %1856 = vmatprep.subr.bf16.mxu0 0
        %1857 = vmatpush2.bf16.xpose.msra.mxu0 0
        %1858 = vmatprep.subr.bf16.mxu0 0
        %1859 = vmatpush2.bf16.xpose.msra.mxu0 0
        %1860 = vmatprep.subr.bf16.mxu0 0
        %1861 = vmatpush2.bf16.xpose.msra.mxu0 0
        %1862 = vmatprep.mubr.bf16.mxu0 0
        %1863 = vmatmul.mubr.bf16.gmra.mxu0 %v1825
        %v1864 = vpop.f32.mrf.mxu0
        %v1865 = vadd.f32 0.0, %v1864
        %v1866 = vpop.f32.mrf.mxu0
        %v1867 = vpop.f32.mrf.mxu0
        %v1868 = vpop.f32.mrf.mxu0
        %1869 = vdwg.mxu0
        %v1870 = vmul.f32 %v1865, 0.17677669
        %v1871 = vsel %vm1761, %v1870, -inf
        %1872 = vmax.xlane.f32.xlu0 %v1871
        %v1873 = vpop.xlane.xlu0 %1872
        %v1874 = vsub.f32 %v1870, %v1873
        %v1875 = vmul.f32 %v1874, 1.442695
        %v1876 = vpow.pop %v1875
        %v1877 = vsel %vm1761, %v1876, 0.0
        %1878 = vadd.xlane.f32.xlu0 %v1877
        %v1879 = vpop.xlane.xlu0 %1878
        %v1880 = vrcp.pop %v1879
        %v1881 = vmul.f32 %v1876, %v1880
        %v1882 = vpack.c.bf16 %v1881, %v1881
        %1884 = vrot.lane.b32.xlu0 %v1713, 96
        %v1885 = vpop.permute.xlu0 %1884
        %v1888 = vsel %vm1761, %v1882, 0
        %1890 = vmatprep.subr.bf16.mxu0 0
        %1891 = vmatpush1.bf16.msra.mxu0 0
        %1892 = vmatprep.subr.bf16.mxu0 0
        %1893 = vmatpush1.bf16.msra.mxu0 0
        %1894 = vmatprep.subr.bf16.mxu0 0
        %1895 = vmatpush1.bf16.msra.mxu0 0
        %1896 = vmatprep.subr.bf16.mxu0 0
        %1897 = vmatpush1.bf16.msra.mxu0 0
        %1898 = vmatprep.subr.bf16.mxu0 0
        %1899 = vmatpush1.bf16.msra.mxu0 0
        %1900 = vmatprep.subr.bf16.mxu0 0
        %1901 = vmatpush1.bf16.msra.mxu0 0
        %1902 = vmatprep.subr.bf16.mxu0 0
        %1903 = vmatpush1.bf16.msra.mxu0 0
        %1904 = vmatprep.subr.bf16.mxu0 0
        %1905 = vmatpush1.bf16.msra.mxu0 %v1885
        %1906 = vmatprep.subr.bf16.mxu0 0
        %1907 = vmatpush2.bf16.msra.mxu0 0
        %1908 = vmatprep.subr.bf16.mxu0 0
        %1909 = vmatpush2.bf16.msra.mxu0 0
        %1910 = vmatprep.subr.bf16.mxu0 0
        %1911 = vmatpush2.bf16.msra.mxu0 0
        %1912 = vmatprep.subr.bf16.mxu0 0
        %1913 = vmatpush2.bf16.msra.mxu0 0
        %1914 = vmatprep.subr.bf16.mxu0 0
        %1915 = vmatpush2.bf16.msra.mxu0 0
        %1916 = vmatprep.subr.bf16.mxu0 0
        %1917 = vmatpush2.bf16.msra.mxu0 0
        %1918 = vmatprep.subr.bf16.mxu0 0
        %1919 = vmatpush2.bf16.msra.mxu0 0
        %1920 = vmatprep.subr.bf16.mxu0 0
        %1921 = vmatpush2.bf16.msra.mxu0 0
        %1922 = vmatprep.mubr.bf16.mxu0 0
        %1923 = vmatmul.mubr.bf16.gmra.mxu0 %v1888
        %v1924 = vpop.f32.mrf.mxu0
        %v1925 = vadd.f32 0.0, %v1924
        %v1926 = vpop.f32.mrf.mxu0
        %v1927 = vpop.f32.mrf.mxu0
        %v1928 = vpop.f32.mrf.mxu0
        %1929 = vdwg.mxu0
        %v1930 = vadd.f32 %v1817, %v1881
        %1931 = vrot.lane.b32.xlu0 %v1711, 64
        %v1932 = vpop.permute.xlu0 %1931
        %1933 = vrot.lane.b32.xlu0 %v1712, 64
        %v1934 = vpop.permute.xlu0 %1933
        %v1936 = vsel %vm786, %v1932, 0
        %v1939 = vsel %vm786, %v1934, 0
        %1941 = vmatprep.subr.bf16.mxu0 0
        %1942 = vmatpush1.bf16.xpose.msra.mxu0 0
        %1943 = vmatprep.subr.bf16.mxu0 0
        %1944 = vmatpush1.bf16.xpose.msra.mxu0 0
        %1945 = vmatprep.subr.bf16.mxu0 0
        %1946 = vmatpush1.bf16.xpose.msra.mxu0 0
        %1947 = vmatprep.subr.bf16.mxu0 0
        %1948 = vmatpush1.bf16.xpose.msra.mxu0 0
        %1949 = vmatprep.subr.bf16.mxu0 0
        %1950 = vmatpush1.bf16.xpose.msra.mxu0 0
        %1951 = vmatprep.subr.bf16.mxu0 0
        %1952 = vmatpush1.bf16.xpose.msra.mxu0 0
        %1953 = vmatprep.subr.bf16.mxu0 0
        %1954 = vmatpush1.bf16.xpose.msra.mxu0 0
        %1955 = vmatprep.subr.bf16.mxu0 0
        %1956 = vmatpush1.bf16.xpose.msra.mxu0 %v1939
        %1957 = vmatprep.subr.bf16.mxu0 0
        %1958 = vmatpush2.bf16.xpose.msra.mxu0 0
        %1959 = vmatprep.subr.bf16.mxu0 0
        %1960 = vmatpush2.bf16.xpose.msra.mxu0 0
        %1961 = vmatprep.subr.bf16.mxu0 0
        %1962 = vmatpush2.bf16.xpose.msra.mxu0 0
        %1963 = vmatprep.subr.bf16.mxu0 0
        %1964 = vmatpush2.bf16.xpose.msra.mxu0 0
        %1965 = vmatprep.subr.bf16.mxu0 0
        %1966 = vmatpush2.bf16.xpose.msra.mxu0 0
        %1967 = vmatprep.subr.bf16.mxu0 0
        %1968 = vmatpush2.bf16.xpose.msra.mxu0 0
        %1969 = vmatprep.subr.bf16.mxu0 0
        %1970 = vmatpush2.bf16.xpose.msra.mxu0 0
        %1971 = vmatprep.subr.bf16.mxu0 0
        %1972 = vmatpush2.bf16.xpose.msra.mxu0 0
        %1973 = vmatprep.mubr.bf16.mxu0 0
        %1974 = vmatmul.mubr.bf16.gmra.mxu0 %v1936
        %v1975 = vpop.f32.mrf.mxu0
        %v1976 = vadd.f32 0.0, %v1975
        %v1977 = vpop.f32.mrf.mxu0
        %v1978 = vpop.f32.mrf.mxu0
        %v1979 = vpop.f32.mrf.mxu0
        %1980 = vdwg.mxu0
        %v1981 = vmul.f32 %v1976, 0.17677669
        %v1982 = vsel %vm1761, %v1981, -inf
        %1983 = vmax.xlane.f32.xlu0 %v1982
        %v1984 = vpop.xlane.xlu0 %1983
        %v1985 = vsub.f32 %v1981, %v1984
        %v1986 = vmul.f32 %v1985, 1.442695
        %v1987 = vpow.pop %v1986
        %v1988 = vsel %vm1761, %v1987, 0.0
        %1989 = vadd.xlane.f32.xlu0 %v1988
        %v1990 = vpop.xlane.xlu0 %1989
        %v1991 = vrcp.pop %v1990
        %v1992 = vmul.f32 %v1987, %v1991
        %v1993 = vpack.c.bf16 %v1992, %v1992
        %1994 = vrot.lane.b32.xlu0 %v1713, 64
        %v1995 = vpop.permute.xlu0 %1994
        %v1998 = vsel %vm1761, %v1993, 0
        %2000 = vmatprep.subr.bf16.mxu0 0
        %2001 = vmatpush1.bf16.msra.mxu0 0
        %2002 = vmatprep.subr.bf16.mxu0 0
        %2003 = vmatpush1.bf16.msra.mxu0 0
        %2004 = vmatprep.subr.bf16.mxu0 0
        %2005 = vmatpush1.bf16.msra.mxu0 0
        %2006 = vmatprep.subr.bf16.mxu0 0
        %2007 = vmatpush1.bf16.msra.mxu0 0
        %2008 = vmatprep.subr.bf16.mxu0 0
        %2009 = vmatpush1.bf16.msra.mxu0 0
        %2010 = vmatprep.subr.bf16.mxu0 0
        %2011 = vmatpush1.bf16.msra.mxu0 0
        %2012 = vmatprep.subr.bf16.mxu0 0
        %2013 = vmatpush1.bf16.msra.mxu0 0
        %2014 = vmatprep.subr.bf16.mxu0 0
        %2015 = vmatpush1.bf16.msra.mxu0 %v1995
        %2016 = vmatprep.subr.bf16.mxu0 0
        %2017 = vmatpush2.bf16.msra.mxu0 0
        %2018 = vmatprep.subr.bf16.mxu0 0
        %2019 = vmatpush2.bf16.msra.mxu0 0
        %2020 = vmatprep.subr.bf16.mxu0 0
        %2021 = vmatpush2.bf16.msra.mxu0 0
        %2022 = vmatprep.subr.bf16.mxu0 0
        %2023 = vmatpush2.bf16.msra.mxu0 0
        %2024 = vmatprep.subr.bf16.mxu0 0
        %2025 = vmatpush2.bf16.msra.mxu0 0
        %2026 = vmatprep.subr.bf16.mxu0 0
        %2027 = vmatpush2.bf16.msra.mxu0 0
        %2028 = vmatprep.subr.bf16.mxu0 0
        %2029 = vmatpush2.bf16.msra.mxu0 0
        %2030 = vmatprep.subr.bf16.mxu0 0
        %2031 = vmatpush2.bf16.msra.mxu0 0
        %2032 = vmatprep.mubr.bf16.mxu0 0
        %2033 = vmatmul.mubr.bf16.gmra.mxu0 %v1998
        %v2034 = vpop.f32.mrf.mxu0
        %v2035 = vadd.f32 0.0, %v2034
        %v2036 = vpop.f32.mrf.mxu0
        %v2037 = vpop.f32.mrf.mxu0
        %v2038 = vpop.f32.mrf.mxu0
        %2039 = vdwg.mxu0
        %v2040 = vadd.f32 %v1930, %v1992
        %2041 = vrot.lane.b32.xlu0 %v1711, 32
        %v2042 = vpop.permute.xlu0 %2041
        %2043 = vrot.lane.b32.xlu0 %v1712, 32
        %v2044 = vpop.permute.xlu0 %2043
        %v2046 = vsel %vm786, %v2042, 0
        %v2049 = vsel %vm786, %v2044, 0
        %2051 = vmatprep.subr.bf16.mxu0 0
        %2052 = vmatpush1.bf16.xpose.msra.mxu0 0
        %2053 = vmatprep.subr.bf16.mxu0 0
        %2054 = vmatpush1.bf16.xpose.msra.mxu0 0
        %2055 = vmatprep.subr.bf16.mxu0 0
        %2056 = vmatpush1.bf16.xpose.msra.mxu0 0
        %2057 = vmatprep.subr.bf16.mxu0 0
        %2058 = vmatpush1.bf16.xpose.msra.mxu0 0
        %2059 = vmatprep.subr.bf16.mxu0 0
        %2060 = vmatpush1.bf16.xpose.msra.mxu0 0
        %2061 = vmatprep.subr.bf16.mxu0 0
        %2062 = vmatpush1.bf16.xpose.msra.mxu0 0
        %2063 = vmatprep.subr.bf16.mxu0 0
        %2064 = vmatpush1.bf16.xpose.msra.mxu0 0
        %2065 = vmatprep.subr.bf16.mxu0 0
        %2066 = vmatpush1.bf16.xpose.msra.mxu0 %v2049
        %2067 = vmatprep.subr.bf16.mxu0 0
        %2068 = vmatpush2.bf16.xpose.msra.mxu0 0
        %2069 = vmatprep.subr.bf16.mxu0 0
        %2070 = vmatpush2.bf16.xpose.msra.mxu0 0
        %2071 = vmatprep.subr.bf16.mxu0 0
        %2072 = vmatpush2.bf16.xpose.msra.mxu0 0
        %2073 = vmatprep.subr.bf16.mxu0 0
        %2074 = vmatpush2.bf16.xpose.msra.mxu0 0
        %2075 = vmatprep.subr.bf16.mxu0 0
        %2076 = vmatpush2.bf16.xpose.msra.mxu0 0
        %2077 = vmatprep.subr.bf16.mxu0 0
        %2078 = vmatpush2.bf16.xpose.msra.mxu0 0
        %2079 = vmatprep.subr.bf16.mxu0 0
        %2080 = vmatpush2.bf16.xpose.msra.mxu0 0
        %2081 = vmatprep.subr.bf16.mxu0 0
        %2082 = vmatpush2.bf16.xpose.msra.mxu0 0
        %2083 = vmatprep.mubr.bf16.mxu0 0
        %2084 = vmatmul.mubr.bf16.gmra.mxu0 %v2046
        %v2085 = vpop.f32.mrf.mxu0
        %v2086 = vadd.f32 0.0, %v2085
        %v2087 = vpop.f32.mrf.mxu0
        %v2088 = vpop.f32.mrf.mxu0
        %v2089 = vpop.f32.mrf.mxu0
        %2090 = vdwg.mxu0
        %v2091 = vmul.f32 %v2086, 0.17677669
        %v2092 = vsel %vm1761, %v2091, -inf
        %2093 = vmax.xlane.f32.xlu0 %v2092
        %v2094 = vpop.xlane.xlu0 %2093
        %v2095 = vsub.f32 %v2091, %v2094
        %v2096 = vmul.f32 %v2095, 1.442695
        %v2097 = vpow.pop %v2096
        %v2098 = vsel %vm1761, %v2097, 0.0
        %2099 = vadd.xlane.f32.xlu0 %v2098
        %v2100 = vpop.xlane.xlu0 %2099
        %v2101 = vrcp.pop %v2100
        %v2102 = vmul.f32 %v2097, %v2101
        %v2103 = vpack.c.bf16 %v2102, %v2102
        %2104 = vrot.lane.b32.xlu0 %v1713, 32
        %v2105 = vpop.permute.xlu0 %2104
        %v2108 = vsel %vm1761, %v2103, 0
        %2110 = vmatprep.subr.bf16.mxu0 0
        %2111 = vmatpush1.bf16.msra.mxu0 0
        %2112 = vmatprep.subr.bf16.mxu0 0
        %2113 = vmatpush1.bf16.msra.mxu0 0
        %2114 = vmatprep.subr.bf16.mxu0 0
        %2115 = vmatpush1.bf16.msra.mxu0 0
        %2116 = vmatprep.subr.bf16.mxu0 0
        %2117 = vmatpush1.bf16.msra.mxu0 0
        %2118 = vmatprep.subr.bf16.mxu0 0
        %2119 = vmatpush1.bf16.msra.mxu0 0
        %2120 = vmatprep.subr.bf16.mxu0 0
        %2121 = vmatpush1.bf16.msra.mxu0 0
        %2122 = vmatprep.subr.bf16.mxu0 0
        %2123 = vmatpush1.bf16.msra.mxu0 0
        %2124 = vmatprep.subr.bf16.mxu0 0
        %2125 = vmatpush1.bf16.msra.mxu0 %v2105
        %2126 = vmatprep.subr.bf16.mxu0 0
        %2127 = vmatpush2.bf16.msra.mxu0 0
        %2128 = vmatprep.subr.bf16.mxu0 0
        %2129 = vmatpush2.bf16.msra.mxu0 0
        %2130 = vmatprep.subr.bf16.mxu0 0
        %2131 = vmatpush2.bf16.msra.mxu0 0
        %2132 = vmatprep.subr.bf16.mxu0 0
        %2133 = vmatpush2.bf16.msra.mxu0 0
        %2134 = vmatprep.subr.bf16.mxu0 0
        %2135 = vmatpush2.bf16.msra.mxu0 0
        %2136 = vmatprep.subr.bf16.mxu0 0
        %2137 = vmatpush2.bf16.msra.mxu0 0
        %2138 = vmatprep.subr.bf16.mxu0 0
        %2139 = vmatpush2.bf16.msra.mxu0 0
        %2140 = vmatprep.subr.bf16.mxu0 0
        %2141 = vmatpush2.bf16.msra.mxu0 0
        %2142 = vmatprep.mubr.bf16.mxu0 0
        %2143 = vmatmul.mubr.bf16.gmra.mxu0 %v2108
        %v2144 = vpop.f32.mrf.mxu0
        %v2145 = vadd.f32 0.0, %v2144
        %v2146 = vpop.f32.mrf.mxu0
        %v2147 = vpop.f32.mrf.mxu0
        %v2148 = vpop.f32.mrf.mxu0
        %2149 = vdwg.mxu0
        %v2150 = vadd.f32 %v2040, %v2102
        %2152 = vrot.lane.b32.xlu0 %v1925, 32
        %v2153 = vpop.permute.xlu0 %2152
        %2156 = vrot.lane.b32.xlu0 %v2035, 64
        %v2157 = vpop.permute.xlu0 %2156
        %2160 = vrot.lane.b32.xlu0 %v2145, 96
        %v2161 = vpop.permute.xlu0 %2160
        %v2163 = vsel %vm786, %v1812, %v2153
        %v2164 = vsel %vm1243, %v2163, %v2157
        %v2165 = vsel %vm1245, %v2164, %v2161
        %v2166 = vmul.f32 %v2150, 0.25
        %v2167 = vpack.c.bf16 %v2165, %v2165
        %v2168 = vld [vmem:[#allocation10 + $0x1c] sm:$0xf]
        %v2169 = vld [vmem:[#allocation10 + $0x44] sm:$0xf]
        %v2170 = vld [vmem:[#allocation10 + $0x6c] sm:$0xf]
        %v2171 = vld [vmem:[#allocation10 + $0x94] sm:$0xf]
        %v2172 = vld [vmem:[#allocation10 + $0xbc] sm:$0xf]
        %v2173 = vld [vmem:[#allocation10 + $0xe4] sm:$0xf]
        %v2174 = vld [vmem:[#allocation10 + $0x10c] sm:$0xf]
        %v2175 = vld [vmem:[#allocation10 + $0x134] sm:$0xf]
        %v2176 = vld [vmem:[#allocation10 + $0x15c] sm:$0xf]
        %v2177 = vld [vmem:[#allocation10 + $0x184] sm:$0xf]
        %v2178 = vld [vmem:[#allocation10 + $0x1ac] sm:$0xf]
        %v2179 = vld [vmem:[#allocation10 + $0x1d4] sm:$0xf]
        %v2180 = vld [vmem:[#allocation10 + $0x1fc] sm:$0xf]
        %v2181 = vld [vmem:[#allocation10 + $0x224] sm:$0xf]
        %v2182 = vld [vmem:[#allocation10 + $0x24c] sm:$0xf]
        %v2183 = vld [vmem:[#allocation10 + $0x274] sm:$0xf]
        %v2184 = vlaneseq
        %v2185 = vshrl.u32 %v2184, 7
        %v2186 = vsub.s32 7, %v2185
        %v2187 = vrot.slane %v517, %v2186
        %v2204 = vunpack.c.l.b16 %v2168
        %v2205 = vunpack.c.l.b16 %v2169
        %v2206 = vunpack.c.l.b16 %v2170
        %v2207 = vunpack.c.l.b16 %v2171
        %v2208 = vunpack.c.l.b16 %v2172
        %v2209 = vunpack.c.l.b16 %v2173
        %v2210 = vunpack.c.l.b16 %v2174
        %v2211 = vunpack.c.l.b16 %v2175
        %v2212 = vunpack.c.l.b16 %v2176
        %v2213 = vunpack.c.l.b16 %v2177
        %v2214 = vunpack.c.l.b16 %v2178
        %v2215 = vunpack.c.l.b16 %v2179
        %v2216 = vunpack.c.l.b16 %v2180
        %v2217 = vunpack.c.l.b16 %v2181
        %v2218 = vunpack.c.l.b16 %v2182
        %v2219 = vunpack.c.l.b16 %v2183
        %v2220 = vpack.c.b16 %v2205, %v2204
        %v2221 = vpack.c.b16 %v2207, %v2206
        %v2222 = vpack.c.b16 %v2209, %v2208
        %v2223 = vpack.c.b16 %v2211, %v2210
        %v2224 = vpack.c.b16 %v2213, %v2212
        %v2225 = vpack.c.b16 %v2215, %v2214
        %v2226 = vpack.c.b16 %v2217, %v2216
        %v2227 = vpack.c.b16 %v2219, %v2218
        %2236 = vmatprep.subr.bf16.mxu0 0
        %2237 = vmatpush1.bf16.msra.mxu0 %v2227
        %2238 = vmatprep.subr.bf16.mxu0 0
        %2239 = vmatpush1.bf16.msra.mxu0 %v2226
        %2240 = vmatprep.subr.bf16.mxu0 0
        %2241 = vmatpush1.bf16.msra.mxu0 %v2225
        %2242 = vmatprep.subr.bf16.mxu0 0
        %2243 = vmatpush1.bf16.msra.mxu0 %v2224
        %2244 = vmatprep.subr.bf16.mxu0 0
        %2245 = vmatpush1.bf16.msra.mxu0 %v2223
        %2246 = vmatprep.subr.bf16.mxu0 0
        %2247 = vmatpush1.bf16.msra.mxu0 %v2222
        %2248 = vmatprep.subr.bf16.mxu0 0
        %2249 = vmatpush1.bf16.msra.mxu0 %v2221
        %2250 = vmatprep.subr.bf16.mxu0 0
        %2251 = vmatpush1.bf16.msra.mxu0 %v2220
        %2252 = vmatprep.subr.bf16.mxu0 0
        %2253 = vmatpush2.bf16.msra.mxu0 0
        %2254 = vmatprep.subr.bf16.mxu0 0
        %2255 = vmatpush2.bf16.msra.mxu0 0
        %2256 = vmatprep.subr.bf16.mxu0 0
        %2257 = vmatpush2.bf16.msra.mxu0 0
        %2258 = vmatprep.subr.bf16.mxu0 0
        %2259 = vmatpush2.bf16.msra.mxu0 0
        %2260 = vmatprep.subr.bf16.mxu0 0
        %2261 = vmatpush2.bf16.msra.mxu0 0
        %2262 = vmatprep.subr.bf16.mxu0 0
        %2263 = vmatpush2.bf16.msra.mxu0 0
        %2264 = vmatprep.subr.bf16.mxu0 0
        %2265 = vmatpush2.bf16.msra.mxu0 0
        %2266 = vmatprep.subr.bf16.mxu0 0
        %2267 = vmatpush2.bf16.msra.mxu0 0
        %2268 = vmatprep.mubr.bf16.mxu0 0
        %2269 = vmatmul.mubr.bf16.gmra.mxu0 %v2167
        %v2270 = vpop.f32.mrf.mxu0
        %v2271 = vadd.f32 %v2187, %v2270
        %v2272 = vpop.f32.mrf.mxu0
        %v2273 = vpop.f32.mrf.mxu0
        %v2274 = vpop.f32.mrf.mxu0
        %2275 = vdwg.mxu0
        %v2276 = vadd.f32 %v1378, %v2271
        %2277 = vadd.xlane.f32.xlu0 %v2276
        %v2278 = vpop.xlane.xlu0 %2277
        %v2279 = vmul.f32 %v2278, %v1359
        %v2280 = vsub.f32 %v2276, %v2279
        %v2281 = vmul.f32 %v2280, %v2280
        %2282 = vadd.xlane.f32.xlu0 %v2281
        %v2283 = vpop.xlane.xlu0 %2282
        %v2284 = vmul.f32 %v2283, %v1359
        %v2285 = vadd.f32 %v2284, 1e-05
        %v2286 = vrsqrt.pop %v2285
        %v2287 = vmul.f32 %v2280, %v2286
        %v2288 = vlaneseq
        %v2289 = vshrl.u32 %v2288, 7
        %v2290 = vsub.s32 2, %v2289
        %v2291 = vrot.slane %v518, %v2290
        %v2292 = vmul.f32 %v2287, %v2291
        %v2293 = vlaneseq
        %v2294 = vshrl.u32 %v2293, 7
        %v2295 = vsub.s32 3, %v2294
        %v2296 = vrot.slane %v518, %v2295
        %v2297 = vadd.f32 %v2292, %v2296
        %v2298 = vpack.c.bf16 %v2297, %v2297
        %v2299 = vld [vmem:[#allocation10 + $0x20] sm:$0xff]
        %v2300 = vld [vmem:[#allocation10 + $0x48] sm:$0xff]
        %v2301 = vld [vmem:[#allocation10 + $0x70] sm:$0xff]
        %v2302 = vld [vmem:[#allocation10 + $0x98] sm:$0xff]
        %v2303 = vld [vmem:[#allocation10 + $0xc0] sm:$0xff]
        %v2304 = vld [vmem:[#allocation10 + $0xe8] sm:$0xff]
        %v2305 = vld [vmem:[#allocation10 + $0x110] sm:$0xff]
        %v2306 = vld [vmem:[#allocation10 + $0x138] sm:$0xff]
        %v2307 = vld [vmem:[#allocation10 + $0x160] sm:$0xff]
        %v2308 = vld [vmem:[#allocation10 + $0x188] sm:$0xff]
        %v2309 = vld [vmem:[#allocation10 + $0x1b0] sm:$0xff]
        %v2310 = vld [vmem:[#allocation10 + $0x1d8] sm:$0xff]
        %v2311 = vld [vmem:[#allocation10 + $0x200] sm:$0xff]
        %v2312 = vld [vmem:[#allocation10 + $0x228] sm:$0xff]
        %v2313 = vld [vmem:[#allocation10 + $0x250] sm:$0xff]
        %v2314 = vld [vmem:[#allocation10 + $0x278] sm:$0xff]
        %v2315 = vld [vmem:[%s7] sm:$0x3]
        %v2317 = vlaneseq
        %v2318 = vshrl.u32 %v2317, 7
        %v2319 = vsub.s32 0, %v2318
        %v2320 = vrot.slane %v2315, %v2319
        %v2321 = vlaneseq
        %v2322 = vshrl.u32 %v2321, 7
        %v2323 = vsub.s32 1, %v2322
        %v2324 = vrot.slane %v2315, %v2323
        %v2343 = vunpack.c.l.b16 %v2299
        %v2344 = vunpack.c.h.b16 %v2299
        %v2345 = vunpack.c.l.b16 %v2300
        %v2346 = vunpack.c.h.b16 %v2300
        %v2347 = vunpack.c.l.b16 %v2301
        %v2348 = vunpack.c.h.b16 %v2301
        %v2349 = vunpack.c.l.b16 %v2302
        %v2350 = vunpack.c.h.b16 %v2302
        %v2351 = vunpack.c.l.b16 %v2303
        %v2352 = vunpack.c.h.b16 %v2303
        %v2353 = vunpack.c.l.b16 %v2304
        %v2354 = vunpack.c.h.b16 %v2304
        %v2355 = vunpack.c.l.b16 %v2305
        %v2356 = vunpack.c.h.b16 %v2305
        %v2357 = vunpack.c.l.b16 %v2306
        %v2358 = vunpack.c.h.b16 %v2306
        %v2359 = vunpack.c.l.b16 %v2307
        %v2360 = vunpack.c.h.b16 %v2307
        %v2361 = vunpack.c.l.b16 %v2308
        %v2362 = vunpack.c.h.b16 %v2308
        %v2363 = vunpack.c.l.b16 %v2309
        %v2364 = vunpack.c.h.b16 %v2309
        %v2365 = vunpack.c.l.b16 %v2310
        %v2366 = vunpack.c.h.b16 %v2310
        %v2367 = vunpack.c.l.b16 %v2311
        %v2368 = vunpack.c.h.b16 %v2311
        %v2369 = vunpack.c.l.b16 %v2312
        %v2370 = vunpack.c.h.b16 %v2312
        %v2371 = vunpack.c.l.b16 %v2313
        %v2372 = vunpack.c.h.b16 %v2313
        %v2373 = vunpack.c.l.b16 %v2314
        %v2374 = vunpack.c.h.b16 %v2314
        %v2375 = vpack.c.b16 %v2345, %v2343
        %v2376 = vpack.c.b16 %v2346, %v2344
        %v2377 = vpack.c.b16 %v2349, %v2347
        %v2378 = vpack.c.b16 %v2350, %v2348
        %v2379 = vpack.c.b16 %v2353, %v2351
        %v2380 = vpack.c.b16 %v2354, %v2352
        %v2381 = vpack.c.b16 %v2357, %v2355
        %v2382 = vpack.c.b16 %v2358, %v2356
        %v2383 = vpack.c.b16 %v2361, %v2359
        %v2384 = vpack.c.b16 %v2362, %v2360
        %v2385 = vpack.c.b16 %v2365, %v2363
        %v2386 = vpack.c.b16 %v2366, %v2364
        %v2387 = vpack.c.b16 %v2369, %v2367
        %v2388 = vpack.c.b16 %v2370, %v2368
        %v2389 = vpack.c.b16 %v2373, %v2371
        %v2390 = vpack.c.b16 %v2374, %v2372
        %2407 = vmatprep.subr.bf16.mxu0 %v2390
        %2408 = vmatpush1.bf16.msra.mxu0 %v2389
        %2409 = vmatprep.subr.bf16.mxu0 %v2388
        %2410 = vmatpush1.bf16.msra.mxu0 %v2387
        %2411 = vmatprep.subr.bf16.mxu0 %v2386
        %2412 = vmatpush1.bf16.msra.mxu0 %v2385
        %2413 = vmatprep.subr.bf16.mxu0 %v2384
        %2414 = vmatpush1.bf16.msra.mxu0 %v2383
        %2415 = vmatprep.subr.bf16.mxu0 %v2382
        %2416 = vmatpush1.bf16.msra.mxu0 %v2381
        %2417 = vmatprep.subr.bf16.mxu0 %v2380
        %2418 = vmatpush1.bf16.msra.mxu0 %v2379
        %2419 = vmatprep.subr.bf16.mxu0 %v2378
        %2420 = vmatpush1.bf16.msra.mxu0 %v2377
        %2421 = vmatprep.subr.bf16.mxu0 %v2376
        %2422 = vmatpush1.bf16.msra.mxu0 %v2375
        %2423 = vmatprep.subr.bf16.mxu0 0
        %2424 = vmatpush2.bf16.msra.mxu0 0
        %2425 = vmatprep.subr.bf16.mxu0 0
        %2426 = vmatpush2.bf16.msra.mxu0 0
        %2427 = vmatprep.subr.bf16.mxu0 0
        %2428 = vmatpush2.bf16.msra.mxu0 0
        %2429 = vmatprep.subr.bf16.mxu0 0
        %2430 = vmatpush2.bf16.msra.mxu0 0
        %2431 = vmatprep.subr.bf16.mxu0 0
        %2432 = vmatpush2.bf16.msra.mxu0 0
        %2433 = vmatprep.subr.bf16.mxu0 0
        %2434 = vmatpush2.bf16.msra.mxu0 0
        %2435 = vmatprep.subr.bf16.mxu0 0
        %2436 = vmatpush2.bf16.msra.mxu0 0
        %2437 = vmatprep.subr.bf16.mxu0 0
        %2438 = vmatpush2.bf16.msra.mxu0 0
        %2439 = vmatprep.mubr.bf16.mxu0 0
        %2440 = vmatmul.mubr.bf16.gmra.mxu0 %v2298
        %v2441 = vpop.f32.mrf.mxu0
        %v2442 = vadd.f32 %v2320, %v2441
        %v2443 = vpop.f32.mrf.mxu0
        %v2444 = vadd.f32 %v2324, %v2443
        %v2445 = vpop.f32.mrf.mxu0
        %v2446 = vpop.f32.mrf.mxu0
        %2447 = vdwg.mxu0
        %v2448 = vmax.f32 %v2442, 0.0
        %v2449 = vmax.f32 %v2444, 0.0
        %v2450 = vpack.c.bf16 %v2448, %v2448
        %v2451 = vpack.c.bf16 %v2449, %v2449
        %v2452 = vld [vmem:[#allocation11] sm:$0xf]
        %v2453 = vld [vmem:[#allocation11 + $0x4] sm:$0xf]
        %v2454 = vld [vmem:[#allocation11 + $0x8] sm:$0xf]
        %v2455 = vld [vmem:[#allocation11 + $0xc] sm:$0xf]
        %v2456 = vld [vmem:[#allocation11 + $0x10] sm:$0xf]
        %v2457 = vld [vmem:[#allocation11 + $0x14] sm:$0xf]
        %v2458 = vld [vmem:[#allocation11 + $0x18] sm:$0xf]
        %v2459 = vld [vmem:[#allocation11 + $0x1c] sm:$0xf]
        %v2460 = vld [vmem:[#allocation11 + $0x20] sm:$0xf]
        %v2461 = vld [vmem:[#allocation11 + $0x24] sm:$0xf]
        %v2462 = vld [vmem:[#allocation11 + $0x28] sm:$0xf]
        %v2463 = vld [vmem:[#allocation11 + $0x2c] sm:$0xf]
        %v2464 = vld [vmem:[#allocation11 + $0x30] sm:$0xf]
        %v2465 = vld [vmem:[#allocation11 + $0x34] sm:$0xf]
        %v2466 = vld [vmem:[#allocation11 + $0x38] sm:$0xf]
        %v2467 = vld [vmem:[#allocation11 + $0x3c] sm:$0xf]
        %v2468 = vld [vmem:[#allocation11 + $0x40] sm:$0xf]
        %v2469 = vld [vmem:[#allocation11 + $0x44] sm:$0xf]
        %v2470 = vld [vmem:[#allocation11 + $0x48] sm:$0xf]
        %v2471 = vld [vmem:[#allocation11 + $0x4c] sm:$0xf]
        %v2472 = vld [vmem:[#allocation11 + $0x50] sm:$0xf]
        %v2473 = vld [vmem:[#allocation11 + $0x54] sm:$0xf]
        %v2474 = vld [vmem:[#allocation11 + $0x58] sm:$0xf]
        %v2475 = vld [vmem:[#allocation11 + $0x5c] sm:$0xf]
        %v2476 = vld [vmem:[#allocation11 + $0x60] sm:$0xf]
        %v2477 = vld [vmem:[#allocation11 + $0x64] sm:$0xf]
        %v2478 = vld [vmem:[#allocation11 + $0x68] sm:$0xf]
        %v2479 = vld [vmem:[#allocation11 + $0x6c] sm:$0xf]
        %v2480 = vld [vmem:[#allocation11 + $0x70] sm:$0xf]
        %v2481 = vld [vmem:[#allocation11 + $0x74] sm:$0xf]
        %v2482 = vld [vmem:[#allocation11 + $0x78] sm:$0xf]
        %v2483 = vld [vmem:[#allocation11 + $0x7c] sm:$0xf]
        %v2484 = vlaneseq
        %v2485 = vshrl.u32 %v2484, 7
        %v2486 = vsub.s32 6, %v2485
        %v2487 = vrot.slane %v518, %v2486
        %v2520 = vunpack.c.l.b16 %v2452
        %v2521 = vunpack.c.l.b16 %v2453
        %v2522 = vunpack.c.l.b16 %v2454
        %v2523 = vunpack.c.l.b16 %v2455
        %v2524 = vunpack.c.l.b16 %v2456
        %v2525 = vunpack.c.l.b16 %v2457
        %v2526 = vunpack.c.l.b16 %v2458
        %v2527 = vunpack.c.l.b16 %v2459
        %v2528 = vunpack.c.l.b16 %v2460
        %v2529 = vunpack.c.l.b16 %v2461
        %v2530 = vunpack.c.l.b16 %v2462
        %v2531 = vunpack.c.l.b16 %v2463
        %v2532 = vunpack.c.l.b16 %v2464
        %v2533 = vunpack.c.l.b16 %v2465
        %v2534 = vunpack.c.l.b16 %v2466
        %v2535 = vunpack.c.l.b16 %v2467
        %v2536 = vunpack.c.l.b16 %v2468
        %v2537 = vunpack.c.l.b16 %v2469
        %v2538 = vunpack.c.l.b16 %v2470
        %v2539 = vunpack.c.l.b16 %v2471
        %v2540 = vunpack.c.l.b16 %v2472
        %v2541 = vunpack.c.l.b16 %v2473
        %v2542 = vunpack.c.l.b16 %v2474
        %v2543 = vunpack.c.l.b16 %v2475
        %v2544 = vunpack.c.l.b16 %v2476
        %v2545 = vunpack.c.l.b16 %v2477
        %v2546 = vunpack.c.l.b16 %v2478
        %v2547 = vunpack.c.l.b16 %v2479
        %v2548 = vunpack.c.l.b16 %v2480
        %v2549 = vunpack.c.l.b16 %v2481
        %v2550 = vunpack.c.l.b16 %v2482
        %v2551 = vunpack.c.l.b16 %v2483
        %v2552 = vpack.c.b16 %v2521, %v2520
        %v2553 = vpack.c.b16 %v2523, %v2522
        %v2554 = vpack.c.b16 %v2525, %v2524
        %v2555 = vpack.c.b16 %v2527, %v2526
        %v2556 = vpack.c.b16 %v2529, %v2528
        %v2557 = vpack.c.b16 %v2531, %v2530
        %v2558 = vpack.c.b16 %v2533, %v2532
        %v2559 = vpack.c.b16 %v2535, %v2534
        %v2560 = vpack.c.b16 %v2537, %v2536
        %v2561 = vpack.c.b16 %v2539, %v2538
        %v2562 = vpack.c.b16 %v2541, %v2540
        %v2563 = vpack.c.b16 %v2543, %v2542
        %v2564 = vpack.c.b16 %v2545, %v2544
        %v2565 = vpack.c.b16 %v2547, %v2546
        %v2566 = vpack.c.b16 %v2549, %v2548
        %v2567 = vpack.c.b16 %v2551, %v2550
        %2584 = vmatprep.subr.bf16.mxu0 0
        %2585 = vmatpush1.bf16.msra.mxu0 %v2559
        %2586 = vmatprep.subr.bf16.mxu0 0
        %2587 = vmatpush1.bf16.msra.mxu0 %v2558
        %2588 = vmatprep.subr.bf16.mxu0 0
        %2589 = vmatpush1.bf16.msra.mxu0 %v2557
        %2590 = vmatprep.subr.bf16.mxu0 0
        %2591 = vmatpush1.bf16.msra.mxu0 %v2556
        %2592 = vmatprep.subr.bf16.mxu0 0
        %2593 = vmatpush1.bf16.msra.mxu0 %v2555
        %2594 = vmatprep.subr.bf16.mxu0 0
        %2595 = vmatpush1.bf16.msra.mxu0 %v2554
        %2596 = vmatprep.subr.bf16.mxu0 0
        %2597 = vmatpush1.bf16.msra.mxu0 %v2553
        %2598 = vmatprep.subr.bf16.mxu0 0
        %2599 = vmatpush1.bf16.msra.mxu0 %v2552
        %2600 = vmatprep.subr.bf16.mxu0 0
        %2601 = vmatpush2.bf16.msra.mxu0 %v2567
        %2602 = vmatprep.subr.bf16.mxu0 0
        %2603 = vmatpush2.bf16.msra.mxu0 %v2566
        %2604 = vmatprep.subr.bf16.mxu0 0
        %2605 = vmatpush2.bf16.msra.mxu0 %v2565
        %2606 = vmatprep.subr.bf16.mxu0 0
        %2607 = vmatpush2.bf16.msra.mxu0 %v2564
        %2608 = vmatprep.subr.bf16.mxu0 0
        %2609 = vmatpush2.bf16.msra.mxu0 %v2563
        %2610 = vmatprep.subr.bf16.mxu0 0
        %2611 = vmatpush2.bf16.msra.mxu0 %v2562
        %2612 = vmatprep.subr.bf16.mxu0 0
        %2613 = vmatpush2.bf16.msra.mxu0 %v2561
        %2614 = vmatprep.subr.bf16.mxu0 0
        %2615 = vmatpush2.bf16.msra.mxu0 %v2560
        %2616 = vmatprep.mubr.bf16.mxu0 %v2451
        %2617 = vmatmul.mubr.bf16.gmra.mxu0 %v2450
        %v2618 = vpop.f32.mrf.mxu0
        %v2619 = vadd.f32 %v2487, %v2618
        %v2620 = vpop.f32.mrf.mxu0
        %v2621 = vpop.f32.mrf.mxu0
        %v2622 = vpop.f32.mrf.mxu0
        %2623 = vdwg.mxu0
        %v2624 = vadd.f32 %v2297, %v2619
        %2625 = vadd.xlane.f32.xlu0 %v2624
        %v2626 = vpop.xlane.xlu0 %2625
        %v2627 = vmul.f32 %v2626, %v1359
        %v2628 = vsub.f32 %v2624, %v2627
        %v2629 = vmul.f32 %v2628, %v2628
        %2630 = vadd.xlane.f32.xlu0 %v2629
        %v2631 = vpop.xlane.xlu0 %2630
        %v2632 = vmul.f32 %v2631, %v1359
        %v2633 = vadd.f32 %v2632, 1e-05
        %v2634 = vrsqrt.pop %v2633
        %v2635 = vmul.f32 %v2628, %v2634
        %v2636 = vlaneseq
        %v2637 = vshrl.u32 %v2636, 7
        %v2638 = vsub.s32 4, %v2637
        %v2639 = vrot.slane %v518, %v2638
        %v2640 = vmul.f32 %v2635, %v2639
        %v2641 = vlaneseq
        %v2642 = vshrl.u32 %v2641, 7
        %v2643 = vsub.s32 5, %v2642
        %v2644 = vrot.slane %v518, %v2643
        %v2645 = vadd.f32 %v2640, %v2644
        %2646 = vst [vmem:[%s508] sm:$0xff] %v2645
        %v2647 = vsel %vm1761, %v2166, 0.0
        %2648 = vst [vmem:[%s515] sm:$0xff] %v2647
        %s2649 = sand.u32 %s233, 1
        %s2650 = scalar_lea.sflag [#allocation4], %s2649
        %s2651 = sand.u32 %s233, 1
        %s2652 = smul.addr %s2651, 8
        %s2653 = scalar_lea.vmem [#allocation14], %s2652
        %s2654 = sand.u32 %s259, 1
        %s2655 = scalar_lea.sflag [#allocation16], %s2654
        %s2656 = sand.u32 %s259, 1
        %s2657 = smul.addr %s2656, 8
        %s2658 = scalar_lea.vmem [#allocation15], %s2657
        // Predicated region
        $region81: #{tpu_custom_call.1} parent=51 // pred_check
          %p2659 = pneg %p243
        $region82: #{tpu_custom_call.1} parent=51 // pred_check_branch
          %2661 = sbr.rel (%p2659) target = $region84
        $region83: #{tpu_custom_call.1} parent=51 // pred_region
          %s2663 = ssub.s32 128, 128
          %2664 = vsyncadd %s2650, %s2663
          %s2665 = smul.addr %s37, 128
          %s2666 = scalar_lea.hbm %s8, %s2665
          %s2668 = sshll.u32 %s2653, 4
          %s2669 = int_to_ptr.vmem [resolvable:$true] %s2668
          %2671 = dma.vmem_to_hbm [thread:$0]  %s2669, 128, %s2666, %s2650
        $region84: #{tpu_custom_call.1} parent=51 // pred_fallthru
          _
        // Predicated region
        $region85: #{tpu_custom_call.1} parent=51 // pred_check
          %p2672 = pneg %p269
        $region86: #{tpu_custom_call.1} parent=51 // pred_check_branch
          %2674 = sbr.rel (%p2672) target = $region88
        $region87: #{tpu_custom_call.1} parent=51 // pred_region
          %s2676 = ssub.s32 128, 128
          %2677 = vsyncadd %s2655, %s2676
          %s2678 = smul.addr %s37, 128
          %s2679 = scalar_lea.hbm %s9, %s2678
          %s2681 = sshll.u32 %s2658, 4
          %s2682 = int_to_ptr.vmem [resolvable:$true] %s2681
          %2684 = dma.vmem_to_hbm [thread:$0]  %s2682, 128, %s2679, %s2655
        $region88: #{tpu_custom_call.1} parent=51 // pred_fallthru
          _
      $region52: #{tpu_custom_call.1} parent=5 // pred_fallthru
        _
      %p2685 = scmp.le.s32.totalorder 2, %s32
      // Predicated region
      $region89: #{tpu_custom_call.1} parent=5 // pred_check
        %p2686 = pneg %p2685
      $region90: #{tpu_custom_call.1} parent=5 // pred_check_branch
        %2688 = sbr.rel (%p2686) target = $region92
      $region91: #{tpu_custom_call.1} parent=5 // pred_region
        %s2689 = ssub.s32 %s32, 2
        // Predicated region
        $region93: #{tpu_custom_call.1} parent=91 // pred_check
          %p2690 = pneg %p249
        $region94: #{tpu_custom_call.1} parent=91 // pred_check_branch
          %2692 = sbr.rel (%p2690) target = $region96
        $region95: #{tpu_custom_call.1} parent=91 // pred_region
          %s2693 = sand.u32 %s234, 1
          %s2694 = scalar_lea.sflag [#allocation4], %s2693
          %s2695 = sand.u32 %s234, 1
          %s2696 = smul.addr %s2695, 8
          %s2697 = scalar_lea.vmem [#allocation14], %s2696
          %2698 = dma.done %s2694, 128
        $region96: #{tpu_custom_call.1} parent=91 // pred_fallthru
          _
        // Predicated region
        $region97: #{tpu_custom_call.1} parent=91 // pred_check
          %p2699 = pneg %p275
        $region98: #{tpu_custom_call.1} parent=91 // pred_check_branch
          %2701 = sbr.rel (%p2699) target = $region100
        $region99: #{tpu_custom_call.1} parent=91 // pred_region
          %s2702 = sand.u32 %s260, 1
          %s2703 = scalar_lea.sflag [#allocation16], %s2702
          %s2704 = sand.u32 %s260, 1
          %s2705 = smul.addr %s2704, 8
          %s2706 = scalar_lea.vmem [#allocation15], %s2705
          %2707 = dma.done %s2703, 128
        $region100: #{tpu_custom_call.1} parent=91 // pred_fallthru
          _
      $region92: #{tpu_custom_call.1} parent=5 // pred_fallthru
        _
    $region6: #{tpu_custom_call.1} parent=1 // loop_footer
      %s36 = sadd.s32 1, %s32
    $region7: #{tpu_custom_call.1} parent=1 // loop_footer_branch
      %31 = sbr.rel target = $region3
    $region8: #{tpu_custom_call.1} parent=1 // loop_exit
      _
    %2708 = vsyncpa [#allocation3], 1
    %s2709 = scalar_lea.sflag [#allocation3], 1
    %2710 = vsyncpa %s2709, 1
    %2711 = vsyncpa [#allocation6], 1
    %s2712 = scalar_lea.sflag [#allocation6], 1
    %2713 = vsyncpa %s2712, 1
    %2714 = vsyncpa [#allocation9], 1
    %s2715 = scalar_lea.sflag [#allocation9], 1
    %2716 = vsyncpa %s2715, 1
    %2717 = vsyncpa [#allocation12], 1
    %2718 = vsyncpa [#allocation4], 1
    %s2719 = scalar_lea.sflag [#allocation4], 1
    %2720 = vsyncpa %s2719, 1
    %2721 = vsyncpa [#allocation16], 1
    %s2722 = scalar_lea.sflag [#allocation16], 1
    %2723 = vsyncpa %s2722, 1

</llo_original>
